<compile_context>
chip_gen: v7x
topology: tpu7x:2x2x1
jax: 0.10.0
libtpu: 0.0.40
codegen_flags: <defaults>
</compile_context>

<pallas_src>
import functools

import jax
import jax.numpy as jnp
from jax import lax
from jax.experimental import pallas as pl
from jax.experimental.pallas import tpu as pltpu


# ----------------------------------------------------------------------------
# Fused Pallas kernel: 3 x LSTM layer + linear head, wavefront-scheduled,
# everything register/VMEM-resident.
# ----------------------------------------------------------------------------
def fused_lstm_kernel(S, B, H, L, *refs):
    """Ref order:
       x        : (S*B, D_in)        time-major, batch padded to 8 sublanes
       w_ih0    : (D_in, 4H)         transposed layer-0 weight_ih (gates i,f,g,o)
       b0       : (1, 4H)            layer-0 b_ih + b_hh
       for l in 0..L-1:
         cat_l  : (H, 4H + W_next)   [W_hh_l^T | W_ih_{l+1}^T]  (last: | W_lin^T pad)
         bn_l   : (1, W_next)        b_{l+1}   (last: padded linear bias)
       out      : (S*B, O_pad)       lane-dense, time-major
    """
    x_ref, wih0_ref, b0_ref = refs[0], refs[1], refs[2]
    cat_refs = [refs[3 + 2 * l] for l in range(L)]
    bn_refs = [refs[4 + 2 * l] for l in range(L)]
    out_ref = refs[3 + 2 * L]

    G = 4 * H

    # Hoisted layer-0 input projection for ALL timesteps: one big MXU matmul.
    pre0 = (
        jnp.dot(x_ref[...], wih0_ref[...], preferred_element_type=jnp.float32)
        + b0_ref[...]
    )                                                            # (S*B, 4H)

    # Per-layer recurrent state, kept in vregs (never stored to VMEM).
    c = [jnp.zeros((B, H), jnp.float32) for _ in range(L)]       # cell state
    rec = [jnp.zeros((B, G), jnp.float32) for _ in range(L)]     # h_{t-1} @ W_hh
    pre = [[None] * S for _ in range(L)]                         # input projections
    for t in range(S):
        pre[0][t] = pre0[t * B:(t + 1) * B, :]                   # vreg-aligned slice

    # Wavefront: super-step u processes (layer l, step t = u - l) for all valid l.
    # Each cell's single matmul produces [rec for (l, t+1) | pre for (l+1, t)].
    for u in range(S + L - 1):
        for l in range(L):
            t = u - l
            if t < 0 or t >= S:
                continue

            gates = pre[l][t] + rec[l]                           # (B, 4H)
            # One full-width sigmoid pass; slice i/f/o out of it (parallel
            # branches — lane rotates overlap with other layers' work).
            sig = jax.nn.sigmoid(gates)
            i_g = sig[:, 0 * H:1 * H]
            f_g = sig[:, 1 * H:2 * H]
            o_g = sig[:, 3 * H:4 * H]
            g_g = jnp.tanh(gates[:, 2 * H:3 * H])
            c[l] = f_g * c[l] + i_g * g_g
            h_new = o_g * jnp.tanh(c[l])                         # (B, H)

            # Packed RHS: recurrent contribution for (l, t+1) AND the next
            # layer's input projection / head row, in one 256-lane matmul.
            both = jnp.dot(h_new, cat_refs[l][...],
                           preferred_element_type=jnp.float32)   # (B, 4H + W_next)
            rec[l] = both[:, :G]
            nxt = both[:, G:] + bn_refs[l][...]
            if l + 1 < L:
                pre[l + 1][t] = nxt                              # stays in vregs
            else:
                # Head row for step t: dense, unmasked (8,128) store.
                out_ref[t * B:(t + 1) * B, :] = nxt


# ----------------------------------------------------------------------------
# Wrapper
# ----------------------------------------------------------------------------
@jax.jit
def lstm_forward(x, lstm_params, lin_w_t, lin_b):
    """x: (B, S, input_dim) batch-first, like the PyTorch module. Returns (B, S, O)."""
    B, S, D = x.shape
    H = lstm_params[0][1].shape[0]
    O = lin_w_t.shape[1]
    L = len(lstm_params)

    Bp = ((B + 7) // 8) * 8              # pad batch to f32 sublane count
    Op = ((O + 127) // 128) * 128        # pad head output to full lane width

    x_tm = jnp.transpose(x, (1, 0, 2))                   # (S, B, D) time-major
    if Bp != B:
        x_tm = jnp.pad(x_tm, ((0, 0), (0, Bp - B), (0, 0)))
    x_flat = x_tm.reshape(S * Bp, D)

    wlin = jnp.pad(lin_w_t, ((0, 0), (0, Op - O)))       # (H, Op)
    blin = jnp.pad(lin_b, ((0, 0), (0, Op - O)))         # (1, Op)

    # Pack per-layer [W_hh_l | W_ih_{l+1}] (last layer: | W_lin) as one RHS.
    flat_params = [lstm_params[0][0], lstm_params[0][2]]         # w_ih0, b0
    for l in range(L):
        w_hh_l = lstm_params[l][1]                               # (H, 4H)
        if l + 1 < L:
            nxt_w, nxt_b = lstm_params[l + 1][0], lstm_params[l + 1][2]
        else:
            nxt_w, nxt_b = wlin, blin
        flat_params.append(jnp.concatenate([w_hh_l, nxt_w], axis=1))
        flat_params.append(nxt_b)

    kernel = functools.partial(fused_lstm_kernel, S, Bp, H, L)
    n_inputs = 1 + len(flat_params)

    y = pl.pallas_call(
        kernel,
        out_shape=jax.ShapeDtypeStruct((S * Bp, Op), jnp.float32),
        in_specs=[pl.BlockSpec(memory_space=pltpu.MemorySpace.VMEM)] * n_inputs,
        out_specs=pl.BlockSpec(memory_space=pltpu.MemorySpace.VMEM),
    )(x_flat, *flat_params)

    y = y.reshape(S, Bp, Op)[:, :B, :O]                  # drop padding
    return jnp.transpose(y, (1, 0, 2))                   # back to (B, S, O)


# ----------------------------------------------------------------------------
# Pure-JAX reference (for correctness check)
# ----------------------------------------------------------------------------
def lstm_forward_ref(x, lstm_params, lin_w_t, lin_b):
    h = jnp.transpose(x, (1, 0, 2))
    B = h.shape[1]
    for (w_ih_t, w_hh_t, b) in lstm_params:
        H = w_hh_t.shape[0]

        def step(carry, x_t, w_ih_t=w_ih_t, w_hh_t=w_hh_t, b=b, H=H):
            hp, cp = carry
            gates = x_t @ w_ih_t + hp @ w_hh_t + b
            i = jax.nn.sigmoid(gates[:, 0 * H:1 * H])
            f = jax.nn.sigmoid(gates[:, 1 * H:2 * H])
            g = jnp.tanh(gates[:, 2 * H:3 * H])
            o = jax.nn.sigmoid(gates[:, 3 * H:4 * H])
            c = f * cp + i * g
            hn = o * jnp.tanh(c)
            return (hn, c), hn

        init = (jnp.zeros((B, H), jnp.float32), jnp.zeros((B, H), jnp.float32))
        _, h = lax.scan(step, init, h)
    S, B, H = h.shape
    y = h.reshape(S * B, H) @ lin_w_t + lin_b
    return jnp.transpose(y.reshape(S, B, -1), (1, 0, 2))


# ----------------------------------------------------------------------------
# Deterministic parameter init (PyTorch-style uniform(-1/sqrt(H), 1/sqrt(H)))
# ----------------------------------------------------------------------------
def init_params(key, input_dim, hidden_dim, output_dim, num_layers):
    k = 1.0 / (hidden_dim ** 0.5)
    lstm_params = []
    for layer in range(num_layers):
        d_in = input_dim if layer == 0 else hidden_dim
        key, k1, k2, k3, k4 = jax.random.split(key, 5)
        w_ih = jax.random.uniform(k1, (4 * hidden_dim, d_in), jnp.float32, -k, k)
        w_hh = jax.random.uniform(k2, (4 * hidden_dim, hidden_dim), jnp.float32, -k, k)
        b_ih = jax.random.uniform(k3, (4 * hidden_dim,), jnp.float32, -k, k)
        b_hh = jax.random.uniform(k4, (4 * hidden_dim,), jnp.float32, -k, k)
        lstm_params.append(
            (w_ih.T, w_hh.T, (b_ih + b_hh).reshape(1, 4 * hidden_dim))
        )
    key, k5, k6 = jax.random.split(key, 3)
    lin_w = jax.random.uniform(k5, (output_dim, hidden_dim), jnp.float32, -k, k)
    lin_b = jax.random.uniform(k6, (output_dim,), jnp.float32, -k, k)
    return tuple(lstm_params), lin_w.T, lin_b.reshape(1, output_dim)


if __name__ == "__main__":
    # Module config: LSTM(input_dim=4, hidden_dim=32, batch_size=2, output_dim=4, num_layers=3)
    batch, seq, input_dim, hidden_dim, output_dim, num_layers = 2, 8, 4, 32, 4, 3

    key = jax.random.PRNGKey(0)
    key, xk = jax.random.split(key)
    x = jax.random.normal(xk, (batch, seq, input_dim), jnp.float32)

    lstm_params, lin_w_t, lin_b = init_params(
        key, input_dim, hidden_dim, output_dim, num_layers
    )

    y = lstm_forward(x, lstm_params, lin_w_t, lin_b)
    jax.block_until_ready(y)

    y_ref = lstm_forward_ref(x, lstm_params, lin_w_t, lin_b)
    assert y.shape == (batch, seq, output_dim)
    assert jnp.allclose(y, y_ref, atol=1e-5, rtol=1e-5), "mismatch vs reference"

    print("KERNEL_OK")
</pallas_src>

<mosaic_0001>
module attributes {stable_mosaic.version = 11 : i64} {
  func.func @fused_lstm_kernel(%arg0: memref<64x4xf32, #tpu.memory_space<vmem>>, %arg1: memref<4x128xf32, #tpu.memory_space<vmem>>, %arg2: memref<1x128xf32, #tpu.memory_space<vmem>>, %arg3: memref<32x256xf32, #tpu.memory_space<vmem>>, %arg4: memref<1x128xf32, #tpu.memory_space<vmem>>, %arg5: memref<32x256xf32, #tpu.memory_space<vmem>>, %arg6: memref<1x128xf32, #tpu.memory_space<vmem>>, %arg7: memref<32x256xf32, #tpu.memory_space<vmem>>, %arg8: memref<1x128xf32, #tpu.memory_space<vmem>>, %arg9: memref<64x128xf32, #tpu.memory_space<vmem>>) attributes {dimension_semantics = [], scalar_prefetch = 0 : i64, scratch_operands = 0 : i64, tpu.core_type = #tpu.core_type<tc>} {
    %c0 = arith.constant 0 : index
    %c0_0 = arith.constant 0 : index
    %0 = vector.load %arg0[%c0, %c0_0] : memref<64x4xf32, #tpu.memory_space<vmem>>, vector<64x4xf32>
    %c0_1 = arith.constant 0 : index
    %c0_2 = arith.constant 0 : index
    %1 = vector.load %arg1[%c0_1, %c0_2] : memref<4x128xf32, #tpu.memory_space<vmem>>, vector<4x128xf32>
    %cst = arith.constant dense<0.000000e+00> : vector<64x128xf32>
    %2 = tpu.matmul %0, %1, %cst {dimension_numbers = #tpu.dot_dimension_numbers<[1], [0], [0], [1], [0, 0, 1, 1], [], []>} : vector<64x4xf32>, vector<4x128xf32>, vector<64x128xf32> -> vector<64x128xf32>
    %c0_3 = arith.constant 0 : index
    %c0_4 = arith.constant 0 : index
    %3 = vector.load %arg2[%c0_3, %c0_4] : memref<1x128xf32, #tpu.memory_space<vmem>>, vector<1x128xf32>
    %4 = vector.broadcast %3 : vector<1x128xf32> to vector<64x128xf32>
    %5 = arith.addf %2, %4 : vector<64x128xf32>
    %cst_5 = arith.constant 0.000000e+00 : f32
    %6 = vector.broadcast %cst_5 : f32 to vector<8x32xf32>
    %cst_6 = arith.constant 0.000000e+00 : f32
    %7 = vector.broadcast %cst_6 : f32 to vector<8x32xf32>
    %cst_7 = arith.constant 0.000000e+00 : f32
    %8 = vector.broadcast %cst_7 : f32 to vector<8x32xf32>
    %cst_8 = arith.constant 0.000000e+00 : f32
    %9 = vector.broadcast %cst_8 : f32 to vector<8x128xf32>
    %cst_9 = arith.constant 0.000000e+00 : f32
    %10 = vector.broadcast %cst_9 : f32 to vector<8x128xf32>
    %cst_10 = arith.constant 0.000000e+00 : f32
    %11 = vector.broadcast %cst_10 : f32 to vector<8x128xf32>
    %12 = vector.extract_strided_slice %5 {offsets = [0, 0], sizes = [8, 128], strides = [1, 1]} : vector<64x128xf32> to vector<8x128xf32>
    %13 = vector.extract_strided_slice %5 {offsets = [8, 0], sizes = [8, 128], strides = [1, 1]} : vector<64x128xf32> to vector<8x128xf32>
    %14 = vector.extract_strided_slice %5 {offsets = [16, 0], sizes = [8, 128], strides = [1, 1]} : vector<64x128xf32> to vector<8x128xf32>
    %15 = vector.extract_strided_slice %5 {offsets = [24, 0], sizes = [8, 128], strides = [1, 1]} : vector<64x128xf32> to vector<8x128xf32>
    %16 = vector.extract_strided_slice %5 {offsets = [32, 0], sizes = [8, 128], strides = [1, 1]} : vector<64x128xf32> to vector<8x128xf32>
    %17 = vector.extract_strided_slice %5 {offsets = [40, 0], sizes = [8, 128], strides = [1, 1]} : vector<64x128xf32> to vector<8x128xf32>
    %18 = vector.extract_strided_slice %5 {offsets = [48, 0], sizes = [8, 128], strides = [1, 1]} : vector<64x128xf32> to vector<8x128xf32>
    %19 = vector.extract_strided_slice %5 {offsets = [56, 0], sizes = [8, 128], strides = [1, 1]} : vector<64x128xf32> to vector<8x128xf32>
    %20 = arith.addf %12, %9 : vector<8x128xf32>
    %21 = arith.negf %20 : vector<8x128xf32>
    %22 = math.exp %21 : vector<8x128xf32>
    %cst_11 = arith.constant 1.000000e+00 : f32
    %23 = vector.broadcast %cst_11 : f32 to vector<8x128xf32>
    %24 = arith.addf %23, %22 : vector<8x128xf32>
    %25 = arith.divf %23, %24 : vector<8x128xf32>
    %26 = vector.extract_strided_slice %25 {offsets = [0, 0], sizes = [8, 32], strides = [1, 1]} : vector<8x128xf32> to vector<8x32xf32>
    %27 = vector.extract_strided_slice %25 {offsets = [0, 32], sizes = [8, 32], strides = [1, 1]} : vector<8x128xf32> to vector<8x32xf32>
    %28 = vector.extract_strided_slice %25 {offsets = [0, 96], sizes = [8, 32], strides = [1, 1]} : vector<8x128xf32> to vector<8x32xf32>
    %29 = vector.extract_strided_slice %20 {offsets = [0, 64], sizes = [8, 32], strides = [1, 1]} : vector<8x128xf32> to vector<8x32xf32>
    %30 = math.tanh %29 : vector<8x32xf32>
    %31 = arith.mulf %27, %6 : vector<8x32xf32>
    %32 = arith.mulf %26, %30 : vector<8x32xf32>
    %33 = arith.addf %31, %32 : vector<8x32xf32>
    %34 = math.tanh %33 : vector<8x32xf32>
    %35 = arith.mulf %28, %34 : vector<8x32xf32>
    %c0_12 = arith.constant 0 : index
    %c0_13 = arith.constant 0 : index
    %36 = vector.load %arg3[%c0_12, %c0_13] : memref<32x256xf32, #tpu.memory_space<vmem>>, vector<32x256xf32>
    %cst_14 = arith.constant dense<0.000000e+00> : vector<8x256xf32>
    %37 = tpu.matmul %35, %36, %cst_14 {dimension_numbers = #tpu.dot_dimension_numbers<[1], [0], [0], [1], [0, 0, 1, 1], [], []>} : vector<8x32xf32>, vector<32x256xf32>, vector<8x256xf32> -> vector<8x256xf32>
    %38 = vector.extract_strided_slice %37 {offsets = [0, 0], sizes = [8, 128], strides = [1, 1]} : vector<8x256xf32> to vector<8x128xf32>
    %39 = vector.extract_strided_slice %37 {offsets = [0, 128], sizes = [8, 128], strides = [1, 1]} : vector<8x256xf32> to vector<8x128xf32>
    %c0_15 = arith.constant 0 : index
    %c0_16 = arith.constant 0 : index
    %40 = vector.load %arg4[%c0_15, %c0_16] : memref<1x128xf32, #tpu.memory_space<vmem>>, vector<1x128xf32>
    %41 = vector.broadcast %40 : vector<1x128xf32> to vector<8x128xf32>
    %42 = arith.addf %39, %41 : vector<8x128xf32>
    %43 = arith.addf %13, %38 : vector<8x128xf32>
    %44 = arith.negf %43 : vector<8x128xf32>
    %45 = math.exp %44 : vector<8x128xf32>
    %cst_17 = arith.constant 1.000000e+00 : f32
    %46 = vector.broadcast %cst_17 : f32 to vector<8x128xf32>
    %47 = arith.addf %46, %45 : vector<8x128xf32>
    %48 = arith.divf %46, %47 : vector<8x128xf32>
    %49 = vector.extract_strided_slice %48 {offsets = [0, 0], sizes = [8, 32], strides = [1, 1]} : vector<8x128xf32> to vector<8x32xf32>
    %50 = vector.extract_strided_slice %48 {offsets = [0, 32], sizes = [8, 32], strides = [1, 1]} : vector<8x128xf32> to vector<8x32xf32>
    %51 = vector.extract_strided_slice %48 {offsets = [0, 96], sizes = [8, 32], strides = [1, 1]} : vector<8x128xf32> to vector<8x32xf32>
    %52 = vector.extract_strided_slice %43 {offsets = [0, 64], sizes = [8, 32], strides = [1, 1]} : vector<8x128xf32> to vector<8x32xf32>
    %53 = math.tanh %52 : vector<8x32xf32>
    %54 = arith.mulf %50, %33 : vector<8x32xf32>
    %55 = arith.mulf %49, %53 : vector<8x32xf32>
    %56 = arith.addf %54, %55 : vector<8x32xf32>
    %57 = math.tanh %56 : vector<8x32xf32>
    %58 = arith.mulf %51, %57 : vector<8x32xf32>
    %c0_18 = arith.constant 0 : index
    %c0_19 = arith.constant 0 : index
    %59 = vector.load %arg3[%c0_18, %c0_19] : memref<32x256xf32, #tpu.memory_space<vmem>>, vector<32x256xf32>
    %cst_20 = arith.constant dense<0.000000e+00> : vector<8x256xf32>
    %60 = tpu.matmul %58, %59, %cst_20 {dimension_numbers = #tpu.dot_dimension_numbers<[1], [0], [0], [1], [0, 0, 1, 1], [], []>} : vector<8x32xf32>, vector<32x256xf32>, vector<8x256xf32> -> vector<8x256xf32>
    %61 = vector.extract_strided_slice %60 {offsets = [0, 0], sizes = [8, 128], strides = [1, 1]} : vector<8x256xf32> to vector<8x128xf32>
    %62 = vector.extract_strided_slice %60 {offsets = [0, 128], sizes = [8, 128], strides = [1, 1]} : vector<8x256xf32> to vector<8x128xf32>
    %c0_21 = arith.constant 0 : index
    %c0_22 = arith.constant 0 : index
    %63 = vector.load %arg4[%c0_21, %c0_22] : memref<1x128xf32, #tpu.memory_space<vmem>>, vector<1x128xf32>
    %64 = vector.broadcast %63 : vector<1x128xf32> to vector<8x128xf32>
    %65 = arith.addf %62, %64 : vector<8x128xf32>
    %66 = arith.addf %42, %10 : vector<8x128xf32>
    %67 = arith.negf %66 : vector<8x128xf32>
    %68 = math.exp %67 : vector<8x128xf32>
    %cst_23 = arith.constant 1.000000e+00 : f32
    %69 = vector.broadcast %cst_23 : f32 to vector<8x128xf32>
    %70 = arith.addf %69, %68 : vector<8x128xf32>
    %71 = arith.divf %69, %70 : vector<8x128xf32>
    %72 = vector.extract_strided_slice %71 {offsets = [0, 0], sizes = [8, 32], strides = [1, 1]} : vector<8x128xf32> to vector<8x32xf32>
    %73 = vector.extract_strided_slice %71 {offsets = [0, 32], sizes = [8, 32], strides = [1, 1]} : vector<8x128xf32> to vector<8x32xf32>
    %74 = vector.extract_strided_slice %71 {offsets = [0, 96], sizes = [8, 32], strides = [1, 1]} : vector<8x128xf32> to vector<8x32xf32>
    %75 = vector.extract_strided_slice %66 {offsets = [0, 64], sizes = [8, 32], strides = [1, 1]} : vector<8x128xf32> to vector<8x32xf32>
    %76 = math.tanh %75 : vector<8x32xf32>
    %77 = arith.mulf %73, %7 : vector<8x32xf32>
    %78 = arith.mulf %72, %76 : vector<8x32xf32>
    %79 = arith.addf %77, %78 : vector<8x32xf32>
    %80 = math.tanh %79 : vector<8x32xf32>
    %81 = arith.mulf %74, %80 : vector<8x32xf32>
    %c0_24 = arith.constant 0 : index
    %c0_25 = arith.constant 0 : index
    %82 = vector.load %arg5[%c0_24, %c0_25] : memref<32x256xf32, #tpu.memory_space<vmem>>, vector<32x256xf32>
    %cst_26 = arith.constant dense<0.000000e+00> : vector<8x256xf32>
    %83 = tpu.matmul %81, %82, %cst_26 {dimension_numbers = #tpu.dot_dimension_numbers<[1], [0], [0], [1], [0, 0, 1, 1], [], []>} : vector<8x32xf32>, vector<32x256xf32>, vector<8x256xf32> -> vector<8x256xf32>
    %84 = vector.extract_strided_slice %83 {offsets = [0, 0], sizes = [8, 128], strides = [1, 1]} : vector<8x256xf32> to vector<8x128xf32>
    %85 = vector.extract_strided_slice %83 {offsets = [0, 128], sizes = [8, 128], strides = [1, 1]} : vector<8x256xf32> to vector<8x128xf32>
    %c0_27 = arith.constant 0 : index
    %c0_28 = arith.constant 0 : index
    %86 = vector.load %arg6[%c0_27, %c0_28] : memref<1x128xf32, #tpu.memory_space<vmem>>, vector<1x128xf32>
    %87 = vector.broadcast %86 : vector<1x128xf32> to vector<8x128xf32>
    %88 = arith.addf %85, %87 : vector<8x128xf32>
    %89 = arith.addf %14, %61 : vector<8x128xf32>
    %90 = arith.negf %89 : vector<8x128xf32>
    %91 = math.exp %90 : vector<8x128xf32>
    %cst_29 = arith.constant 1.000000e+00 : f32
    %92 = vector.broadcast %cst_29 : f32 to vector<8x128xf32>
    %93 = arith.addf %92, %91 : vector<8x128xf32>
    %94 = arith.divf %92, %93 : vector<8x128xf32>
    %95 = vector.extract_strided_slice %94 {offsets = [0, 0], sizes = [8, 32], strides = [1, 1]} : vector<8x128xf32> to vector<8x32xf32>
    %96 = vector.extract_strided_slice %94 {offsets = [0, 32], sizes = [8, 32], strides = [1, 1]} : vector<8x128xf32> to vector<8x32xf32>
    %97 = vector.extract_strided_slice %94 {offsets = [0, 96], sizes = [8, 32], strides = [1, 1]} : vector<8x128xf32> to vector<8x32xf32>
    %98 = vector.extract_strided_slice %89 {offsets = [0, 64], sizes = [8, 32], strides = [1, 1]} : vector<8x128xf32> to vector<8x32xf32>
    %99 = math.tanh %98 : vector<8x32xf32>
    %100 = arith.mulf %96, %56 : vector<8x32xf32>
    %101 = arith.mulf %95, %99 : vector<8x32xf32>
    %102 = arith.addf %100, %101 : vector<8x32xf32>
    %103 = math.tanh %102 : vector<8x32xf32>
    %104 = arith.mulf %97, %103 : vector<8x32xf32>
    %c0_30 = arith.constant 0 : index
    %c0_31 = arith.constant 0 : index
    %105 = vector.load %arg3[%c0_30, %c0_31] : memref<32x256xf32, #tpu.memory_space<vmem>>, vector<32x256xf32>
    %cst_32 = arith.constant dense<0.000000e+00> : vector<8x256xf32>
    %106 = tpu.matmul %104, %105, %cst_32 {dimension_numbers = #tpu.dot_dimension_numbers<[1], [0], [0], [1], [0, 0, 1, 1], [], []>} : vector<8x32xf32>, vector<32x256xf32>, vector<8x256xf32> -> vector<8x256xf32>
    %107 = vector.extract_strided_slice %106 {offsets = [0, 0], sizes = [8, 128], strides = [1, 1]} : vector<8x256xf32> to vector<8x128xf32>
    %108 = vector.extract_strided_slice %106 {offsets = [0, 128], sizes = [8, 128], strides = [1, 1]} : vector<8x256xf32> to vector<8x128xf32>
    %c0_33 = arith.constant 0 : index
    %c0_34 = arith.constant 0 : index
    %109 = vector.load %arg4[%c0_33, %c0_34] : memref<1x128xf32, #tpu.memory_space<vmem>>, vector<1x128xf32>
    %110 = vector.broadcast %109 : vector<1x128xf32> to vector<8x128xf32>
    %111 = arith.addf %108, %110 : vector<8x128xf32>
    %112 = arith.addf %65, %84 : vector<8x128xf32>
    %113 = arith.negf %112 : vector<8x128xf32>
    %114 = math.exp %113 : vector<8x128xf32>
    %cst_35 = arith.constant 1.000000e+00 : f32
    %115 = vector.broadcast %cst_35 : f32 to vector<8x128xf32>
    %116 = arith.addf %115, %114 : vector<8x128xf32>
    %117 = arith.divf %115, %116 : vector<8x128xf32>
    %118 = vector.extract_strided_slice %117 {offsets = [0, 0], sizes = [8, 32], strides = [1, 1]} : vector<8x128xf32> to vector<8x32xf32>
    %119 = vector.extract_strided_slice %117 {offsets = [0, 32], sizes = [8, 32], strides = [1, 1]} : vector<8x128xf32> to vector<8x32xf32>
    %120 = vector.extract_strided_slice %117 {offsets = [0, 96], sizes = [8, 32], strides = [1, 1]} : vector<8x128xf32> to vector<8x32xf32>
    %121 = vector.extract_strided_slice %112 {offsets = [0, 64], sizes = [8, 32], strides = [1, 1]} : vector<8x128xf32> to vector<8x32xf32>
    %122 = math.tanh %121 : vector<8x32xf32>
    %123 = arith.mulf %119, %79 : vector<8x32xf32>
    %124 = arith.mulf %118, %122 : vector<8x32xf32>
    %125 = arith.addf %123, %124 : vector<8x32xf32>
    %126 = math.tanh %125 : vector<8x32xf32>
    %127 = arith.mulf %120, %126 : vector<8x32xf32>
    %c0_36 = arith.constant 0 : index
    %c0_37 = arith.constant 0 : index
    %128 = vector.load %arg5[%c0_36, %c0_37] : memref<32x256xf32, #tpu.memory_space<vmem>>, vector<32x256xf32>
    %cst_38 = arith.constant dense<0.000000e+00> : vector<8x256xf32>
    %129 = tpu.matmul %127, %128, %cst_38 {dimension_numbers = #tpu.dot_dimension_numbers<[1], [0], [0], [1], [0, 0, 1, 1], [], []>} : vector<8x32xf32>, vector<32x256xf32>, vector<8x256xf32> -> vector<8x256xf32>
    %130 = vector.extract_strided_slice %129 {offsets = [0, 0], sizes = [8, 128], strides = [1, 1]} : vector<8x256xf32> to vector<8x128xf32>
    %131 = vector.extract_strided_slice %129 {offsets = [0, 128], sizes = [8, 128], strides = [1, 1]} : vector<8x256xf32> to vector<8x128xf32>
    %c0_39 = arith.constant 0 : index
    %c0_40 = arith.constant 0 : index
    %132 = vector.load %arg6[%c0_39, %c0_40] : memref<1x128xf32, #tpu.memory_space<vmem>>, vector<1x128xf32>
    %133 = vector.broadcast %132 : vector<1x128xf32> to vector<8x128xf32>
    %134 = arith.addf %131, %133 : vector<8x128xf32>
    %135 = arith.addf %88, %11 : vector<8x128xf32>
    %136 = arith.negf %135 : vector<8x128xf32>
    %137 = math.exp %136 : vector<8x128xf32>
    %cst_41 = arith.constant 1.000000e+00 : f32
    %138 = vector.broadcast %cst_41 : f32 to vector<8x128xf32>
    %139 = arith.addf %138, %137 : vector<8x128xf32>
    %140 = arith.divf %138, %139 : vector<8x128xf32>
    %141 = vector.extract_strided_slice %140 {offsets = [0, 0], sizes = [8, 32], strides = [1, 1]} : vector<8x128xf32> to vector<8x32xf32>
    %142 = vector.extract_strided_slice %140 {offsets = [0, 32], sizes = [8, 32], strides = [1, 1]} : vector<8x128xf32> to vector<8x32xf32>
    %143 = vector.extract_strided_slice %140 {offsets = [0, 96], sizes = [8, 32], strides = [1, 1]} : vector<8x128xf32> to vector<8x32xf32>
    %144 = vector.extract_strided_slice %135 {offsets = [0, 64], sizes = [8, 32], strides = [1, 1]} : vector<8x128xf32> to vector<8x32xf32>
    %145 = math.tanh %144 : vector<8x32xf32>
    %146 = arith.mulf %142, %8 : vector<8x32xf32>
    %147 = arith.mulf %141, %145 : vector<8x32xf32>
    %148 = arith.addf %146, %147 : vector<8x32xf32>
    %149 = math.tanh %148 : vector<8x32xf32>
    %150 = arith.mulf %143, %149 : vector<8x32xf32>
    %c0_42 = arith.constant 0 : index
    %c0_43 = arith.constant 0 : index
    %151 = vector.load %arg7[%c0_42, %c0_43] : memref<32x256xf32, #tpu.memory_space<vmem>>, vector<32x256xf32>
    %cst_44 = arith.constant dense<0.000000e+00> : vector<8x256xf32>
    %152 = tpu.matmul %150, %151, %cst_44 {dimension_numbers = #tpu.dot_dimension_numbers<[1], [0], [0], [1], [0, 0, 1, 1], [], []>} : vector<8x32xf32>, vector<32x256xf32>, vector<8x256xf32> -> vector<8x256xf32>
    %153 = vector.extract_strided_slice %152 {offsets = [0, 0], sizes = [8, 128], strides = [1, 1]} : vector<8x256xf32> to vector<8x128xf32>
    %154 = vector.extract_strided_slice %152 {offsets = [0, 128], sizes = [8, 128], strides = [1, 1]} : vector<8x256xf32> to vector<8x128xf32>
    %c0_45 = arith.constant 0 : index
    %c0_46 = arith.constant 0 : index
    %155 = vector.load %arg8[%c0_45, %c0_46] : memref<1x128xf32, #tpu.memory_space<vmem>>, vector<1x128xf32>
    %156 = vector.broadcast %155 : vector<1x128xf32> to vector<8x128xf32>
    %157 = arith.addf %154, %156 : vector<8x128xf32>
    %c0_47 = arith.constant 0 : index
    %c0_48 = arith.constant 0 : index
    %158 = vector.load %arg9[%c0_47, %c0_48] : memref<64x128xf32, #tpu.memory_space<vmem>>, vector<8x128xf32>
    tpu.vector_store %arg9[%c0_47, %c0_48], %157 {strides = array<i32>} : memref<64x128xf32, #tpu.memory_space<vmem>>, vector<8x128xf32>,
    %159 = arith.addf %15, %107 : vector<8x128xf32>
    %160 = arith.negf %159 : vector<8x128xf32>
    %161 = math.exp %160 : vector<8x128xf32>
    %cst_49 = arith.constant 1.000000e+00 : f32
    %162 = vector.broadcast %cst_49 : f32 to vector<8x128xf32>
    %163 = arith.addf %162, %161 : vector<8x128xf32>
    %164 = arith.divf %162, %163 : vector<8x128xf32>
    %165 = vector.extract_strided_slice %164 {offsets = [0, 0], sizes = [8, 32], strides = [1, 1]} : vector<8x128xf32> to vector<8x32xf32>
    %166 = vector.extract_strided_slice %164 {offsets = [0, 32], sizes = [8, 32], strides = [1, 1]} : vector<8x128xf32> to vector<8x32xf32>
    %167 = vector.extract_strided_slice %164 {offsets = [0, 96], sizes = [8, 32], strides = [1, 1]} : vector<8x128xf32> to vector<8x32xf32>
    %168 = vector.extract_strided_slice %159 {offsets = [0, 64], sizes = [8, 32], strides = [1, 1]} : vector<8x128xf32> to vector<8x32xf32>
    %169 = math.tanh %168 : vector<8x32xf32>
    %170 = arith.mulf %166, %102 : vector<8x32xf32>
    %171 = arith.mulf %165, %169 : vector<8x32xf32>
    %172 = arith.addf %170, %171 : vector<8x32xf32>
    %173 = math.tanh %172 : vector<8x32xf32>
    %174 = arith.mulf %167, %173 : vector<8x32xf32>
    %c0_50 = arith.constant 0 : index
    %c0_51 = arith.constant 0 : index
    %175 = vector.load %arg3[%c0_50, %c0_51] : memref<32x256xf32, #tpu.memory_space<vmem>>, vector<32x256xf32>
    %cst_52 = arith.constant dense<0.000000e+00> : vector<8x256xf32>
    %176 = tpu.matmul %174, %175, %cst_52 {dimension_numbers = #tpu.dot_dimension_numbers<[1], [0], [0], [1], [0, 0, 1, 1], [], []>} : vector<8x32xf32>, vector<32x256xf32>, vector<8x256xf32> -> vector<8x256xf32>
    %177 = vector.extract_strided_slice %176 {offsets = [0, 0], sizes = [8, 128], strides = [1, 1]} : vector<8x256xf32> to vector<8x128xf32>
    %178 = vector.extract_strided_slice %176 {offsets = [0, 128], sizes = [8, 128], strides = [1, 1]} : vector<8x256xf32> to vector<8x128xf32>
    %c0_53 = arith.constant 0 : index
    %c0_54 = arith.constant 0 : index
    %179 = vector.load %arg4[%c0_53, %c0_54] : memref<1x128xf32, #tpu.memory_space<vmem>>, vector<1x128xf32>
    %180 = vector.broadcast %179 : vector<1x128xf32> to vector<8x128xf32>
    %181 = arith.addf %178, %180 : vector<8x128xf32>
    %182 = arith.addf %111, %130 : vector<8x128xf32>
    %183 = arith.negf %182 : vector<8x128xf32>
    %184 = math.exp %183 : vector<8x128xf32>
    %cst_55 = arith.constant 1.000000e+00 : f32
    %185 = vector.broadcast %cst_55 : f32 to vector<8x128xf32>
    %186 = arith.addf %185, %184 : vector<8x128xf32>
    %187 = arith.divf %185, %186 : vector<8x128xf32>
    %188 = vector.extract_strided_slice %187 {offsets = [0, 0], sizes = [8, 32], strides = [1, 1]} : vector<8x128xf32> to vector<8x32xf32>
    %189 = vector.extract_strided_slice %187 {offsets = [0, 32], sizes = [8, 32], strides = [1, 1]} : vector<8x128xf32> to vector<8x32xf32>
    %190 = vector.extract_strided_slice %187 {offsets = [0, 96], sizes = [8, 32], strides = [1, 1]} : vector<8x128xf32> to vector<8x32xf32>
    %191 = vector.extract_strided_slice %182 {offsets = [0, 64], sizes = [8, 32], strides = [1, 1]} : vector<8x128xf32> to vector<8x32xf32>
    %192 = math.tanh %191 : vector<8x32xf32>
    %193 = arith.mulf %189, %125 : vector<8x32xf32>
    %194 = arith.mulf %188, %192 : vector<8x32xf32>
    %195 = arith.addf %193, %194 : vector<8x32xf32>
    %196 = math.tanh %195 : vector<8x32xf32>
    %197 = arith.mulf %190, %196 : vector<8x32xf32>
    %c0_56 = arith.constant 0 : index
    %c0_57 = arith.constant 0 : index
    %198 = vector.load %arg5[%c0_56, %c0_57] : memref<32x256xf32, #tpu.memory_space<vmem>>, vector<32x256xf32>
    %cst_58 = arith.constant dense<0.000000e+00> : vector<8x256xf32>
    %199 = tpu.matmul %197, %198, %cst_58 {dimension_numbers = #tpu.dot_dimension_numbers<[1], [0], [0], [1], [0, 0, 1, 1], [], []>} : vector<8x32xf32>, vector<32x256xf32>, vector<8x256xf32> -> vector<8x256xf32>
    %200 = vector.extract_strided_slice %199 {offsets = [0, 0], sizes = [8, 128], strides = [1, 1]} : vector<8x256xf32> to vector<8x128xf32>
    %201 = vector.extract_strided_slice %199 {offsets = [0, 128], sizes = [8, 128], strides = [1, 1]} : vector<8x256xf32> to vector<8x128xf32>
    %c0_59 = arith.constant 0 : index
    %c0_60 = arith.constant 0 : index
    %202 = vector.load %arg6[%c0_59, %c0_60] : memref<1x128xf32, #tpu.memory_space<vmem>>, vector<1x128xf32>
    %203 = vector.broadcast %202 : vector<1x128xf32> to vector<8x128xf32>
    %204 = arith.addf %201, %203 : vector<8x128xf32>
    %205 = arith.addf %134, %153 : vector<8x128xf32>
    %206 = arith.negf %205 : vector<8x128xf32>
    %207 = math.exp %206 : vector<8x128xf32>
    %cst_61 = arith.constant 1.000000e+00 : f32
    %208 = vector.broadcast %cst_61 : f32 to vector<8x128xf32>
    %209 = arith.addf %208, %207 : vector<8x128xf32>
    %210 = arith.divf %208, %209 : vector<8x128xf32>
    %211 = vector.extract_strided_slice %210 {offsets = [0, 0], sizes = [8, 32], strides = [1, 1]} : vector<8x128xf32> to vector<8x32xf32>
    %212 = vector.extract_strided_slice %210 {offsets = [0, 32], sizes = [8, 32], strides = [1, 1]} : vector<8x128xf32> to vector<8x32xf32>
    %213 = vector.extract_strided_slice %210 {offsets = [0, 96], sizes = [8, 32], strides = [1, 1]} : vector<8x128xf32> to vector<8x32xf32>
    %214 = vector.extract_strided_slice %205 {offsets = [0, 64], sizes = [8, 32], strides = [1, 1]} : vector<8x128xf32> to vector<8x32xf32>
    %215 = math.tanh %214 : vector<8x32xf32>
    %216 = arith.mulf %212, %148 : vector<8x32xf32>
    %217 = arith.mulf %211, %215 : vector<8x32xf32>
    %218 = arith.addf %216, %217 : vector<8x32xf32>
    %219 = math.tanh %218 : vector<8x32xf32>
    %220 = arith.mulf %213, %219 : vector<8x32xf32>
    %c0_62 = arith.constant 0 : index
    %c0_63 = arith.constant 0 : index
    %221 = vector.load %arg7[%c0_62, %c0_63] : memref<32x256xf32, #tpu.memory_space<vmem>>, vector<32x256xf32>
    %cst_64 = arith.constant dense<0.000000e+00> : vector<8x256xf32>
    %222 = tpu.matmul %220, %221, %cst_64 {dimension_numbers = #tpu.dot_dimension_numbers<[1], [0], [0], [1], [0, 0, 1, 1], [], []>} : vector<8x32xf32>, vector<32x256xf32>, vector<8x256xf32> -> vector<8x256xf32>
    %223 = vector.extract_strided_slice %222 {offsets = [0, 0], sizes = [8, 128], strides = [1, 1]} : vector<8x256xf32> to vector<8x128xf32>
    %224 = vector.extract_strided_slice %222 {offsets = [0, 128], sizes = [8, 128], strides = [1, 1]} : vector<8x256xf32> to vector<8x128xf32>
    %c0_65 = arith.constant 0 : index
    %c0_66 = arith.constant 0 : index
    %225 = vector.load %arg8[%c0_65, %c0_66] : memref<1x128xf32, #tpu.memory_space<vmem>>, vector<1x128xf32>
    %226 = vector.broadcast %225 : vector<1x128xf32> to vector<8x128xf32>
    %227 = arith.addf %224, %226 : vector<8x128xf32>
    %c8 = arith.constant 8 : index
    %c0_67 = arith.constant 0 : index
    %228 = vector.load %arg9[%c8, %c0_67] : memref<64x128xf32, #tpu.memory_space<vmem>>, vector<8x128xf32>
    tpu.vector_store %arg9[%c8, %c0_67], %227 {strides = array<i32>} : memref<64x128xf32, #tpu.memory_space<vmem>>, vector<8x128xf32>,
    %229 = arith.addf %16, %177 : vector<8x128xf32>
    %230 = arith.negf %229 : vector<8x128xf32>
    %231 = math.exp %230 : vector<8x128xf32>
    %cst_68 = arith.constant 1.000000e+00 : f32
    %232 = vector.broadcast %cst_68 : f32 to vector<8x128xf32>
    %233 = arith.addf %232, %231 : vector<8x128xf32>
    %234 = arith.divf %232, %233 : vector<8x128xf32>
    %235 = vector.extract_strided_slice %234 {offsets = [0, 0], sizes = [8, 32], strides = [1, 1]} : vector<8x128xf32> to vector<8x32xf32>
    %236 = vector.extract_strided_slice %234 {offsets = [0, 32], sizes = [8, 32], strides = [1, 1]} : vector<8x128xf32> to vector<8x32xf32>
    %237 = vector.extract_strided_slice %234 {offsets = [0, 96], sizes = [8, 32], strides = [1, 1]} : vector<8x128xf32> to vector<8x32xf32>
    %238 = vector.extract_strided_slice %229 {offsets = [0, 64], sizes = [8, 32], strides = [1, 1]} : vector<8x128xf32> to vector<8x32xf32>
    %239 = math.tanh %238 : vector<8x32xf32>
    %240 = arith.mulf %236, %172 : vector<8x32xf32>
    %241 = arith.mulf %235, %239 : vector<8x32xf32>
    %242 = arith.addf %240, %241 : vector<8x32xf32>
    %243 = math.tanh %242 : vector<8x32xf32>
    %244 = arith.mulf %237, %243 : vector<8x32xf32>
    %c0_69 = arith.constant 0 : index
    %c0_70 = arith.constant 0 : index
    %245 = vector.load %arg3[%c0_69, %c0_70] : memref<32x256xf32, #tpu.memory_space<vmem>>, vector<32x256xf32>
    %cst_71 = arith.constant dense<0.000000e+00> : vector<8x256xf32>
    %246 = tpu.matmul %244, %245, %cst_71 {dimension_numbers = #tpu.dot_dimension_numbers<[1], [0], [0], [1], [0, 0, 1, 1], [], []>} : vector<8x32xf32>, vector<32x256xf32>, vector<8x256xf32> -> vector<8x256xf32>
    %247 = vector.extract_strided_slice %246 {offsets = [0, 0], sizes = [8, 128], strides = [1, 1]} : vector<8x256xf32> to vector<8x128xf32>
    %248 = vector.extract_strided_slice %246 {offsets = [0, 128], sizes = [8, 128], strides = [1, 1]} : vector<8x256xf32> to vector<8x128xf32>
    %c0_72 = arith.constant 0 : index
    %c0_73 = arith.constant 0 : index
    %249 = vector.load %arg4[%c0_72, %c0_73] : memref<1x128xf32, #tpu.memory_space<vmem>>, vector<1x128xf32>
    %250 = vector.broadcast %249 : vector<1x128xf32> to vector<8x128xf32>
    %251 = arith.addf %248, %250 : vector<8x128xf32>
    %252 = arith.addf %181, %200 : vector<8x128xf32>
    %253 = arith.negf %252 : vector<8x128xf32>
    %254 = math.exp %253 : vector<8x128xf32>
    %cst_74 = arith.constant 1.000000e+00 : f32
    %255 = vector.broadcast %cst_74 : f32 to vector<8x128xf32>
    %256 = arith.addf %255, %254 : vector<8x128xf32>
    %257 = arith.divf %255, %256 : vector<8x128xf32>
    %258 = vector.extract_strided_slice %257 {offsets = [0, 0], sizes = [8, 32], strides = [1, 1]} : vector<8x128xf32> to vector<8x32xf32>
    %259 = vector.extract_strided_slice %257 {offsets = [0, 32], sizes = [8, 32], strides = [1, 1]} : vector<8x128xf32> to vector<8x32xf32>
    %260 = vector.extract_strided_slice %257 {offsets = [0, 96], sizes = [8, 32], strides = [1, 1]} : vector<8x128xf32> to vector<8x32xf32>
    %261 = vector.extract_strided_slice %252 {offsets = [0, 64], sizes = [8, 32], strides = [1, 1]} : vector<8x128xf32> to vector<8x32xf32>
    %262 = math.tanh %261 : vector<8x32xf32>
    %263 = arith.mulf %259, %195 : vector<8x32xf32>
    %264 = arith.mulf %258, %262 : vector<8x32xf32>
    %265 = arith.addf %263, %264 : vector<8x32xf32>
    %266 = math.tanh %265 : vector<8x32xf32>
    %267 = arith.mulf %260, %266 : vector<8x32xf32>
    %c0_75 = arith.constant 0 : index
    %c0_76 = arith.constant 0 : index
    %268 = vector.load %arg5[%c0_75, %c0_76] : memref<32x256xf32, #tpu.memory_space<vmem>>, vector<32x256xf32>
    %cst_77 = arith.constant dense<0.000000e+00> : vector<8x256xf32>
    %269 = tpu.matmul %267, %268, %cst_77 {dimension_numbers = #tpu.dot_dimension_numbers<[1], [0], [0], [1], [0, 0, 1, 1], [], []>} : vector<8x32xf32>, vector<32x256xf32>, vector<8x256xf32> -> vector<8x256xf32>
    %270 = vector.extract_strided_slice %269 {offsets = [0, 0], sizes = [8, 128], strides = [1, 1]} : vector<8x256xf32> to vector<8x128xf32>
    %271 = vector.extract_strided_slice %269 {offsets = [0, 128], sizes = [8, 128], strides = [1, 1]} : vector<8x256xf32> to vector<8x128xf32>
    %c0_78 = arith.constant 0 : index
    %c0_79 = arith.constant 0 : index
    %272 = vector.load %arg6[%c0_78, %c0_79] : memref<1x128xf32, #tpu.memory_space<vmem>>, vector<1x128xf32>
    %273 = vector.broadcast %272 : vector<1x128xf32> to vector<8x128xf32>
    %274 = arith.addf %271, %273 : vector<8x128xf32>
    %275 = arith.addf %204, %223 : vector<8x128xf32>
    %276 = arith.negf %275 : vector<8x128xf32>
    %277 = math.exp %276 : vector<8x128xf32>
    %cst_80 = arith.constant 1.000000e+00 : f32
    %278 = vector.broadcast %cst_80 : f32 to vector<8x128xf32>
    %279 = arith.addf %278, %277 : vector<8x128xf32>
    %280 = arith.divf %278, %279 : vector<8x128xf32>
    %281 = vector.extract_strided_slice %280 {offsets = [0, 0], sizes = [8, 32], strides = [1, 1]} : vector<8x128xf32> to vector<8x32xf32>
    %282 = vector.extract_strided_slice %280 {offsets = [0, 32], sizes = [8, 32], strides = [1, 1]} : vector<8x128xf32> to vector<8x32xf32>
    %283 = vector.extract_strided_slice %280 {offsets = [0, 96], sizes = [8, 32], strides = [1, 1]} : vector<8x128xf32> to vector<8x32xf32>
    %284 = vector.extract_strided_slice %275 {offsets = [0, 64], sizes = [8, 32], strides = [1, 1]} : vector<8x128xf32> to vector<8x32xf32>
    %285 = math.tanh %284 : vector<8x32xf32>
    %286 = arith.mulf %282, %218 : vector<8x32xf32>
    %287 = arith.mulf %281, %285 : vector<8x32xf32>
    %288 = arith.addf %286, %287 : vector<8x32xf32>
    %289 = math.tanh %288 : vector<8x32xf32>
    %290 = arith.mulf %283, %289 : vector<8x32xf32>
    %c0_81 = arith.constant 0 : index
    %c0_82 = arith.constant 0 : index
    %291 = vector.load %arg7[%c0_81, %c0_82] : memref<32x256xf32, #tpu.memory_space<vmem>>, vector<32x256xf32>
    %cst_83 = arith.constant dense<0.000000e+00> : vector<8x256xf32>
    %292 = tpu.matmul %290, %291, %cst_83 {dimension_numbers = #tpu.dot_dimension_numbers<[1], [0], [0], [1], [0, 0, 1, 1], [], []>} : vector<8x32xf32>, vector<32x256xf32>, vector<8x256xf32> -> vector<8x256xf32>
    %293 = vector.extract_strided_slice %292 {offsets = [0, 0], sizes = [8, 128], strides = [1, 1]} : vector<8x256xf32> to vector<8x128xf32>
    %294 = vector.extract_strided_slice %292 {offsets = [0, 128], sizes = [8, 128], strides = [1, 1]} : vector<8x256xf32> to vector<8x128xf32>
    %c0_84 = arith.constant 0 : index
    %c0_85 = arith.constant 0 : index
    %295 = vector.load %arg8[%c0_84, %c0_85] : memref<1x128xf32, #tpu.memory_space<vmem>>, vector<1x128xf32>
    %296 = vector.broadcast %295 : vector<1x128xf32> to vector<8x128xf32>
    %297 = arith.addf %294, %296 : vector<8x128xf32>
    %c16 = arith.constant 16 : index
    %c0_86 = arith.constant 0 : index
    %298 = vector.load %arg9[%c16, %c0_86] : memref<64x128xf32, #tpu.memory_space<vmem>>, vector<8x128xf32>
    tpu.vector_store %arg9[%c16, %c0_86], %297 {strides = array<i32>} : memref<64x128xf32, #tpu.memory_space<vmem>>, vector<8x128xf32>,
    %299 = arith.addf %17, %247 : vector<8x128xf32>
    %300 = arith.negf %299 : vector<8x128xf32>
    %301 = math.exp %300 : vector<8x128xf32>
    %cst_87 = arith.constant 1.000000e+00 : f32
    %302 = vector.broadcast %cst_87 : f32 to vector<8x128xf32>
    %303 = arith.addf %302, %301 : vector<8x128xf32>
    %304 = arith.divf %302, %303 : vector<8x128xf32>
    %305 = vector.extract_strided_slice %304 {offsets = [0, 0], sizes = [8, 32], strides = [1, 1]} : vector<8x128xf32> to vector<8x32xf32>
    %306 = vector.extract_strided_slice %304 {offsets = [0, 32], sizes = [8, 32], strides = [1, 1]} : vector<8x128xf32> to vector<8x32xf32>
    %307 = vector.extract_strided_slice %304 {offsets = [0, 96], sizes = [8, 32], strides = [1, 1]} : vector<8x128xf32> to vector<8x32xf32>
    %308 = vector.extract_strided_slice %299 {offsets = [0, 64], sizes = [8, 32], strides = [1, 1]} : vector<8x128xf32> to vector<8x32xf32>
    %309 = math.tanh %308 : vector<8x32xf32>
    %310 = arith.mulf %306, %242 : vector<8x32xf32>
    %311 = arith.mulf %305, %309 : vector<8x32xf32>
    %312 = arith.addf %310, %311 : vector<8x32xf32>
    %313 = math.tanh %312 : vector<8x32xf32>
    %314 = arith.mulf %307, %313 : vector<8x32xf32>
    %c0_88 = arith.constant 0 : index
    %c0_89 = arith.constant 0 : index
    %315 = vector.load %arg3[%c0_88, %c0_89] : memref<32x256xf32, #tpu.memory_space<vmem>>, vector<32x256xf32>
    %cst_90 = arith.constant dense<0.000000e+00> : vector<8x256xf32>
    %316 = tpu.matmul %314, %315, %cst_90 {dimension_numbers = #tpu.dot_dimension_numbers<[1], [0], [0], [1], [0, 0, 1, 1], [], []>} : vector<8x32xf32>, vector<32x256xf32>, vector<8x256xf32> -> vector<8x256xf32>
    %317 = vector.extract_strided_slice %316 {offsets = [0, 0], sizes = [8, 128], strides = [1, 1]} : vector<8x256xf32> to vector<8x128xf32>
    %318 = vector.extract_strided_slice %316 {offsets = [0, 128], sizes = [8, 128], strides = [1, 1]} : vector<8x256xf32> to vector<8x128xf32>
    %c0_91 = arith.constant 0 : index
    %c0_92 = arith.constant 0 : index
    %319 = vector.load %arg4[%c0_91, %c0_92] : memref<1x128xf32, #tpu.memory_space<vmem>>, vector<1x128xf32>
    %320 = vector.broadcast %319 : vector<1x128xf32> to vector<8x128xf32>
    %321 = arith.addf %318, %320 : vector<8x128xf32>
    %322 = arith.addf %251, %270 : vector<8x128xf32>
    %323 = arith.negf %322 : vector<8x128xf32>
    %324 = math.exp %323 : vector<8x128xf32>
    %cst_93 = arith.constant 1.000000e+00 : f32
    %325 = vector.broadcast %cst_93 : f32 to vector<8x128xf32>
    %326 = arith.addf %325, %324 : vector<8x128xf32>
    %327 = arith.divf %325, %326 : vector<8x128xf32>
    %328 = vector.extract_strided_slice %327 {offsets = [0, 0], sizes = [8, 32], strides = [1, 1]} : vector<8x128xf32> to vector<8x32xf32>
    %329 = vector.extract_strided_slice %327 {offsets = [0, 32], sizes = [8, 32], strides = [1, 1]} : vector<8x128xf32> to vector<8x32xf32>
    %330 = vector.extract_strided_slice %327 {offsets = [0, 96], sizes = [8, 32], strides = [1, 1]} : vector<8x128xf32> to vector<8x32xf32>
    %331 = vector.extract_strided_slice %322 {offsets = [0, 64], sizes = [8, 32], strides = [1, 1]} : vector<8x128xf32> to vector<8x32xf32>
    %332 = math.tanh %331 : vector<8x32xf32>
    %333 = arith.mulf %329, %265 : vector<8x32xf32>
    %334 = arith.mulf %328, %332 : vector<8x32xf32>
    %335 = arith.addf %333, %334 : vector<8x32xf32>
    %336 = math.tanh %335 : vector<8x32xf32>
    %337 = arith.mulf %330, %336 : vector<8x32xf32>
    %c0_94 = arith.constant 0 : index
    %c0_95 = arith.constant 0 : index
    %338 = vector.load %arg5[%c0_94, %c0_95] : memref<32x256xf32, #tpu.memory_space<vmem>>, vector<32x256xf32>
    %cst_96 = arith.constant dense<0.000000e+00> : vector<8x256xf32>
    %339 = tpu.matmul %337, %338, %cst_96 {dimension_numbers = #tpu.dot_dimension_numbers<[1], [0], [0], [1], [0, 0, 1, 1], [], []>} : vector<8x32xf32>, vector<32x256xf32>, vector<8x256xf32> -> vector<8x256xf32>
    %340 = vector.extract_strided_slice %339 {offsets = [0, 0], sizes = [8, 128], strides = [1, 1]} : vector<8x256xf32> to vector<8x128xf32>
    %341 = vector.extract_strided_slice %339 {offsets = [0, 128], sizes = [8, 128], strides = [1, 1]} : vector<8x256xf32> to vector<8x128xf32>
    %c0_97 = arith.constant 0 : index
    %c0_98 = arith.constant 0 : index
    %342 = vector.load %arg6[%c0_97, %c0_98] : memref<1x128xf32, #tpu.memory_space<vmem>>, vector<1x128xf32>
    %343 = vector.broadcast %342 : vector<1x128xf32> to vector<8x128xf32>
    %344 = arith.addf %341, %343 : vector<8x128xf32>
    %345 = arith.addf %274, %293 : vector<8x128xf32>
    %346 = arith.negf %345 : vector<8x128xf32>
    %347 = math.exp %346 : vector<8x128xf32>
    %cst_99 = arith.constant 1.000000e+00 : f32
    %348 = vector.broadcast %cst_99 : f32 to vector<8x128xf32>
    %349 = arith.addf %348, %347 : vector<8x128xf32>
    %350 = arith.divf %348, %349 : vector<8x128xf32>
    %351 = vector.extract_strided_slice %350 {offsets = [0, 0], sizes = [8, 32], strides = [1, 1]} : vector<8x128xf32> to vector<8x32xf32>
    %352 = vector.extract_strided_slice %350 {offsets = [0, 32], sizes = [8, 32], strides = [1, 1]} : vector<8x128xf32> to vector<8x32xf32>
    %353 = vector.extract_strided_slice %350 {offsets = [0, 96], sizes = [8, 32], strides = [1, 1]} : vector<8x128xf32> to vector<8x32xf32>
    %354 = vector.extract_strided_slice %345 {offsets = [0, 64], sizes = [8, 32], strides = [1, 1]} : vector<8x128xf32> to vector<8x32xf32>
    %355 = math.tanh %354 : vector<8x32xf32>
    %356 = arith.mulf %352, %288 : vector<8x32xf32>
    %357 = arith.mulf %351, %355 : vector<8x32xf32>
    %358 = arith.addf %356, %357 : vector<8x32xf32>
    %359 = math.tanh %358 : vector<8x32xf32>
    %360 = arith.mulf %353, %359 : vector<8x32xf32>
    %c0_100 = arith.constant 0 : index
    %c0_101 = arith.constant 0 : index
    %361 = vector.load %arg7[%c0_100, %c0_101] : memref<32x256xf32, #tpu.memory_space<vmem>>, vector<32x256xf32>
    %cst_102 = arith.constant dense<0.000000e+00> : vector<8x256xf32>
    %362 = tpu.matmul %360, %361, %cst_102 {dimension_numbers = #tpu.dot_dimension_numbers<[1], [0], [0], [1], [0, 0, 1, 1], [], []>} : vector<8x32xf32>, vector<32x256xf32>, vector<8x256xf32> -> vector<8x256xf32>
    %363 = vector.extract_strided_slice %362 {offsets = [0, 0], sizes = [8, 128], strides = [1, 1]} : vector<8x256xf32> to vector<8x128xf32>
    %364 = vector.extract_strided_slice %362 {offsets = [0, 128], sizes = [8, 128], strides = [1, 1]} : vector<8x256xf32> to vector<8x128xf32>
    %c0_103 = arith.constant 0 : index
    %c0_104 = arith.constant 0 : index
    %365 = vector.load %arg8[%c0_103, %c0_104] : memref<1x128xf32, #tpu.memory_space<vmem>>, vector<1x128xf32>
    %366 = vector.broadcast %365 : vector<1x128xf32> to vector<8x128xf32>
    %367 = arith.addf %364, %366 : vector<8x128xf32>
    %c24 = arith.constant 24 : index
    %c0_105 = arith.constant 0 : index
    %368 = vector.load %arg9[%c24, %c0_105] : memref<64x128xf32, #tpu.memory_space<vmem>>, vector<8x128xf32>
    tpu.vector_store %arg9[%c24, %c0_105], %367 {strides = array<i32>} : memref<64x128xf32, #tpu.memory_space<vmem>>, vector<8x128xf32>,
    %369 = arith.addf %18, %317 : vector<8x128xf32>
    %370 = arith.negf %369 : vector<8x128xf32>
    %371 = math.exp %370 : vector<8x128xf32>
    %cst_106 = arith.constant 1.000000e+00 : f32
    %372 = vector.broadcast %cst_106 : f32 to vector<8x128xf32>
    %373 = arith.addf %372, %371 : vector<8x128xf32>
    %374 = arith.divf %372, %373 : vector<8x128xf32>
    %375 = vector.extract_strided_slice %374 {offsets = [0, 0], sizes = [8, 32], strides = [1, 1]} : vector<8x128xf32> to vector<8x32xf32>
    %376 = vector.extract_strided_slice %374 {offsets = [0, 32], sizes = [8, 32], strides = [1, 1]} : vector<8x128xf32> to vector<8x32xf32>
    %377 = vector.extract_strided_slice %374 {offsets = [0, 96], sizes = [8, 32], strides = [1, 1]} : vector<8x128xf32> to vector<8x32xf32>
    %378 = vector.extract_strided_slice %369 {offsets = [0, 64], sizes = [8, 32], strides = [1, 1]} : vector<8x128xf32> to vector<8x32xf32>
    %379 = math.tanh %378 : vector<8x32xf32>
    %380 = arith.mulf %376, %312 : vector<8x32xf32>
    %381 = arith.mulf %375, %379 : vector<8x32xf32>
    %382 = arith.addf %380, %381 : vector<8x32xf32>
    %383 = math.tanh %382 : vector<8x32xf32>
    %384 = arith.mulf %377, %383 : vector<8x32xf32>
    %c0_107 = arith.constant 0 : index
    %c0_108 = arith.constant 0 : index
    %385 = vector.load %arg3[%c0_107, %c0_108] : memref<32x256xf32, #tpu.memory_space<vmem>>, vector<32x256xf32>
    %cst_109 = arith.constant dense<0.000000e+00> : vector<8x256xf32>
    %386 = tpu.matmul %384, %385, %cst_109 {dimension_numbers = #tpu.dot_dimension_numbers<[1], [0], [0], [1], [0, 0, 1, 1], [], []>} : vector<8x32xf32>, vector<32x256xf32>, vector<8x256xf32> -> vector<8x256xf32>
    %387 = vector.extract_strided_slice %386 {offsets = [0, 0], sizes = [8, 128], strides = [1, 1]} : vector<8x256xf32> to vector<8x128xf32>
    %388 = vector.extract_strided_slice %386 {offsets = [0, 128], sizes = [8, 128], strides = [1, 1]} : vector<8x256xf32> to vector<8x128xf32>
    %c0_110 = arith.constant 0 : index
    %c0_111 = arith.constant 0 : index
    %389 = vector.load %arg4[%c0_110, %c0_111] : memref<1x128xf32, #tpu.memory_space<vmem>>, vector<1x128xf32>
    %390 = vector.broadcast %389 : vector<1x128xf32> to vector<8x128xf32>
    %391 = arith.addf %388, %390 : vector<8x128xf32>
    %392 = arith.addf %321, %340 : vector<8x128xf32>
    %393 = arith.negf %392 : vector<8x128xf32>
    %394 = math.exp %393 : vector<8x128xf32>
    %cst_112 = arith.constant 1.000000e+00 : f32
    %395 = vector.broadcast %cst_112 : f32 to vector<8x128xf32>
    %396 = arith.addf %395, %394 : vector<8x128xf32>
    %397 = arith.divf %395, %396 : vector<8x128xf32>
    %398 = vector.extract_strided_slice %397 {offsets = [0, 0], sizes = [8, 32], strides = [1, 1]} : vector<8x128xf32> to vector<8x32xf32>
    %399 = vector.extract_strided_slice %397 {offsets = [0, 32], sizes = [8, 32], strides = [1, 1]} : vector<8x128xf32> to vector<8x32xf32>
    %400 = vector.extract_strided_slice %397 {offsets = [0, 96], sizes = [8, 32], strides = [1, 1]} : vector<8x128xf32> to vector<8x32xf32>
    %401 = vector.extract_strided_slice %392 {offsets = [0, 64], sizes = [8, 32], strides = [1, 1]} : vector<8x128xf32> to vector<8x32xf32>
    %402 = math.tanh %401 : vector<8x32xf32>
    %403 = arith.mulf %399, %335 : vector<8x32xf32>
    %404 = arith.mulf %398, %402 : vector<8x32xf32>
    %405 = arith.addf %403, %404 : vector<8x32xf32>
    %406 = math.tanh %405 : vector<8x32xf32>
    %407 = arith.mulf %400, %406 : vector<8x32xf32>
    %c0_113 = arith.constant 0 : index
    %c0_114 = arith.constant 0 : index
    %408 = vector.load %arg5[%c0_113, %c0_114] : memref<32x256xf32, #tpu.memory_space<vmem>>, vector<32x256xf32>
    %cst_115 = arith.constant dense<0.000000e+00> : vector<8x256xf32>
    %409 = tpu.matmul %407, %408, %cst_115 {dimension_numbers = #tpu.dot_dimension_numbers<[1], [0], [0], [1], [0, 0, 1, 1], [], []>} : vector<8x32xf32>, vector<32x256xf32>, vector<8x256xf32> -> vector<8x256xf32>
    %410 = vector.extract_strided_slice %409 {offsets = [0, 0], sizes = [8, 128], strides = [1, 1]} : vector<8x256xf32> to vector<8x128xf32>
    %411 = vector.extract_strided_slice %409 {offsets = [0, 128], sizes = [8, 128], strides = [1, 1]} : vector<8x256xf32> to vector<8x128xf32>
    %c0_116 = arith.constant 0 : index
    %c0_117 = arith.constant 0 : index
    %412 = vector.load %arg6[%c0_116, %c0_117] : memref<1x128xf32, #tpu.memory_space<vmem>>, vector<1x128xf32>
    %413 = vector.broadcast %412 : vector<1x128xf32> to vector<8x128xf32>
    %414 = arith.addf %411, %413 : vector<8x128xf32>
    %415 = arith.addf %344, %363 : vector<8x128xf32>
    %416 = arith.negf %415 : vector<8x128xf32>
    %417 = math.exp %416 : vector<8x128xf32>
    %cst_118 = arith.constant 1.000000e+00 : f32
    %418 = vector.broadcast %cst_118 : f32 to vector<8x128xf32>
    %419 = arith.addf %418, %417 : vector<8x128xf32>
    %420 = arith.divf %418, %419 : vector<8x128xf32>
    %421 = vector.extract_strided_slice %420 {offsets = [0, 0], sizes = [8, 32], strides = [1, 1]} : vector<8x128xf32> to vector<8x32xf32>
    %422 = vector.extract_strided_slice %420 {offsets = [0, 32], sizes = [8, 32], strides = [1, 1]} : vector<8x128xf32> to vector<8x32xf32>
    %423 = vector.extract_strided_slice %420 {offsets = [0, 96], sizes = [8, 32], strides = [1, 1]} : vector<8x128xf32> to vector<8x32xf32>
    %424 = vector.extract_strided_slice %415 {offsets = [0, 64], sizes = [8, 32], strides = [1, 1]} : vector<8x128xf32> to vector<8x32xf32>
    %425 = math.tanh %424 : vector<8x32xf32>
    %426 = arith.mulf %422, %358 : vector<8x32xf32>
    %427 = arith.mulf %421, %425 : vector<8x32xf32>
    %428 = arith.addf %426, %427 : vector<8x32xf32>
    %429 = math.tanh %428 : vector<8x32xf32>
    %430 = arith.mulf %423, %429 : vector<8x32xf32>
    %c0_119 = arith.constant 0 : index
    %c0_120 = arith.constant 0 : index
    %431 = vector.load %arg7[%c0_119, %c0_120] : memref<32x256xf32, #tpu.memory_space<vmem>>, vector<32x256xf32>
    %cst_121 = arith.constant dense<0.000000e+00> : vector<8x256xf32>
    %432 = tpu.matmul %430, %431, %cst_121 {dimension_numbers = #tpu.dot_dimension_numbers<[1], [0], [0], [1], [0, 0, 1, 1], [], []>} : vector<8x32xf32>, vector<32x256xf32>, vector<8x256xf32> -> vector<8x256xf32>
    %433 = vector.extract_strided_slice %432 {offsets = [0, 0], sizes = [8, 128], strides = [1, 1]} : vector<8x256xf32> to vector<8x128xf32>
    %434 = vector.extract_strided_slice %432 {offsets = [0, 128], sizes = [8, 128], strides = [1, 1]} : vector<8x256xf32> to vector<8x128xf32>
    %c0_122 = arith.constant 0 : index
    %c0_123 = arith.constant 0 : index
    %435 = vector.load %arg8[%c0_122, %c0_123] : memref<1x128xf32, #tpu.memory_space<vmem>>, vector<1x128xf32>
    %436 = vector.broadcast %435 : vector<1x128xf32> to vector<8x128xf32>
    %437 = arith.addf %434, %436 : vector<8x128xf32>
    %c32 = arith.constant 32 : index
    %c0_124 = arith.constant 0 : index
    %438 = vector.load %arg9[%c32, %c0_124] : memref<64x128xf32, #tpu.memory_space<vmem>>, vector<8x128xf32>
    tpu.vector_store %arg9[%c32, %c0_124], %437 {strides = array<i32>} : memref<64x128xf32, #tpu.memory_space<vmem>>, vector<8x128xf32>,
    %439 = arith.addf %19, %387 : vector<8x128xf32>
    %440 = arith.negf %439 : vector<8x128xf32>
    %441 = math.exp %440 : vector<8x128xf32>
    %cst_125 = arith.constant 1.000000e+00 : f32
    %442 = vector.broadcast %cst_125 : f32 to vector<8x128xf32>
    %443 = arith.addf %442, %441 : vector<8x128xf32>
    %444 = arith.divf %442, %443 : vector<8x128xf32>
    %445 = vector.extract_strided_slice %444 {offsets = [0, 0], sizes = [8, 32], strides = [1, 1]} : vector<8x128xf32> to vector<8x32xf32>
    %446 = vector.extract_strided_slice %444 {offsets = [0, 32], sizes = [8, 32], strides = [1, 1]} : vector<8x128xf32> to vector<8x32xf32>
    %447 = vector.extract_strided_slice %444 {offsets = [0, 96], sizes = [8, 32], strides = [1, 1]} : vector<8x128xf32> to vector<8x32xf32>
    %448 = vector.extract_strided_slice %439 {offsets = [0, 64], sizes = [8, 32], strides = [1, 1]} : vector<8x128xf32> to vector<8x32xf32>
    %449 = math.tanh %448 : vector<8x32xf32>
    %450 = arith.mulf %446, %382 : vector<8x32xf32>
    %451 = arith.mulf %445, %449 : vector<8x32xf32>
    %452 = arith.addf %450, %451 : vector<8x32xf32>
    %453 = math.tanh %452 : vector<8x32xf32>
    %454 = arith.mulf %447, %453 : vector<8x32xf32>
    %c0_126 = arith.constant 0 : index
    %c0_127 = arith.constant 0 : index
    %455 = vector.load %arg3[%c0_126, %c0_127] : memref<32x256xf32, #tpu.memory_space<vmem>>, vector<32x256xf32>
    %cst_128 = arith.constant dense<0.000000e+00> : vector<8x256xf32>
    %456 = tpu.matmul %454, %455, %cst_128 {dimension_numbers = #tpu.dot_dimension_numbers<[1], [0], [0], [1], [0, 0, 1, 1], [], []>} : vector<8x32xf32>, vector<32x256xf32>, vector<8x256xf32> -> vector<8x256xf32>
    %457 = vector.extract_strided_slice %456 {offsets = [0, 128], sizes = [8, 128], strides = [1, 1]} : vector<8x256xf32> to vector<8x128xf32>
    %c0_129 = arith.constant 0 : index
    %c0_130 = arith.constant 0 : index
    %458 = vector.load %arg4[%c0_129, %c0_130] : memref<1x128xf32, #tpu.memory_space<vmem>>, vector<1x128xf32>
    %459 = vector.broadcast %458 : vector<1x128xf32> to vector<8x128xf32>
    %460 = arith.addf %457, %459 : vector<8x128xf32>
    %461 = arith.addf %391, %410 : vector<8x128xf32>
    %462 = arith.negf %461 : vector<8x128xf32>
    %463 = math.exp %462 : vector<8x128xf32>
    %cst_131 = arith.constant 1.000000e+00 : f32
    %464 = vector.broadcast %cst_131 : f32 to vector<8x128xf32>
    %465 = arith.addf %464, %463 : vector<8x128xf32>
    %466 = arith.divf %464, %465 : vector<8x128xf32>
    %467 = vector.extract_strided_slice %466 {offsets = [0, 0], sizes = [8, 32], strides = [1, 1]} : vector<8x128xf32> to vector<8x32xf32>
    %468 = vector.extract_strided_slice %466 {offsets = [0, 32], sizes = [8, 32], strides = [1, 1]} : vector<8x128xf32> to vector<8x32xf32>
    %469 = vector.extract_strided_slice %466 {offsets = [0, 96], sizes = [8, 32], strides = [1, 1]} : vector<8x128xf32> to vector<8x32xf32>
    %470 = vector.extract_strided_slice %461 {offsets = [0, 64], sizes = [8, 32], strides = [1, 1]} : vector<8x128xf32> to vector<8x32xf32>
    %471 = math.tanh %470 : vector<8x32xf32>
    %472 = arith.mulf %468, %405 : vector<8x32xf32>
    %473 = arith.mulf %467, %471 : vector<8x32xf32>
    %474 = arith.addf %472, %473 : vector<8x32xf32>
    %475 = math.tanh %474 : vector<8x32xf32>
    %476 = arith.mulf %469, %475 : vector<8x32xf32>
    %c0_132 = arith.constant 0 : index
    %c0_133 = arith.constant 0 : index
    %477 = vector.load %arg5[%c0_132, %c0_133] : memref<32x256xf32, #tpu.memory_space<vmem>>, vector<32x256xf32>
    %cst_134 = arith.constant dense<0.000000e+00> : vector<8x256xf32>
    %478 = tpu.matmul %476, %477, %cst_134 {dimension_numbers = #tpu.dot_dimension_numbers<[1], [0], [0], [1], [0, 0, 1, 1], [], []>} : vector<8x32xf32>, vector<32x256xf32>, vector<8x256xf32> -> vector<8x256xf32>
    %479 = vector.extract_strided_slice %478 {offsets = [0, 0], sizes = [8, 128], strides = [1, 1]} : vector<8x256xf32> to vector<8x128xf32>
    %480 = vector.extract_strided_slice %478 {offsets = [0, 128], sizes = [8, 128], strides = [1, 1]} : vector<8x256xf32> to vector<8x128xf32>
    %c0_135 = arith.constant 0 : index
    %c0_136 = arith.constant 0 : index
    %481 = vector.load %arg6[%c0_135, %c0_136] : memref<1x128xf32, #tpu.memory_space<vmem>>, vector<1x128xf32>
    %482 = vector.broadcast %481 : vector<1x128xf32> to vector<8x128xf32>
    %483 = arith.addf %480, %482 : vector<8x128xf32>
    %484 = arith.addf %414, %433 : vector<8x128xf32>
    %485 = arith.negf %484 : vector<8x128xf32>
    %486 = math.exp %485 : vector<8x128xf32>
    %cst_137 = arith.constant 1.000000e+00 : f32
    %487 = vector.broadcast %cst_137 : f32 to vector<8x128xf32>
    %488 = arith.addf %487, %486 : vector<8x128xf32>
    %489 = arith.divf %487, %488 : vector<8x128xf32>
    %490 = vector.extract_strided_slice %489 {offsets = [0, 0], sizes = [8, 32], strides = [1, 1]} : vector<8x128xf32> to vector<8x32xf32>
    %491 = vector.extract_strided_slice %489 {offsets = [0, 32], sizes = [8, 32], strides = [1, 1]} : vector<8x128xf32> to vector<8x32xf32>
    %492 = vector.extract_strided_slice %489 {offsets = [0, 96], sizes = [8, 32], strides = [1, 1]} : vector<8x128xf32> to vector<8x32xf32>
    %493 = vector.extract_strided_slice %484 {offsets = [0, 64], sizes = [8, 32], strides = [1, 1]} : vector<8x128xf32> to vector<8x32xf32>
    %494 = math.tanh %493 : vector<8x32xf32>
    %495 = arith.mulf %491, %428 : vector<8x32xf32>
    %496 = arith.mulf %490, %494 : vector<8x32xf32>
    %497 = arith.addf %495, %496 : vector<8x32xf32>
    %498 = math.tanh %497 : vector<8x32xf32>
    %499 = arith.mulf %492, %498 : vector<8x32xf32>
    %c0_138 = arith.constant 0 : index
    %c0_139 = arith.constant 0 : index
    %500 = vector.load %arg7[%c0_138, %c0_139] : memref<32x256xf32, #tpu.memory_space<vmem>>, vector<32x256xf32>
    %cst_140 = arith.constant dense<0.000000e+00> : vector<8x256xf32>
    %501 = tpu.matmul %499, %500, %cst_140 {dimension_numbers = #tpu.dot_dimension_numbers<[1], [0], [0], [1], [0, 0, 1, 1], [], []>} : vector<8x32xf32>, vector<32x256xf32>, vector<8x256xf32> -> vector<8x256xf32>
    %502 = vector.extract_strided_slice %501 {offsets = [0, 0], sizes = [8, 128], strides = [1, 1]} : vector<8x256xf32> to vector<8x128xf32>
    %503 = vector.extract_strided_slice %501 {offsets = [0, 128], sizes = [8, 128], strides = [1, 1]} : vector<8x256xf32> to vector<8x128xf32>
    %c0_141 = arith.constant 0 : index
    %c0_142 = arith.constant 0 : index
    %504 = vector.load %arg8[%c0_141, %c0_142] : memref<1x128xf32, #tpu.memory_space<vmem>>, vector<1x128xf32>
    %505 = vector.broadcast %504 : vector<1x128xf32> to vector<8x128xf32>
    %506 = arith.addf %503, %505 : vector<8x128xf32>
    %c40 = arith.constant 40 : index
    %c0_143 = arith.constant 0 : index
    %507 = vector.load %arg9[%c40, %c0_143] : memref<64x128xf32, #tpu.memory_space<vmem>>, vector<8x128xf32>
    tpu.vector_store %arg9[%c40, %c0_143], %506 {strides = array<i32>} : memref<64x128xf32, #tpu.memory_space<vmem>>, vector<8x128xf32>,
    %508 = arith.addf %460, %479 : vector<8x128xf32>
    %509 = arith.negf %508 : vector<8x128xf32>
    %510 = math.exp %509 : vector<8x128xf32>
    %cst_144 = arith.constant 1.000000e+00 : f32
    %511 = vector.broadcast %cst_144 : f32 to vector<8x128xf32>
    %512 = arith.addf %511, %510 : vector<8x128xf32>
    %513 = arith.divf %511, %512 : vector<8x128xf32>
    %514 = vector.extract_strided_slice %513 {offsets = [0, 0], sizes = [8, 32], strides = [1, 1]} : vector<8x128xf32> to vector<8x32xf32>
    %515 = vector.extract_strided_slice %513 {offsets = [0, 32], sizes = [8, 32], strides = [1, 1]} : vector<8x128xf32> to vector<8x32xf32>
    %516 = vector.extract_strided_slice %513 {offsets = [0, 96], sizes = [8, 32], strides = [1, 1]} : vector<8x128xf32> to vector<8x32xf32>
    %517 = vector.extract_strided_slice %508 {offsets = [0, 64], sizes = [8, 32], strides = [1, 1]} : vector<8x128xf32> to vector<8x32xf32>
    %518 = math.tanh %517 : vector<8x32xf32>
    %519 = arith.mulf %515, %474 : vector<8x32xf32>
    %520 = arith.mulf %514, %518 : vector<8x32xf32>
    %521 = arith.addf %519, %520 : vector<8x32xf32>
    %522 = math.tanh %521 : vector<8x32xf32>
    %523 = arith.mulf %516, %522 : vector<8x32xf32>
    %c0_145 = arith.constant 0 : index
    %c0_146 = arith.constant 0 : index
    %524 = vector.load %arg5[%c0_145, %c0_146] : memref<32x256xf32, #tpu.memory_space<vmem>>, vector<32x256xf32>
    %cst_147 = arith.constant dense<0.000000e+00> : vector<8x256xf32>
    %525 = tpu.matmul %523, %524, %cst_147 {dimension_numbers = #tpu.dot_dimension_numbers<[1], [0], [0], [1], [0, 0, 1, 1], [], []>} : vector<8x32xf32>, vector<32x256xf32>, vector<8x256xf32> -> vector<8x256xf32>
    %526 = vector.extract_strided_slice %525 {offsets = [0, 128], sizes = [8, 128], strides = [1, 1]} : vector<8x256xf32> to vector<8x128xf32>
    %c0_148 = arith.constant 0 : index
    %c0_149 = arith.constant 0 : index
    %527 = vector.load %arg6[%c0_148, %c0_149] : memref<1x128xf32, #tpu.memory_space<vmem>>, vector<1x128xf32>
    %528 = vector.broadcast %527 : vector<1x128xf32> to vector<8x128xf32>
    %529 = arith.addf %526, %528 : vector<8x128xf32>
    %530 = arith.addf %483, %502 : vector<8x128xf32>
    %531 = arith.negf %530 : vector<8x128xf32>
    %532 = math.exp %531 : vector<8x128xf32>
    %cst_150 = arith.constant 1.000000e+00 : f32
    %533 = vector.broadcast %cst_150 : f32 to vector<8x128xf32>
    %534 = arith.addf %533, %532 : vector<8x128xf32>
    %535 = arith.divf %533, %534 : vector<8x128xf32>
    %536 = vector.extract_strided_slice %535 {offsets = [0, 0], sizes = [8, 32], strides = [1, 1]} : vector<8x128xf32> to vector<8x32xf32>
    %537 = vector.extract_strided_slice %535 {offsets = [0, 32], sizes = [8, 32], strides = [1, 1]} : vector<8x128xf32> to vector<8x32xf32>
    %538 = vector.extract_strided_slice %535 {offsets = [0, 96], sizes = [8, 32], strides = [1, 1]} : vector<8x128xf32> to vector<8x32xf32>
    %539 = vector.extract_strided_slice %530 {offsets = [0, 64], sizes = [8, 32], strides = [1, 1]} : vector<8x128xf32> to vector<8x32xf32>
    %540 = math.tanh %539 : vector<8x32xf32>
    %541 = arith.mulf %537, %497 : vector<8x32xf32>
    %542 = arith.mulf %536, %540 : vector<8x32xf32>
    %543 = arith.addf %541, %542 : vector<8x32xf32>
    %544 = math.tanh %543 : vector<8x32xf32>
    %545 = arith.mulf %538, %544 : vector<8x32xf32>
    %c0_151 = arith.constant 0 : index
    %c0_152 = arith.constant 0 : index
    %546 = vector.load %arg7[%c0_151, %c0_152] : memref<32x256xf32, #tpu.memory_space<vmem>>, vector<32x256xf32>
    %cst_153 = arith.constant dense<0.000000e+00> : vector<8x256xf32>
    %547 = tpu.matmul %545, %546, %cst_153 {dimension_numbers = #tpu.dot_dimension_numbers<[1], [0], [0], [1], [0, 0, 1, 1], [], []>} : vector<8x32xf32>, vector<32x256xf32>, vector<8x256xf32> -> vector<8x256xf32>
    %548 = vector.extract_strided_slice %547 {offsets = [0, 0], sizes = [8, 128], strides = [1, 1]} : vector<8x256xf32> to vector<8x128xf32>
    %549 = vector.extract_strided_slice %547 {offsets = [0, 128], sizes = [8, 128], strides = [1, 1]} : vector<8x256xf32> to vector<8x128xf32>
    %c0_154 = arith.constant 0 : index
    %c0_155 = arith.constant 0 : index
    %550 = vector.load %arg8[%c0_154, %c0_155] : memref<1x128xf32, #tpu.memory_space<vmem>>, vector<1x128xf32>
    %551 = vector.broadcast %550 : vector<1x128xf32> to vector<8x128xf32>
    %552 = arith.addf %549, %551 : vector<8x128xf32>
    %c48 = arith.constant 48 : index
    %c0_156 = arith.constant 0 : index
    %553 = vector.load %arg9[%c48, %c0_156] : memref<64x128xf32, #tpu.memory_space<vmem>>, vector<8x128xf32>
    tpu.vector_store %arg9[%c48, %c0_156], %552 {strides = array<i32>} : memref<64x128xf32, #tpu.memory_space<vmem>>, vector<8x128xf32>,
    %554 = arith.addf %529, %548 : vector<8x128xf32>
    %555 = arith.negf %554 : vector<8x128xf32>
    %556 = math.exp %555 : vector<8x128xf32>
    %cst_157 = arith.constant 1.000000e+00 : f32
    %557 = vector.broadcast %cst_157 : f32 to vector<8x128xf32>
    %558 = arith.addf %557, %556 : vector<8x128xf32>
    %559 = arith.divf %557, %558 : vector<8x128xf32>
    %560 = vector.extract_strided_slice %559 {offsets = [0, 0], sizes = [8, 32], strides = [1, 1]} : vector<8x128xf32> to vector<8x32xf32>
    %561 = vector.extract_strided_slice %559 {offsets = [0, 32], sizes = [8, 32], strides = [1, 1]} : vector<8x128xf32> to vector<8x32xf32>
    %562 = vector.extract_strided_slice %559 {offsets = [0, 96], sizes = [8, 32], strides = [1, 1]} : vector<8x128xf32> to vector<8x32xf32>
    %563 = vector.extract_strided_slice %554 {offsets = [0, 64], sizes = [8, 32], strides = [1, 1]} : vector<8x128xf32> to vector<8x32xf32>
    %564 = math.tanh %563 : vector<8x32xf32>
    %565 = arith.mulf %561, %543 : vector<8x32xf32>
    %566 = arith.mulf %560, %564 : vector<8x32xf32>
    %567 = arith.addf %565, %566 : vector<8x32xf32>
    %568 = math.tanh %567 : vector<8x32xf32>
    %569 = arith.mulf %562, %568 : vector<8x32xf32>
    %c0_158 = arith.constant 0 : index
    %c0_159 = arith.constant 0 : index
    %570 = vector.load %arg7[%c0_158, %c0_159] : memref<32x256xf32, #tpu.memory_space<vmem>>, vector<32x256xf32>
    %cst_160 = arith.constant dense<0.000000e+00> : vector<8x256xf32>
    %571 = tpu.matmul %569, %570, %cst_160 {dimension_numbers = #tpu.dot_dimension_numbers<[1], [0], [0], [1], [0, 0, 1, 1], [], []>} : vector<8x32xf32>, vector<32x256xf32>, vector<8x256xf32> -> vector<8x256xf32>
    %572 = vector.extract_strided_slice %571 {offsets = [0, 128], sizes = [8, 128], strides = [1, 1]} : vector<8x256xf32> to vector<8x128xf32>
    %c0_161 = arith.constant 0 : index
    %c0_162 = arith.constant 0 : index
    %573 = vector.load %arg8[%c0_161, %c0_162] : memref<1x128xf32, #tpu.memory_space<vmem>>, vector<1x128xf32>
    %574 = vector.broadcast %573 : vector<1x128xf32> to vector<8x128xf32>
    %575 = arith.addf %572, %574 : vector<8x128xf32>
    %c56 = arith.constant 56 : index
    %c0_163 = arith.constant 0 : index
    %576 = vector.load %arg9[%c56, %c0_163] : memref<64x128xf32, #tpu.memory_space<vmem>>, vector<8x128xf32>
    tpu.vector_store %arg9[%c56, %c0_163], %575 {strides = array<i32>} : memref<64x128xf32, #tpu.memory_space<vmem>>, vector<8x128xf32>,
    return
  }
}

</mosaic_0001>

<llo_original>
// kernel: lstm_forward.1
$region0: #{lstm_forward.1}
  #allocation0 [shape = 'u32[]', space=smem, size = 0x4, offset = 0x4, fixed_abs, tag = 'smem constant byte address 0x4 - core index']
  #allocation1 [shape = 'u32[144,128]{1,0:T(1,128)}', space=vmem, size = 0x12000, scoped, tag = 'internal scratch']
  %s0 = inlined_call_operand.vmem [shape: f32[64,4], index: 0, kind: input, shape index: {}]
  %s1 = inlined_call_operand.vmem [shape: f32[4,128], index: 1, kind: input, shape index: {}]
  %s2 = inlined_call_operand.vmem [shape: f32[1,128], index: 2, kind: input, shape index: {}]
  %s3 = inlined_call_operand.vmem [shape: f32[32,256], index: 3, kind: input, shape index: {}]
  %s4 = inlined_call_operand.vmem [shape: f32[1,128], index: 4, kind: input, shape index: {}]
  %s5 = inlined_call_operand.vmem [shape: f32[32,256], index: 5, kind: input, shape index: {}]
  %s6 = inlined_call_operand.vmem [shape: f32[1,128], index: 6, kind: input, shape index: {}]
  %s7 = inlined_call_operand.vmem [shape: f32[32,256], index: 7, kind: input, shape index: {}]
  %s8 = inlined_call_operand.vmem [shape: f32[1,128], index: 8, kind: input, shape index: {}]
  %s9 = inlined_call_operand.vmem [shape: f32[64,128], index: 9, kind: output, shape index: {}]
  %s10 = sld [smem:[#allocation0]]
  $region46: #{lstm_forward.1} parent=0
    _
  %s12 = ssub.s32 1, %s10
  %s13 = scalar_select 0, %s12, %s10
  // Predicated region
  $region2: #{lstm_forward.1} parent=0 // pred_check
    _
  $region3: #{lstm_forward.1} parent=0 // pred_check_branch
    %15 = sbr.rel (0) target = $region5
  $region4: #{lstm_forward.1} parent=0 // pred_region
    _
  $region5: #{lstm_forward.1} parent=0 // pred_fallthru
    _
  // Predicated region
  $region6: #{lstm_forward.1} parent=0 // pred_check
    _
  $region7: #{lstm_forward.1} parent=0 // pred_check_branch
    %17 = sbr.rel (0) target = $region9
  $region8: #{lstm_forward.1} parent=0 // pred_region
    _
  $region9: #{lstm_forward.1} parent=0 // pred_fallthru
    _
  // Predicated region
  $region10: #{lstm_forward.1} parent=0 // pred_check
    _
  $region11: #{lstm_forward.1} parent=0 // pred_check_branch
    %19 = sbr.rel (0) target = $region13
  $region12: #{lstm_forward.1} parent=0 // pred_region
    _
  $region13: #{lstm_forward.1} parent=0 // pred_fallthru
    _
  // Predicated region
  $region14: #{lstm_forward.1} parent=0 // pred_check
    _
  $region15: #{lstm_forward.1} parent=0 // pred_check_branch
    %21 = sbr.rel (0) target = $region17
  $region16: #{lstm_forward.1} parent=0 // pred_region
    _
  $region17: #{lstm_forward.1} parent=0 // pred_fallthru
    _
  // Predicated region
  $region18: #{lstm_forward.1} parent=0 // pred_check
    _
  $region19: #{lstm_forward.1} parent=0 // pred_check_branch
    %23 = sbr.rel (0) target = $region21
  $region20: #{lstm_forward.1} parent=0 // pred_region
    _
  $region21: #{lstm_forward.1} parent=0 // pred_fallthru
    _
  // Predicated region
  $region22: #{lstm_forward.1} parent=0 // pred_check
    _
  $region23: #{lstm_forward.1} parent=0 // pred_check_branch
    %25 = sbr.rel (0) target = $region25
  $region24: #{lstm_forward.1} parent=0 // pred_region
    _
  $region25: #{lstm_forward.1} parent=0 // pred_fallthru
    _
  // Predicated region
  $region26: #{lstm_forward.1} parent=0 // pred_check
    _
  $region27: #{lstm_forward.1} parent=0 // pred_check_branch
    %27 = sbr.rel (0) target = $region29
  $region28: #{lstm_forward.1} parent=0 // pred_region
    _
  $region29: #{lstm_forward.1} parent=0 // pred_fallthru
    _
  // Predicated region
  $region30: #{lstm_forward.1} parent=0 // pred_check
    _
  $region31: #{lstm_forward.1} parent=0 // pred_check_branch
    %29 = sbr.rel (0) target = $region33
  $region32: #{lstm_forward.1} parent=0 // pred_region
    _
  $region33: #{lstm_forward.1} parent=0 // pred_fallthru
    _
  // Predicated region
  $region34: #{lstm_forward.1} parent=0 // pred_check
    _
  $region35: #{lstm_forward.1} parent=0 // pred_check_branch
    %31 = sbr.rel (0) target = $region37
  $region36: #{lstm_forward.1} parent=0 // pred_region
    _
  $region37: #{lstm_forward.1} parent=0 // pred_fallthru
    _
  %v32 = vld [vmem:[%s0] sm:$0xff]
  %v33 = vld [vmem:[%s0 + $0x8] sm:$0xff]
  %v34 = vld [vmem:[%s0 + $0x10] sm:$0xff]
  %v35 = vld [vmem:[%s0 + $0x18] sm:$0xff]
  %v36 = vld [vmem:[%s0 + $0x20] sm:$0xff]
  %v37 = vld [vmem:[%s0 + $0x28] sm:$0xff]
  %v38 = vld [vmem:[%s0 + $0x30] sm:$0xff]
  %v39 = vld [vmem:[%s0 + $0x38] sm:$0xff]
  %v40 = vld [vmem:[%s1] sm:$0xf]
  %v41 = vld [vmem:[%s2] sm:$0x1]
  %v43 = vlaneseq
  %v44 = vshrl.u32 %v43, 7
  %v45 = vsub.s32 0, %v44
  %v46 = vrot.slane %v41, %v45
  %vm48 = vcmask 31744
  %v50 = vsel %vm48, %v32, 0
  %v53 = vsel %vm48, %v33, 0
  %v56 = vsel %vm48, %v34, 0
  %v59 = vsel %vm48, %v35, 0
  %v62 = vsel %vm48, %v36, 0
  %v65 = vsel %vm48, %v37, 0
  %v68 = vsel %vm48, %v38, 0
  %v71 = vsel %vm48, %v39, 0
  %vm73 = vcmask 1043456
  %v75 = vsel %vm73, %v40, 0
  %77 = vmatprep.subr.mxu0 0.0
  %78 = vmatpush1.msra.mxu0 %v75
  %79 = vmatprep.subr.mxu0 0.0
  %80 = vmatpush1.msra.mxu0 0.0
  %81 = vmatprep.subr.mxu0 0.0
  %82 = vmatpush1.msra.mxu0 0.0
  %83 = vmatprep.subr.mxu0 0.0
  %84 = vmatpush1.msra.mxu0 0.0
  %85 = vmatprep.subr.mxu0 0.0
  %86 = vmatpush1.msra.mxu0 0.0
  %87 = vmatprep.subr.mxu0 0.0
  %88 = vmatpush1.msra.mxu0 0.0
  %89 = vmatprep.subr.mxu0 0.0
  %90 = vmatpush1.msra.mxu0 0.0
  %91 = vmatprep.subr.mxu0 0.0
  %92 = vmatpush1.msra.mxu0 0.0
  %93 = vmatprep.subr.mxu0 0.0
  %94 = vmatpush1.msra.mxu0 0.0
  %95 = vmatprep.subr.mxu0 0.0
  %96 = vmatpush1.msra.mxu0 0.0
  %97 = vmatprep.subr.mxu0 0.0
  %98 = vmatpush1.msra.mxu0 0.0
  %99 = vmatprep.subr.mxu0 0.0
  %100 = vmatpush1.msra.mxu0 0.0
  %101 = vmatprep.subr.mxu0 0.0
  %102 = vmatpush1.msra.mxu0 0.0
  %103 = vmatprep.subr.mxu0 0.0
  %104 = vmatpush1.msra.mxu0 0.0
  %105 = vmatprep.subr.mxu0 0.0
  %106 = vmatpush1.msra.mxu0 0.0
  %107 = vmatprep.subr.mxu0 0.0
  %108 = vmatpush1.msra.mxu0 0.0
  %109 = vmatprep.subr.mxu0 0.0
  %110 = vmatpush1.msra.mxu0 0.0
  %111 = vmatprep.subr.mxu0 0.0
  %112 = vmatpush1.msra.mxu0 0.0
  %113 = vmatprep.subr.mxu0 0.0
  %114 = vmatpush1.msra.mxu0 0.0
  %115 = vmatprep.subr.mxu0 0.0
  %116 = vmatpush1.msra.mxu0 0.0
  %117 = vmatprep.subr.mxu0 0.0
  %118 = vmatpush1.msra.mxu0 0.0
  %119 = vmatprep.subr.mxu0 0.0
  %120 = vmatpush1.msra.mxu0 0.0
  %121 = vmatprep.subr.mxu0 0.0
  %122 = vmatpush1.msra.mxu0 0.0
  %123 = vmatprep.subr.mxu0 0.0
  %124 = vmatpush1.msra.mxu0 0.0
  %125 = vmatprep.subr.mxu0 0.0
  %126 = vmatpush1.msra.mxu0 0.0
  %127 = vmatprep.subr.mxu0 0.0
  %128 = vmatpush1.msra.mxu0 0.0
  %129 = vmatprep.subr.mxu0 0.0
  %130 = vmatpush1.msra.mxu0 0.0
  %131 = vmatprep.subr.mxu0 0.0
  %132 = vmatpush1.msra.mxu0 0.0
  %133 = vmatprep.subr.mxu0 0.0
  %134 = vmatpush1.msra.mxu0 0.0
  %135 = vmatprep.subr.mxu0 0.0
  %136 = vmatpush1.msra.mxu0 0.0
  %137 = vmatprep.subr.mxu0 0.0
  %138 = vmatpush1.msra.mxu0 0.0
  %139 = vmatprep.subr.mxu0 0.0
  %140 = vmatpush1.msra.mxu0 0.0
  %141 = vmatprep.mubr.f32.mxu0 0.0
  %142 = vmatmul.mubr.f32.gmra.mrb[0].mxu0 %v50
  %v143 = vpop.f32.mrb[0].mxu0
  %v144 = vadd.f32 %v46, %v143
  %v145 = vpop.f32.mrb[0].mxu0
  %146 = vmatprep.mubr.f32.mxu0 0.0
  %147 = vmatmul.mubr.f32.gmra.mrb[0].mxu0 %v53
  %v148 = vpop.f32.mrb[0].mxu0
  %v149 = vadd.f32 %v46, %v148
  %v150 = vpop.f32.mrb[0].mxu0
  %151 = vmatprep.mubr.f32.mxu0 0.0
  %152 = vmatmul.mubr.f32.gmra.mrb[0].mxu0 %v56
  %v153 = vpop.f32.mrb[0].mxu0
  %v154 = vadd.f32 %v46, %v153
  %v155 = vpop.f32.mrb[0].mxu0
  %156 = vmatprep.mubr.f32.mxu0 0.0
  %157 = vmatmul.mubr.f32.gmra.mrb[0].mxu0 %v59
  %v158 = vpop.f32.mrb[0].mxu0
  %v159 = vadd.f32 %v46, %v158
  %v160 = vpop.f32.mrb[0].mxu0
  %161 = vmatprep.mubr.f32.mxu0 0.0
  %162 = vmatmul.mubr.f32.gmra.mrb[0].mxu0 %v62
  %v163 = vpop.f32.mrb[0].mxu0
  %v164 = vadd.f32 %v46, %v163
  %v165 = vpop.f32.mrb[0].mxu0
  %166 = vmatprep.mubr.f32.mxu0 0.0
  %167 = vmatmul.mubr.f32.gmra.mrb[0].mxu0 %v65
  %v168 = vpop.f32.mrb[0].mxu0
  %v169 = vadd.f32 %v46, %v168
  %v170 = vpop.f32.mrb[0].mxu0
  %171 = vmatprep.mubr.f32.mxu0 0.0
  %172 = vmatmul.mubr.f32.gmra.mrb[0].mxu0 %v68
  %v173 = vpop.f32.mrb[0].mxu0
  %v174 = vadd.f32 %v46, %v173
  %v175 = vpop.f32.mrb[0].mxu0
  %176 = vmatprep.mubr.f32.mxu0 0.0
  %177 = vmatmul.mubr.f32.gmra.mrb[0].mxu0 %v71
  %v178 = vpop.f32.mrb[0].mxu0
  %v179 = vadd.f32 %v46, %v178
  %v180 = vpop.f32.mrb[0].mxu0
  %181 = vdwg.mxu0
  %v182 = vadd.f32 %v144, 0.0
  %v183 = vxor.u32 %v182, 2147483648
  %v184 = vmul.f32 %v183, 1.442695
  %v185 = vpow.pop %v184
  %v186 = vadd.f32 %v185, 1.0
  %v187 = vrcp.pop %v186
  %v188 = vmul.f32 1.0, %v187
  %v189 = vtanh.pop %v182
  %v190 = vmul.f32 %v188, 0.0
  %192 = vrot.lane.b32.xlu0 %v189, 64
  %v193 = vpop.permute.xlu0 %192
  %v195 = vmul.f32 %v188, %v193
  %197 = vrot.lane.b32.xlu0 %v195, 32
  %v198 = vpop.permute.xlu0 %197
  %v200 = vadd.f32 %v190, %v198
  %v201 = vtanh.pop %v200
  %203 = vrot.lane.b32.xlu0 %v201, 64
  %v204 = vpop.permute.xlu0 %203
  %v206 = vmul.f32 %v188, %v204
  %v207 = vld [vmem:[%s3] sm:$0xff]
  %v208 = vld [vmem:[%s3 + $0x8] sm:$0xff]
  %v209 = vld [vmem:[%s3 + $0x10] sm:$0xff]
  %v210 = vld [vmem:[%s3 + $0x18] sm:$0xff]
  %v211 = vld [vmem:[%s3 + $0x20] sm:$0xff]
  %v212 = vld [vmem:[%s3 + $0x28] sm:$0xff]
  %v213 = vld [vmem:[%s3 + $0x30] sm:$0xff]
  %v214 = vld [vmem:[%s3 + $0x38] sm:$0xff]
  %216 = vrot.lane.b32.xlu0 %v206, 32
  %v217 = vpop.permute.xlu0 %216
  %vm218 = vcmask 261120
  %v219 = vsel %vm218, %v217, 0
  %221 = vmatprep.subr.mxu0 %v208
  %222 = vmatpush1.msra.mxu0 %v207
  %223 = vmatprep.subr.mxu0 %v210
  %224 = vmatpush1.msra.mxu0 %v209
  %225 = vmatprep.subr.mxu0 %v212
  %226 = vmatpush1.msra.mxu0 %v211
  %227 = vmatprep.subr.mxu0 %v214
  %228 = vmatpush1.msra.mxu0 %v213
  %229 = vmatprep.subr.mxu0 0.0
  %230 = vmatpush1.msra.mxu0 0.0
  %231 = vmatprep.subr.mxu0 0.0
  %232 = vmatpush1.msra.mxu0 0.0
  %233 = vmatprep.subr.mxu0 0.0
  %234 = vmatpush1.msra.mxu0 0.0
  %235 = vmatprep.subr.mxu0 0.0
  %236 = vmatpush1.msra.mxu0 0.0
  %237 = vmatprep.subr.mxu0 0.0
  %238 = vmatpush1.msra.mxu0 0.0
  %239 = vmatprep.subr.mxu0 0.0
  %240 = vmatpush1.msra.mxu0 0.0
  %241 = vmatprep.subr.mxu0 0.0
  %242 = vmatpush1.msra.mxu0 0.0
  %243 = vmatprep.subr.mxu0 0.0
  %244 = vmatpush1.msra.mxu0 0.0
  %245 = vmatprep.subr.mxu0 0.0
  %246 = vmatpush1.msra.mxu0 0.0
  %247 = vmatprep.subr.mxu0 0.0
  %248 = vmatpush1.msra.mxu0 0.0
  %249 = vmatprep.subr.mxu0 0.0
  %250 = vmatpush1.msra.mxu0 0.0
  %251 = vmatprep.subr.mxu0 0.0
  %252 = vmatpush1.msra.mxu0 0.0
  %253 = vmatprep.subr.mxu0 0.0
  %254 = vmatpush1.msra.mxu0 0.0
  %255 = vmatprep.subr.mxu0 0.0
  %256 = vmatpush1.msra.mxu0 0.0
  %257 = vmatprep.subr.mxu0 0.0
  %258 = vmatpush1.msra.mxu0 0.0
  %259 = vmatprep.subr.mxu0 0.0
  %260 = vmatpush1.msra.mxu0 0.0
  %261 = vmatprep.subr.mxu0 0.0
  %262 = vmatpush1.msra.mxu0 0.0
  %263 = vmatprep.subr.mxu0 0.0
  %264 = vmatpush1.msra.mxu0 0.0
  %265 = vmatprep.subr.mxu0 0.0
  %266 = vmatpush1.msra.mxu0 0.0
  %267 = vmatprep.subr.mxu0 0.0
  %268 = vmatpush1.msra.mxu0 0.0
  %269 = vmatprep.subr.mxu0 0.0
  %270 = vmatpush1.msra.mxu0 0.0
  %271 = vmatprep.subr.mxu0 0.0
  %272 = vmatpush1.msra.mxu0 0.0
  %273 = vmatprep.subr.mxu0 0.0
  %274 = vmatpush1.msra.mxu0 0.0
  %275 = vmatprep.subr.mxu0 0.0
  %276 = vmatpush1.msra.mxu0 0.0
  %277 = vmatprep.subr.mxu0 0.0
  %278 = vmatpush1.msra.mxu0 0.0
  %279 = vmatprep.subr.mxu0 0.0
  %280 = vmatpush1.msra.mxu0 0.0
  %281 = vmatprep.subr.mxu0 0.0
  %282 = vmatpush1.msra.mxu0 0.0
  %283 = vmatprep.subr.mxu0 0.0
  %284 = vmatpush1.msra.mxu0 0.0
  %285 = vmatprep.mubr.f32.mxu0 0.0
  %286 = vmatmul.mubr.f32.gmra.mrb[0].mxu0 %v219
  %v287 = vpop.f32.mrb[0].mxu0
  %v288 = vadd.f32 0.0, %v287
  %v289 = vpop.f32.mrb[0].mxu0
  %v290 = vadd.f32 0.0, %v289
  %291 = vdwg.mxu0
  %v292 = vld [vmem:[%s4] sm:$0x1]
  %v294 = vlaneseq
  %v295 = vshrl.u32 %v294, 7
  %v296 = vsub.s32 0, %v295
  %v297 = vrot.slane %v292, %v296
  %v299 = vadd.f32 %v290, %v297
  %v300 = vadd.f32 %v149, %v288
  %v301 = vxor.u32 %v300, 2147483648
  %v302 = vmul.f32 %v301, 1.442695
  %v303 = vpow.pop %v302
  %v304 = vadd.f32 %v303, 1.0
  %v305 = vrcp.pop %v304
  %v306 = vmul.f32 1.0, %v305
  %v307 = vtanh.pop %v300
  %v308 = vmul.f32 %v306, %v200
  %310 = vrot.lane.b32.xlu0 %v307, 64
  %v311 = vpop.permute.xlu0 %310
  %v313 = vmul.f32 %v306, %v311
  %315 = vrot.lane.b32.xlu0 %v313, 32
  %v316 = vpop.permute.xlu0 %315
  %v318 = vadd.f32 %v308, %v316
  %v319 = vtanh.pop %v318
  %321 = vrot.lane.b32.xlu0 %v319, 64
  %v322 = vpop.permute.xlu0 %321
  %v324 = vmul.f32 %v306, %v322
  %326 = vrot.lane.b32.xlu0 %v324, 32
  %v327 = vpop.permute.xlu0 %326
  %v328 = vsel %vm218, %v327, 0
  %330 = vmatprep.subr.mxu0 %v208
  %331 = vmatpush1.msra.mxu0 %v207
  %332 = vmatprep.subr.mxu0 %v210
  %333 = vmatpush1.msra.mxu0 %v209
  %334 = vmatprep.subr.mxu0 %v212
  %335 = vmatpush1.msra.mxu0 %v211
  %336 = vmatprep.subr.mxu0 %v214
  %337 = vmatpush1.msra.mxu0 %v213
  %338 = vmatprep.subr.mxu0 0.0
  %339 = vmatpush1.msra.mxu0 0.0
  %340 = vmatprep.subr.mxu0 0.0
  %341 = vmatpush1.msra.mxu0 0.0
  %342 = vmatprep.subr.mxu0 0.0
  %343 = vmatpush1.msra.mxu0 0.0
  %344 = vmatprep.subr.mxu0 0.0
  %345 = vmatpush1.msra.mxu0 0.0
  %346 = vmatprep.subr.mxu0 0.0
  %347 = vmatpush1.msra.mxu0 0.0
  %348 = vmatprep.subr.mxu0 0.0
  %349 = vmatpush1.msra.mxu0 0.0
  %350 = vmatprep.subr.mxu0 0.0
  %351 = vmatpush1.msra.mxu0 0.0
  %352 = vmatprep.subr.mxu0 0.0
  %353 = vmatpush1.msra.mxu0 0.0
  %354 = vmatprep.subr.mxu0 0.0
  %355 = vmatpush1.msra.mxu0 0.0
  %356 = vmatprep.subr.mxu0 0.0
  %357 = vmatpush1.msra.mxu0 0.0
  %358 = vmatprep.subr.mxu0 0.0
  %359 = vmatpush1.msra.mxu0 0.0
  %360 = vmatprep.subr.mxu0 0.0
  %361 = vmatpush1.msra.mxu0 0.0
  %362 = vmatprep.subr.mxu0 0.0
  %363 = vmatpush1.msra.mxu0 0.0
  %364 = vmatprep.subr.mxu0 0.0
  %365 = vmatpush1.msra.mxu0 0.0
  %366 = vmatprep.subr.mxu0 0.0
  %367 = vmatpush1.msra.mxu0 0.0
  %368 = vmatprep.subr.mxu0 0.0
  %369 = vmatpush1.msra.mxu0 0.0
  %370 = vmatprep.subr.mxu0 0.0
  %371 = vmatpush1.msra.mxu0 0.0
  %372 = vmatprep.subr.mxu0 0.0
  %373 = vmatpush1.msra.mxu0 0.0
  %374 = vmatprep.subr.mxu0 0.0
  %375 = vmatpush1.msra.mxu0 0.0
  %376 = vmatprep.subr.mxu0 0.0
  %377 = vmatpush1.msra.mxu0 0.0
  %378 = vmatprep.subr.mxu0 0.0
  %379 = vmatpush1.msra.mxu0 0.0
  %380 = vmatprep.subr.mxu0 0.0
  %381 = vmatpush1.msra.mxu0 0.0
  %382 = vmatprep.subr.mxu0 0.0
  %383 = vmatpush1.msra.mxu0 0.0
  %384 = vmatprep.subr.mxu0 0.0
  %385 = vmatpush1.msra.mxu0 0.0
  %386 = vmatprep.subr.mxu0 0.0
  %387 = vmatpush1.msra.mxu0 0.0
  %388 = vmatprep.subr.mxu0 0.0
  %389 = vmatpush1.msra.mxu0 0.0
  %390 = vmatprep.subr.mxu0 0.0
  %391 = vmatpush1.msra.mxu0 0.0
  %392 = vmatprep.subr.mxu0 0.0
  %393 = vmatpush1.msra.mxu0 0.0
  %394 = vmatprep.mubr.f32.mxu0 0.0
  %395 = vmatmul.mubr.f32.gmra.mrb[0].mxu0 %v328
  %v396 = vpop.f32.mrb[0].mxu0
  %v397 = vadd.f32 0.0, %v396
  %v398 = vpop.f32.mrb[0].mxu0
  %v399 = vadd.f32 0.0, %v398
  %400 = vdwg.mxu0
  %v401 = vadd.f32 %v399, %v297
  %v402 = vadd.f32 %v299, 0.0
  %v403 = vxor.u32 %v402, 2147483648
  %v404 = vmul.f32 %v403, 1.442695
  %v405 = vpow.pop %v404
  %v406 = vadd.f32 %v405, 1.0
  %v407 = vrcp.pop %v406
  %v408 = vmul.f32 1.0, %v407
  %v409 = vtanh.pop %v402
  %v410 = vmul.f32 %v408, 0.0
  %412 = vrot.lane.b32.xlu0 %v409, 64
  %v413 = vpop.permute.xlu0 %412
  %v415 = vmul.f32 %v408, %v413
  %417 = vrot.lane.b32.xlu0 %v415, 32
  %v418 = vpop.permute.xlu0 %417
  %v420 = vadd.f32 %v410, %v418
  %v421 = vtanh.pop %v420
  %423 = vrot.lane.b32.xlu0 %v421, 64
  %v424 = vpop.permute.xlu0 %423
  %v426 = vmul.f32 %v408, %v424
  %v427 = vld [vmem:[%s5] sm:$0xff]
  %v428 = vld [vmem:[%s5 + $0x8] sm:$0xff]
  %v429 = vld [vmem:[%s5 + $0x10] sm:$0xff]
  %v430 = vld [vmem:[%s5 + $0x18] sm:$0xff]
  %v431 = vld [vmem:[%s5 + $0x20] sm:$0xff]
  %v432 = vld [vmem:[%s5 + $0x28] sm:$0xff]
  %v433 = vld [vmem:[%s5 + $0x30] sm:$0xff]
  %v434 = vld [vmem:[%s5 + $0x38] sm:$0xff]
  %436 = vrot.lane.b32.xlu0 %v426, 32
  %v437 = vpop.permute.xlu0 %436
  %v438 = vsel %vm218, %v437, 0
  %440 = vmatprep.subr.mxu0 %v428
  %441 = vmatpush1.msra.mxu0 %v427
  %442 = vmatprep.subr.mxu0 %v430
  %443 = vmatpush1.msra.mxu0 %v429
  %444 = vmatprep.subr.mxu0 %v432
  %445 = vmatpush1.msra.mxu0 %v431
  %446 = vmatprep.subr.mxu0 %v434
  %447 = vmatpush1.msra.mxu0 %v433
  %448 = vmatprep.subr.mxu0 0.0
  %449 = vmatpush1.msra.mxu0 0.0
  %450 = vmatprep.subr.mxu0 0.0
  %451 = vmatpush1.msra.mxu0 0.0
  %452 = vmatprep.subr.mxu0 0.0
  %453 = vmatpush1.msra.mxu0 0.0
  %454 = vmatprep.subr.mxu0 0.0
  %455 = vmatpush1.msra.mxu0 0.0
  %456 = vmatprep.subr.mxu0 0.0
  %457 = vmatpush1.msra.mxu0 0.0
  %458 = vmatprep.subr.mxu0 0.0
  %459 = vmatpush1.msra.mxu0 0.0
  %460 = vmatprep.subr.mxu0 0.0
  %461 = vmatpush1.msra.mxu0 0.0
  %462 = vmatprep.subr.mxu0 0.0
  %463 = vmatpush1.msra.mxu0 0.0
  %464 = vmatprep.subr.mxu0 0.0
  %465 = vmatpush1.msra.mxu0 0.0
  %466 = vmatprep.subr.mxu0 0.0
  %467 = vmatpush1.msra.mxu0 0.0
  %468 = vmatprep.subr.mxu0 0.0
  %469 = vmatpush1.msra.mxu0 0.0
  %470 = vmatprep.subr.mxu0 0.0
  %471 = vmatpush1.msra.mxu0 0.0
  %472 = vmatprep.subr.mxu0 0.0
  %473 = vmatpush1.msra.mxu0 0.0
  %474 = vmatprep.subr.mxu0 0.0
  %475 = vmatpush1.msra.mxu0 0.0
  %476 = vmatprep.subr.mxu0 0.0
  %477 = vmatpush1.msra.mxu0 0.0
  %478 = vmatprep.subr.mxu0 0.0
  %479 = vmatpush1.msra.mxu0 0.0
  %480 = vmatprep.subr.mxu0 0.0
  %481 = vmatpush1.msra.mxu0 0.0
  %482 = vmatprep.subr.mxu0 0.0
  %483 = vmatpush1.msra.mxu0 0.0
  %484 = vmatprep.subr.mxu0 0.0
  %485 = vmatpush1.msra.mxu0 0.0
  %486 = vmatprep.subr.mxu0 0.0
  %487 = vmatpush1.msra.mxu0 0.0
  %488 = vmatprep.subr.mxu0 0.0
  %489 = vmatpush1.msra.mxu0 0.0
  %490 = vmatprep.subr.mxu0 0.0
  %491 = vmatpush1.msra.mxu0 0.0
  %492 = vmatprep.subr.mxu0 0.0
  %493 = vmatpush1.msra.mxu0 0.0
  %494 = vmatprep.subr.mxu0 0.0
  %495 = vmatpush1.msra.mxu0 0.0
  %496 = vmatprep.subr.mxu0 0.0
  %497 = vmatpush1.msra.mxu0 0.0
  %498 = vmatprep.subr.mxu0 0.0
  %499 = vmatpush1.msra.mxu0 0.0
  %500 = vmatprep.subr.mxu0 0.0
  %501 = vmatpush1.msra.mxu0 0.0
  %502 = vmatprep.subr.mxu0 0.0
  %503 = vmatpush1.msra.mxu0 0.0
  %504 = vmatprep.mubr.f32.mxu0 0.0
  %505 = vmatmul.mubr.f32.gmra.mrb[0].mxu0 %v438
  %v506 = vpop.f32.mrb[0].mxu0
  %v507 = vadd.f32 0.0, %v506
  %v508 = vpop.f32.mrb[0].mxu0
  %v509 = vadd.f32 0.0, %v508
  %510 = vdwg.mxu0
  %v511 = vld [vmem:[%s6] sm:$0x1]
  %v513 = vlaneseq
  %v514 = vshrl.u32 %v513, 7
  %v515 = vsub.s32 0, %v514
  %v516 = vrot.slane %v511, %v515
  %v518 = vadd.f32 %v509, %v516
  %v519 = vadd.f32 %v154, %v397
  %v520 = vxor.u32 %v519, 2147483648
  %v521 = vmul.f32 %v520, 1.442695
  %v522 = vpow.pop %v521
  %v523 = vadd.f32 %v522, 1.0
  %v524 = vrcp.pop %v523
  %v525 = vmul.f32 1.0, %v524
  %v526 = vtanh.pop %v519
  %v527 = vmul.f32 %v525, %v318
  %529 = vrot.lane.b32.xlu0 %v526, 64
  %v530 = vpop.permute.xlu0 %529
  %v532 = vmul.f32 %v525, %v530
  %534 = vrot.lane.b32.xlu0 %v532, 32
  %v535 = vpop.permute.xlu0 %534
  %v537 = vadd.f32 %v527, %v535
  %v538 = vtanh.pop %v537
  %540 = vrot.lane.b32.xlu0 %v538, 64
  %v541 = vpop.permute.xlu0 %540
  %v543 = vmul.f32 %v525, %v541
  %545 = vrot.lane.b32.xlu0 %v543, 32
  %v546 = vpop.permute.xlu0 %545
  %v547 = vsel %vm218, %v546, 0
  %549 = vmatprep.subr.mxu0 %v208
  %550 = vmatpush1.msra.mxu0 %v207
  %551 = vmatprep.subr.mxu0 %v210
  %552 = vmatpush1.msra.mxu0 %v209
  %553 = vmatprep.subr.mxu0 %v212
  %554 = vmatpush1.msra.mxu0 %v211
  %555 = vmatprep.subr.mxu0 %v214
  %556 = vmatpush1.msra.mxu0 %v213
  %557 = vmatprep.subr.mxu0 0.0
  %558 = vmatpush1.msra.mxu0 0.0
  %559 = vmatprep.subr.mxu0 0.0
  %560 = vmatpush1.msra.mxu0 0.0
  %561 = vmatprep.subr.mxu0 0.0
  %562 = vmatpush1.msra.mxu0 0.0
  %563 = vmatprep.subr.mxu0 0.0
  %564 = vmatpush1.msra.mxu0 0.0
  %565 = vmatprep.subr.mxu0 0.0
  %566 = vmatpush1.msra.mxu0 0.0
  %567 = vmatprep.subr.mxu0 0.0
  %568 = vmatpush1.msra.mxu0 0.0
  %569 = vmatprep.subr.mxu0 0.0
  %570 = vmatpush1.msra.mxu0 0.0
  %571 = vmatprep.subr.mxu0 0.0
  %572 = vmatpush1.msra.mxu0 0.0
  %573 = vmatprep.subr.mxu0 0.0
  %574 = vmatpush1.msra.mxu0 0.0
  %575 = vmatprep.subr.mxu0 0.0
  %576 = vmatpush1.msra.mxu0 0.0
  %577 = vmatprep.subr.mxu0 0.0
  %578 = vmatpush1.msra.mxu0 0.0
  %579 = vmatprep.subr.mxu0 0.0
  %580 = vmatpush1.msra.mxu0 0.0
  %581 = vmatprep.subr.mxu0 0.0
  %582 = vmatpush1.msra.mxu0 0.0
  %583 = vmatprep.subr.mxu0 0.0
  %584 = vmatpush1.msra.mxu0 0.0
  %585 = vmatprep.subr.mxu0 0.0
  %586 = vmatpush1.msra.mxu0 0.0
  %587 = vmatprep.subr.mxu0 0.0
  %588 = vmatpush1.msra.mxu0 0.0
  %589 = vmatprep.subr.mxu0 0.0
  %590 = vmatpush1.msra.mxu0 0.0
  %591 = vmatprep.subr.mxu0 0.0
  %592 = vmatpush1.msra.mxu0 0.0
  %593 = vmatprep.subr.mxu0 0.0
  %594 = vmatpush1.msra.mxu0 0.0
  %595 = vmatprep.subr.mxu0 0.0
  %596 = vmatpush1.msra.mxu0 0.0
  %597 = vmatprep.subr.mxu0 0.0
  %598 = vmatpush1.msra.mxu0 0.0
  %599 = vmatprep.subr.mxu0 0.0
  %600 = vmatpush1.msra.mxu0 0.0
  %601 = vmatprep.subr.mxu0 0.0
  %602 = vmatpush1.msra.mxu0 0.0
  %603 = vmatprep.subr.mxu0 0.0
  %604 = vmatpush1.msra.mxu0 0.0
  %605 = vmatprep.subr.mxu0 0.0
  %606 = vmatpush1.msra.mxu0 0.0
  %607 = vmatprep.subr.mxu0 0.0
  %608 = vmatpush1.msra.mxu0 0.0
  %609 = vmatprep.subr.mxu0 0.0
  %610 = vmatpush1.msra.mxu0 0.0
  %611 = vmatprep.subr.mxu0 0.0
  %612 = vmatpush1.msra.mxu0 0.0
  %613 = vmatprep.mubr.f32.mxu0 0.0
  %614 = vmatmul.mubr.f32.gmra.mrb[0].mxu0 %v547
  %v615 = vpop.f32.mrb[0].mxu0
  %v616 = vadd.f32 0.0, %v615
  %v617 = vpop.f32.mrb[0].mxu0
  %v618 = vadd.f32 0.0, %v617
  %619 = vdwg.mxu0
  %v620 = vadd.f32 %v618, %v297
  %v621 = vadd.f32 %v401, %v507
  %v622 = vxor.u32 %v621, 2147483648
  %v623 = vmul.f32 %v622, 1.442695
  %v624 = vpow.pop %v623
  %v625 = vadd.f32 %v624, 1.0
  %v626 = vrcp.pop %v625
  %v627 = vmul.f32 1.0, %v626
  %v628 = vtanh.pop %v621
  %v629 = vmul.f32 %v627, %v420
  %631 = vrot.lane.b32.xlu0 %v628, 64
  %v632 = vpop.permute.xlu0 %631
  %v634 = vmul.f32 %v627, %v632
  %636 = vrot.lane.b32.xlu0 %v634, 32
  %v637 = vpop.permute.xlu0 %636
  %v639 = vadd.f32 %v629, %v637
  %v640 = vtanh.pop %v639
  %642 = vrot.lane.b32.xlu0 %v640, 64
  %v643 = vpop.permute.xlu0 %642
  %v645 = vmul.f32 %v627, %v643
  %647 = vrot.lane.b32.xlu0 %v645, 32
  %v648 = vpop.permute.xlu0 %647
  %v649 = vsel %vm218, %v648, 0
  %651 = vmatprep.subr.mxu0 %v428
  %652 = vmatpush1.msra.mxu0 %v427
  %653 = vmatprep.subr.mxu0 %v430
  %654 = vmatpush1.msra.mxu0 %v429
  %655 = vmatprep.subr.mxu0 %v432
  %656 = vmatpush1.msra.mxu0 %v431
  %657 = vmatprep.subr.mxu0 %v434
  %658 = vmatpush1.msra.mxu0 %v433
  %659 = vmatprep.subr.mxu0 0.0
  %660 = vmatpush1.msra.mxu0 0.0
  %661 = vmatprep.subr.mxu0 0.0
  %662 = vmatpush1.msra.mxu0 0.0
  %663 = vmatprep.subr.mxu0 0.0
  %664 = vmatpush1.msra.mxu0 0.0
  %665 = vmatprep.subr.mxu0 0.0
  %666 = vmatpush1.msra.mxu0 0.0
  %667 = vmatprep.subr.mxu0 0.0
  %668 = vmatpush1.msra.mxu0 0.0
  %669 = vmatprep.subr.mxu0 0.0
  %670 = vmatpush1.msra.mxu0 0.0
  %671 = vmatprep.subr.mxu0 0.0
  %672 = vmatpush1.msra.mxu0 0.0
  %673 = vmatprep.subr.mxu0 0.0
  %674 = vmatpush1.msra.mxu0 0.0
  %675 = vmatprep.subr.mxu0 0.0
  %676 = vmatpush1.msra.mxu0 0.0
  %677 = vmatprep.subr.mxu0 0.0
  %678 = vmatpush1.msra.mxu0 0.0
  %679 = vmatprep.subr.mxu0 0.0
  %680 = vmatpush1.msra.mxu0 0.0
  %681 = vmatprep.subr.mxu0 0.0
  %682 = vmatpush1.msra.mxu0 0.0
  %683 = vmatprep.subr.mxu0 0.0
  %684 = vmatpush1.msra.mxu0 0.0
  %685 = vmatprep.subr.mxu0 0.0
  %686 = vmatpush1.msra.mxu0 0.0
  %687 = vmatprep.subr.mxu0 0.0
  %688 = vmatpush1.msra.mxu0 0.0
  %689 = vmatprep.subr.mxu0 0.0
  %690 = vmatpush1.msra.mxu0 0.0
  %691 = vmatprep.subr.mxu0 0.0
  %692 = vmatpush1.msra.mxu0 0.0
  %693 = vmatprep.subr.mxu0 0.0
  %694 = vmatpush1.msra.mxu0 0.0
  %695 = vmatprep.subr.mxu0 0.0
  %696 = vmatpush1.msra.mxu0 0.0
  %697 = vmatprep.subr.mxu0 0.0
  %698 = vmatpush1.msra.mxu0 0.0
  %699 = vmatprep.subr.mxu0 0.0
  %700 = vmatpush1.msra.mxu0 0.0
  %701 = vmatprep.subr.mxu0 0.0
  %702 = vmatpush1.msra.mxu0 0.0
  %703 = vmatprep.subr.mxu0 0.0
  %704 = vmatpush1.msra.mxu0 0.0
  %705 = vmatprep.subr.mxu0 0.0
  %706 = vmatpush1.msra.mxu0 0.0
  %707 = vmatprep.subr.mxu0 0.0
  %708 = vmatpush1.msra.mxu0 0.0
  %709 = vmatprep.subr.mxu0 0.0
  %710 = vmatpush1.msra.mxu0 0.0
  %711 = vmatprep.subr.mxu0 0.0
  %712 = vmatpush1.msra.mxu0 0.0
  %713 = vmatprep.subr.mxu0 0.0
  %714 = vmatpush1.msra.mxu0 0.0
  %715 = vmatprep.mubr.f32.mxu0 0.0
  %716 = vmatmul.mubr.f32.gmra.mrb[0].mxu0 %v649
  %v717 = vpop.f32.mrb[0].mxu0
  %v718 = vadd.f32 0.0, %v717
  %v719 = vpop.f32.mrb[0].mxu0
  %v720 = vadd.f32 0.0, %v719
  %721 = vdwg.mxu0
  %v722 = vadd.f32 %v720, %v516
  %v723 = vadd.f32 %v518, 0.0
  %v724 = vxor.u32 %v723, 2147483648
  %v725 = vmul.f32 %v724, 1.442695
  %v726 = vpow.pop %v725
  %v727 = vadd.f32 %v726, 1.0
  %v728 = vrcp.pop %v727
  %v729 = vmul.f32 1.0, %v728
  %v730 = vtanh.pop %v723
  %v731 = vmul.f32 %v729, 0.0
  %733 = vrot.lane.b32.xlu0 %v730, 64
  %v734 = vpop.permute.xlu0 %733
  %v736 = vmul.f32 %v729, %v734
  %738 = vrot.lane.b32.xlu0 %v736, 32
  %v739 = vpop.permute.xlu0 %738
  %v741 = vadd.f32 %v731, %v739
  %v742 = vtanh.pop %v741
  %744 = vrot.lane.b32.xlu0 %v742, 64
  %v745 = vpop.permute.xlu0 %744
  %v747 = vmul.f32 %v729, %v745
  %v748 = vld [vmem:[%s7] sm:$0xff]
  %v749 = vld [vmem:[%s7 + $0x8] sm:$0xff]
  %v750 = vld [vmem:[%s7 + $0x10] sm:$0xff]
  %v751 = vld [vmem:[%s7 + $0x18] sm:$0xff]
  %v752 = vld [vmem:[%s7 + $0x20] sm:$0xff]
  %v753 = vld [vmem:[%s7 + $0x28] sm:$0xff]
  %v754 = vld [vmem:[%s7 + $0x30] sm:$0xff]
  %v755 = vld [vmem:[%s7 + $0x38] sm:$0xff]
  %757 = vrot.lane.b32.xlu0 %v747, 32
  %v758 = vpop.permute.xlu0 %757
  %v759 = vsel %vm218, %v758, 0
  %761 = vmatprep.subr.mxu0 %v749
  %762 = vmatpush1.msra.mxu0 %v748
  %763 = vmatprep.subr.mxu0 %v751
  %764 = vmatpush1.msra.mxu0 %v750
  %765 = vmatprep.subr.mxu0 %v753
  %766 = vmatpush1.msra.mxu0 %v752
  %767 = vmatprep.subr.mxu0 %v755
  %768 = vmatpush1.msra.mxu0 %v754
  %769 = vmatprep.subr.mxu0 0.0
  %770 = vmatpush1.msra.mxu0 0.0
  %771 = vmatprep.subr.mxu0 0.0
  %772 = vmatpush1.msra.mxu0 0.0
  %773 = vmatprep.subr.mxu0 0.0
  %774 = vmatpush1.msra.mxu0 0.0
  %775 = vmatprep.subr.mxu0 0.0
  %776 = vmatpush1.msra.mxu0 0.0
  %777 = vmatprep.subr.mxu0 0.0
  %778 = vmatpush1.msra.mxu0 0.0
  %779 = vmatprep.subr.mxu0 0.0
  %780 = vmatpush1.msra.mxu0 0.0
  %781 = vmatprep.subr.mxu0 0.0
  %782 = vmatpush1.msra.mxu0 0.0
  %783 = vmatprep.subr.mxu0 0.0
  %784 = vmatpush1.msra.mxu0 0.0
  %785 = vmatprep.subr.mxu0 0.0
  %786 = vmatpush1.msra.mxu0 0.0
  %787 = vmatprep.subr.mxu0 0.0
  %788 = vmatpush1.msra.mxu0 0.0
  %789 = vmatprep.subr.mxu0 0.0
  %790 = vmatpush1.msra.mxu0 0.0
  %791 = vmatprep.subr.mxu0 0.0
  %792 = vmatpush1.msra.mxu0 0.0
  %793 = vmatprep.subr.mxu0 0.0
  %794 = vmatpush1.msra.mxu0 0.0
  %795 = vmatprep.subr.mxu0 0.0
  %796 = vmatpush1.msra.mxu0 0.0
  %797 = vmatprep.subr.mxu0 0.0
  %798 = vmatpush1.msra.mxu0 0.0
  %799 = vmatprep.subr.mxu0 0.0
  %800 = vmatpush1.msra.mxu0 0.0
  %801 = vmatprep.subr.mxu0 0.0
  %802 = vmatpush1.msra.mxu0 0.0
  %803 = vmatprep.subr.mxu0 0.0
  %804 = vmatpush1.msra.mxu0 0.0
  %805 = vmatprep.subr.mxu0 0.0
  %806 = vmatpush1.msra.mxu0 0.0
  %807 = vmatprep.subr.mxu0 0.0
  %808 = vmatpush1.msra.mxu0 0.0
  %809 = vmatprep.subr.mxu0 0.0
  %810 = vmatpush1.msra.mxu0 0.0
  %811 = vmatprep.subr.mxu0 0.0
  %812 = vmatpush1.msra.mxu0 0.0
  %813 = vmatprep.subr.mxu0 0.0
  %814 = vmatpush1.msra.mxu0 0.0
  %815 = vmatprep.subr.mxu0 0.0
  %816 = vmatpush1.msra.mxu0 0.0
  %817 = vmatprep.subr.mxu0 0.0
  %818 = vmatpush1.msra.mxu0 0.0
  %819 = vmatprep.subr.mxu0 0.0
  %820 = vmatpush1.msra.mxu0 0.0
  %821 = vmatprep.subr.mxu0 0.0
  %822 = vmatpush1.msra.mxu0 0.0
  %823 = vmatprep.subr.mxu0 0.0
  %824 = vmatpush1.msra.mxu0 0.0
  %825 = vmatprep.mubr.f32.mxu0 0.0
  %826 = vmatmul.mubr.f32.gmra.mrb[0].mxu0 %v759
  %v827 = vpop.f32.mrb[0].mxu0
  %v828 = vadd.f32 0.0, %v827
  %v829 = vpop.f32.mrb[0].mxu0
  %v830 = vadd.f32 0.0, %v829
  %831 = vdwg.mxu0
  %v832 = vld [vmem:[%s8] sm:$0x1]
  %v834 = vlaneseq
  %v835 = vshrl.u32 %v834, 7
  %v836 = vsub.s32 0, %v835
  %v837 = vrot.slane %v832, %v836
  %v839 = vadd.f32 %v830, %v837
  %840 = vst [vmem:[%s9] sm:$0xff] %v839
  %v841 = vadd.f32 %v159, %v616
  %v842 = vxor.u32 %v841, 2147483648
  %v843 = vmul.f32 %v842, 1.442695
  %v844 = vpow.pop %v843
  %v845 = vadd.f32 %v844, 1.0
  %v846 = vrcp.pop %v845
  %v847 = vmul.f32 1.0, %v846
  %v848 = vtanh.pop %v841
  %v849 = vmul.f32 %v847, %v537
  %851 = vrot.lane.b32.xlu0 %v848, 64
  %v852 = vpop.permute.xlu0 %851
  %v854 = vmul.f32 %v847, %v852
  %856 = vrot.lane.b32.xlu0 %v854, 32
  %v857 = vpop.permute.xlu0 %856
  %v859 = vadd.f32 %v849, %v857
  %v860 = vtanh.pop %v859
  %862 = vrot.lane.b32.xlu0 %v860, 64
  %v863 = vpop.permute.xlu0 %862
  %v865 = vmul.f32 %v847, %v863
  %v866 = vld [vmem:[%s3] sm:$0xff]
  %v867 = vld [vmem:[%s3 + $0x8] sm:$0xff]
  %v868 = vld [vmem:[%s3 + $0x10] sm:$0xff]
  %v869 = vld [vmem:[%s3 + $0x18] sm:$0xff]
  %v870 = vld [vmem:[%s3 + $0x20] sm:$0xff]
  %v871 = vld [vmem:[%s3 + $0x28] sm:$0xff]
  %v872 = vld [vmem:[%s3 + $0x30] sm:$0xff]
  %v873 = vld [vmem:[%s3 + $0x38] sm:$0xff]
  %875 = vrot.lane.b32.xlu0 %v865, 32
  %v876 = vpop.permute.xlu0 %875
  %v877 = vsel %vm218, %v876, 0
  %879 = vmatprep.subr.mxu0 %v867
  %880 = vmatpush1.msra.mxu0 %v866
  %881 = vmatprep.subr.mxu0 %v869
  %882 = vmatpush1.msra.mxu0 %v868
  %883 = vmatprep.subr.mxu0 %v871
  %884 = vmatpush1.msra.mxu0 %v870
  %885 = vmatprep.subr.mxu0 %v873
  %886 = vmatpush1.msra.mxu0 %v872
  %887 = vmatprep.subr.mxu0 0.0
  %888 = vmatpush1.msra.mxu0 0.0
  %889 = vmatprep.subr.mxu0 0.0
  %890 = vmatpush1.msra.mxu0 0.0
  %891 = vmatprep.subr.mxu0 0.0
  %892 = vmatpush1.msra.mxu0 0.0
  %893 = vmatprep.subr.mxu0 0.0
  %894 = vmatpush1.msra.mxu0 0.0
  %895 = vmatprep.subr.mxu0 0.0
  %896 = vmatpush1.msra.mxu0 0.0
  %897 = vmatprep.subr.mxu0 0.0
  %898 = vmatpush1.msra.mxu0 0.0
  %899 = vmatprep.subr.mxu0 0.0
  %900 = vmatpush1.msra.mxu0 0.0
  %901 = vmatprep.subr.mxu0 0.0
  %902 = vmatpush1.msra.mxu0 0.0
  %903 = vmatprep.subr.mxu0 0.0
  %904 = vmatpush1.msra.mxu0 0.0
  %905 = vmatprep.subr.mxu0 0.0
  %906 = vmatpush1.msra.mxu0 0.0
  %907 = vmatprep.subr.mxu0 0.0
  %908 = vmatpush1.msra.mxu0 0.0
  %909 = vmatprep.subr.mxu0 0.0
  %910 = vmatpush1.msra.mxu0 0.0
  %911 = vmatprep.subr.mxu0 0.0
  %912 = vmatpush1.msra.mxu0 0.0
  %913 = vmatprep.subr.mxu0 0.0
  %914 = vmatpush1.msra.mxu0 0.0
  %915 = vmatprep.subr.mxu0 0.0
  %916 = vmatpush1.msra.mxu0 0.0
  %917 = vmatprep.subr.mxu0 0.0
  %918 = vmatpush1.msra.mxu0 0.0
  %919 = vmatprep.subr.mxu0 0.0
  %920 = vmatpush1.msra.mxu0 0.0
  %921 = vmatprep.subr.mxu0 0.0
  %922 = vmatpush1.msra.mxu0 0.0
  %923 = vmatprep.subr.mxu0 0.0
  %924 = vmatpush1.msra.mxu0 0.0
  %925 = vmatprep.subr.mxu0 0.0
  %926 = vmatpush1.msra.mxu0 0.0
  %927 = vmatprep.subr.mxu0 0.0
  %928 = vmatpush1.msra.mxu0 0.0
  %929 = vmatprep.subr.mxu0 0.0
  %930 = vmatpush1.msra.mxu0 0.0
  %931 = vmatprep.subr.mxu0 0.0
  %932 = vmatpush1.msra.mxu0 0.0
  %933 = vmatprep.subr.mxu0 0.0
  %934 = vmatpush1.msra.mxu0 0.0
  %935 = vmatprep.subr.mxu0 0.0
  %936 = vmatpush1.msra.mxu0 0.0
  %937 = vmatprep.subr.mxu0 0.0
  %938 = vmatpush1.msra.mxu0 0.0
  %939 = vmatprep.subr.mxu0 0.0
  %940 = vmatpush1.msra.mxu0 0.0
  %941 = vmatprep.subr.mxu0 0.0
  %942 = vmatpush1.msra.mxu0 0.0
  %943 = vmatprep.mubr.f32.mxu0 0.0
  %944 = vmatmul.mubr.f32.gmra.mrb[0].mxu0 %v877
  %v945 = vpop.f32.mrb[0].mxu0
  %v946 = vadd.f32 0.0, %v945
  %v947 = vpop.f32.mrb[0].mxu0
  %v948 = vadd.f32 0.0, %v947
  %949 = vdwg.mxu0
  %v950 = vld [vmem:[%s4] sm:$0x1]
  %v952 = vlaneseq
  %v953 = vshrl.u32 %v952, 7
  %v954 = vsub.s32 0, %v953
  %v955 = vrot.slane %v950, %v954
  %v957 = vadd.f32 %v948, %v955
  %v958 = vadd.f32 %v620, %v718
  %v959 = vxor.u32 %v958, 2147483648
  %v960 = vmul.f32 %v959, 1.442695
  %v961 = vpow.pop %v960
  %v962 = vadd.f32 %v961, 1.0
  %v963 = vrcp.pop %v962
  %v964 = vmul.f32 1.0, %v963
  %v965 = vtanh.pop %v958
  %v966 = vmul.f32 %v964, %v639
  %968 = vrot.lane.b32.xlu0 %v965, 64
  %v969 = vpop.permute.xlu0 %968
  %v971 = vmul.f32 %v964, %v969
  %973 = vrot.lane.b32.xlu0 %v971, 32
  %v974 = vpop.permute.xlu0 %973
  %v976 = vadd.f32 %v966, %v974
  %v977 = vtanh.pop %v976
  %979 = vrot.lane.b32.xlu0 %v977, 64
  %v980 = vpop.permute.xlu0 %979
  %v982 = vmul.f32 %v964, %v980
  %v983 = vld [vmem:[%s5] sm:$0xff]
  %v984 = vld [vmem:[%s5 + $0x8] sm:$0xff]
  %v985 = vld [vmem:[%s5 + $0x10] sm:$0xff]
  %v986 = vld [vmem:[%s5 + $0x18] sm:$0xff]
  %v987 = vld [vmem:[%s5 + $0x20] sm:$0xff]
  %v988 = vld [vmem:[%s5 + $0x28] sm:$0xff]
  %v989 = vld [vmem:[%s5 + $0x30] sm:$0xff]
  %v990 = vld [vmem:[%s5 + $0x38] sm:$0xff]
  %992 = vrot.lane.b32.xlu0 %v982, 32
  %v993 = vpop.permute.xlu0 %992
  %v994 = vsel %vm218, %v993, 0
  %996 = vmatprep.subr.mxu0 %v984
  %997 = vmatpush1.msra.mxu0 %v983
  %998 = vmatprep.subr.mxu0 %v986
  %999 = vmatpush1.msra.mxu0 %v985
  %1000 = vmatprep.subr.mxu0 %v988
  %1001 = vmatpush1.msra.mxu0 %v987
  %1002 = vmatprep.subr.mxu0 %v990
  %1003 = vmatpush1.msra.mxu0 %v989
  %1004 = vmatprep.subr.mxu0 0.0
  %1005 = vmatpush1.msra.mxu0 0.0
  %1006 = vmatprep.subr.mxu0 0.0
  %1007 = vmatpush1.msra.mxu0 0.0
  %1008 = vmatprep.subr.mxu0 0.0
  %1009 = vmatpush1.msra.mxu0 0.0
  %1010 = vmatprep.subr.mxu0 0.0
  %1011 = vmatpush1.msra.mxu0 0.0
  %1012 = vmatprep.subr.mxu0 0.0
  %1013 = vmatpush1.msra.mxu0 0.0
  %1014 = vmatprep.subr.mxu0 0.0
  %1015 = vmatpush1.msra.mxu0 0.0
  %1016 = vmatprep.subr.mxu0 0.0
  %1017 = vmatpush1.msra.mxu0 0.0
  %1018 = vmatprep.subr.mxu0 0.0
  %1019 = vmatpush1.msra.mxu0 0.0
  %1020 = vmatprep.subr.mxu0 0.0
  %1021 = vmatpush1.msra.mxu0 0.0
  %1022 = vmatprep.subr.mxu0 0.0
  %1023 = vmatpush1.msra.mxu0 0.0
  %1024 = vmatprep.subr.mxu0 0.0
  %1025 = vmatpush1.msra.mxu0 0.0
  %1026 = vmatprep.subr.mxu0 0.0
  %1027 = vmatpush1.msra.mxu0 0.0
  %1028 = vmatprep.subr.mxu0 0.0
  %1029 = vmatpush1.msra.mxu0 0.0
  %1030 = vmatprep.subr.mxu0 0.0
  %1031 = vmatpush1.msra.mxu0 0.0
  %1032 = vmatprep.subr.mxu0 0.0
  %1033 = vmatpush1.msra.mxu0 0.0
  %1034 = vmatprep.subr.mxu0 0.0
  %1035 = vmatpush1.msra.mxu0 0.0
  %1036 = vmatprep.subr.mxu0 0.0
  %1037 = vmatpush1.msra.mxu0 0.0
  %1038 = vmatprep.subr.mxu0 0.0
  %1039 = vmatpush1.msra.mxu0 0.0
  %1040 = vmatprep.subr.mxu0 0.0
  %1041 = vmatpush1.msra.mxu0 0.0
  %1042 = vmatprep.subr.mxu0 0.0
  %1043 = vmatpush1.msra.mxu0 0.0
  %1044 = vmatprep.subr.mxu0 0.0
  %1045 = vmatpush1.msra.mxu0 0.0
  %1046 = vmatprep.subr.mxu0 0.0
  %1047 = vmatpush1.msra.mxu0 0.0
  %1048 = vmatprep.subr.mxu0 0.0
  %1049 = vmatpush1.msra.mxu0 0.0
  %1050 = vmatprep.subr.mxu0 0.0
  %1051 = vmatpush1.msra.mxu0 0.0
  %1052 = vmatprep.subr.mxu0 0.0
  %1053 = vmatpush1.msra.mxu0 0.0
  %1054 = vmatprep.subr.mxu0 0.0
  %1055 = vmatpush1.msra.mxu0 0.0
  %1056 = vmatprep.subr.mxu0 0.0
  %1057 = vmatpush1.msra.mxu0 0.0
  %1058 = vmatprep.subr.mxu0 0.0
  %1059 = vmatpush1.msra.mxu0 0.0
  %1060 = vmatprep.mubr.f32.mxu0 0.0
  %1061 = vmatmul.mubr.f32.gmra.mrb[0].mxu0 %v994
  %v1062 = vpop.f32.mrb[0].mxu0
  %v1063 = vadd.f32 0.0, %v1062
  %v1064 = vpop.f32.mrb[0].mxu0
  %v1065 = vadd.f32 0.0, %v1064
  %1066 = vdwg.mxu0
  %v1067 = vld [vmem:[%s6] sm:$0x1]
  %v1069 = vlaneseq
  %v1070 = vshrl.u32 %v1069, 7
  %v1071 = vsub.s32 0, %v1070
  %v1072 = vrot.slane %v1067, %v1071
  %v1074 = vadd.f32 %v1065, %v1072
  %v1075 = vadd.f32 %v722, %v828
  %v1076 = vxor.u32 %v1075, 2147483648
  %v1077 = vmul.f32 %v1076, 1.442695
  %v1078 = vpow.pop %v1077
  %v1079 = vadd.f32 %v1078, 1.0
  %v1080 = vrcp.pop %v1079
  %v1081 = vmul.f32 1.0, %v1080
  %v1082 = vtanh.pop %v1075
  %v1083 = vmul.f32 %v1081, %v741
  %1085 = vrot.lane.b32.xlu0 %v1082, 64
  %v1086 = vpop.permute.xlu0 %1085
  %v1088 = vmul.f32 %v1081, %v1086
  %1090 = vrot.lane.b32.xlu0 %v1088, 32
  %v1091 = vpop.permute.xlu0 %1090
  %v1093 = vadd.f32 %v1083, %v1091
  %v1094 = vtanh.pop %v1093
  %1096 = vrot.lane.b32.xlu0 %v1094, 64
  %v1097 = vpop.permute.xlu0 %1096
  %v1099 = vmul.f32 %v1081, %v1097
  %v1100 = vld [vmem:[%s7] sm:$0xff]
  %v1101 = vld [vmem:[%s7 + $0x8] sm:$0xff]
  %v1102 = vld [vmem:[%s7 + $0x10] sm:$0xff]
  %v1103 = vld [vmem:[%s7 + $0x18] sm:$0xff]
  %v1104 = vld [vmem:[%s7 + $0x20] sm:$0xff]
  %v1105 = vld [vmem:[%s7 + $0x28] sm:$0xff]
  %v1106 = vld [vmem:[%s7 + $0x30] sm:$0xff]
  %v1107 = vld [vmem:[%s7 + $0x38] sm:$0xff]
  %1109 = vrot.lane.b32.xlu0 %v1099, 32
  %v1110 = vpop.permute.xlu0 %1109
  %v1111 = vsel %vm218, %v1110, 0
  %1113 = vmatprep.subr.mxu0 %v1101
  %1114 = vmatpush1.msra.mxu0 %v1100
  %1115 = vmatprep.subr.mxu0 %v1103
  %1116 = vmatpush1.msra.mxu0 %v1102
  %1117 = vmatprep.subr.mxu0 %v1105
  %1118 = vmatpush1.msra.mxu0 %v1104
  %1119 = vmatprep.subr.mxu0 %v1107
  %1120 = vmatpush1.msra.mxu0 %v1106
  %1121 = vmatprep.subr.mxu0 0.0
  %1122 = vmatpush1.msra.mxu0 0.0
  %1123 = vmatprep.subr.mxu0 0.0
  %1124 = vmatpush1.msra.mxu0 0.0
  %1125 = vmatprep.subr.mxu0 0.0
  %1126 = vmatpush1.msra.mxu0 0.0
  %1127 = vmatprep.subr.mxu0 0.0
  %1128 = vmatpush1.msra.mxu0 0.0
  %1129 = vmatprep.subr.mxu0 0.0
  %1130 = vmatpush1.msra.mxu0 0.0
  %1131 = vmatprep.subr.mxu0 0.0
  %1132 = vmatpush1.msra.mxu0 0.0
  %1133 = vmatprep.subr.mxu0 0.0
  %1134 = vmatpush1.msra.mxu0 0.0
  %1135 = vmatprep.subr.mxu0 0.0
  %1136 = vmatpush1.msra.mxu0 0.0
  %1137 = vmatprep.subr.mxu0 0.0
  %1138 = vmatpush1.msra.mxu0 0.0
  %1139 = vmatprep.subr.mxu0 0.0
  %1140 = vmatpush1.msra.mxu0 0.0
  %1141 = vmatprep.subr.mxu0 0.0
  %1142 = vmatpush1.msra.mxu0 0.0
  %1143 = vmatprep.subr.mxu0 0.0
  %1144 = vmatpush1.msra.mxu0 0.0
  %1145 = vmatprep.subr.mxu0 0.0
  %1146 = vmatpush1.msra.mxu0 0.0
  %1147 = vmatprep.subr.mxu0 0.0
  %1148 = vmatpush1.msra.mxu0 0.0
  %1149 = vmatprep.subr.mxu0 0.0
  %1150 = vmatpush1.msra.mxu0 0.0
  %1151 = vmatprep.subr.mxu0 0.0
  %1152 = vmatpush1.msra.mxu0 0.0
  %1153 = vmatprep.subr.mxu0 0.0
  %1154 = vmatpush1.msra.mxu0 0.0
  %1155 = vmatprep.subr.mxu0 0.0
  %1156 = vmatpush1.msra.mxu0 0.0
  %1157 = vmatprep.subr.mxu0 0.0
  %1158 = vmatpush1.msra.mxu0 0.0
  %1159 = vmatprep.subr.mxu0 0.0
  %1160 = vmatpush1.msra.mxu0 0.0
  %1161 = vmatprep.subr.mxu0 0.0
  %1162 = vmatpush1.msra.mxu0 0.0
  %1163 = vmatprep.subr.mxu0 0.0
  %1164 = vmatpush1.msra.mxu0 0.0
  %1165 = vmatprep.subr.mxu0 0.0
  %1166 = vmatpush1.msra.mxu0 0.0
  %1167 = vmatprep.subr.mxu0 0.0
  %1168 = vmatpush1.msra.mxu0 0.0
  %1169 = vmatprep.subr.mxu0 0.0
  %1170 = vmatpush1.msra.mxu0 0.0
  %1171 = vmatprep.subr.mxu0 0.0
  %1172 = vmatpush1.msra.mxu0 0.0
  %1173 = vmatprep.subr.mxu0 0.0
  %1174 = vmatpush1.msra.mxu0 0.0
  %1175 = vmatprep.subr.mxu0 0.0
  %1176 = vmatpush1.msra.mxu0 0.0
  %1177 = vmatprep.mubr.f32.mxu0 0.0
  %1178 = vmatmul.mubr.f32.gmra.mrb[0].mxu0 %v1111
  %v1179 = vpop.f32.mrb[0].mxu0
  %v1180 = vadd.f32 0.0, %v1179
  %v1181 = vpop.f32.mrb[0].mxu0
  %v1182 = vadd.f32 0.0, %v1181
  %1183 = vdwg.mxu0
  %v1184 = vld [vmem:[%s8] sm:$0x1]
  %v1186 = vlaneseq
  %v1187 = vshrl.u32 %v1186, 7
  %v1188 = vsub.s32 0, %v1187
  %v1189 = vrot.slane %v1184, %v1188
  %v1191 = vadd.f32 %v1182, %v1189
  %1192 = vst [vmem:[%s9 + $0x8] sm:$0xff] %v1191
  %v1193 = vadd.f32 %v164, %v946
  %v1194 = vxor.u32 %v1193, 2147483648
  %v1195 = vmul.f32 %v1194, 1.442695
  %v1196 = vpow.pop %v1195
  %v1197 = vadd.f32 %v1196, 1.0
  %v1198 = vrcp.pop %v1197
  %v1199 = vmul.f32 1.0, %v1198
  %v1200 = vtanh.pop %v1193
  %v1201 = vmul.f32 %v1199, %v859
  %1203 = vrot.lane.b32.xlu0 %v1200, 64
  %v1204 = vpop.permute.xlu0 %1203
  %v1206 = vmul.f32 %v1199, %v1204
  %1208 = vrot.lane.b32.xlu0 %v1206, 32
  %v1209 = vpop.permute.xlu0 %1208
  %v1211 = vadd.f32 %v1201, %v1209
  %v1212 = vtanh.pop %v1211
  %1214 = vrot.lane.b32.xlu0 %v1212, 64
  %v1215 = vpop.permute.xlu0 %1214
  %v1217 = vmul.f32 %v1199, %v1215
  %v1218 = vld [vmem:[%s3] sm:$0xff]
  %v1219 = vld [vmem:[%s3 + $0x8] sm:$0xff]
  %v1220 = vld [vmem:[%s3 + $0x10] sm:$0xff]
  %v1221 = vld [vmem:[%s3 + $0x18] sm:$0xff]
  %v1222 = vld [vmem:[%s3 + $0x20] sm:$0xff]
  %v1223 = vld [vmem:[%s3 + $0x28] sm:$0xff]
  %v1224 = vld [vmem:[%s3 + $0x30] sm:$0xff]
  %v1225 = vld [vmem:[%s3 + $0x38] sm:$0xff]
  %1227 = vrot.lane.b32.xlu0 %v1217, 32
  %v1228 = vpop.permute.xlu0 %1227
  %v1229 = vsel %vm218, %v1228, 0
  %1231 = vmatprep.subr.mxu0 %v1219
  %1232 = vmatpush1.msra.mxu0 %v1218
  %1233 = vmatprep.subr.mxu0 %v1221
  %1234 = vmatpush1.msra.mxu0 %v1220
  %1235 = vmatprep.subr.mxu0 %v1223
  %1236 = vmatpush1.msra.mxu0 %v1222
  %1237 = vmatprep.subr.mxu0 %v1225
  %1238 = vmatpush1.msra.mxu0 %v1224
  %1239 = vmatprep.subr.mxu0 0.0
  %1240 = vmatpush1.msra.mxu0 0.0
  %1241 = vmatprep.subr.mxu0 0.0
  %1242 = vmatpush1.msra.mxu0 0.0
  %1243 = vmatprep.subr.mxu0 0.0
  %1244 = vmatpush1.msra.mxu0 0.0
  %1245 = vmatprep.subr.mxu0 0.0
  %1246 = vmatpush1.msra.mxu0 0.0
  %1247 = vmatprep.subr.mxu0 0.0
  %1248 = vmatpush1.msra.mxu0 0.0
  %1249 = vmatprep.subr.mxu0 0.0
  %1250 = vmatpush1.msra.mxu0 0.0
  %1251 = vmatprep.subr.mxu0 0.0
  %1252 = vmatpush1.msra.mxu0 0.0
  %1253 = vmatprep.subr.mxu0 0.0
  %1254 = vmatpush1.msra.mxu0 0.0
  %1255 = vmatprep.subr.mxu0 0.0
  %1256 = vmatpush1.msra.mxu0 0.0
  %1257 = vmatprep.subr.mxu0 0.0
  %1258 = vmatpush1.msra.mxu0 0.0
  %1259 = vmatprep.subr.mxu0 0.0
  %1260 = vmatpush1.msra.mxu0 0.0
  %1261 = vmatprep.subr.mxu0 0.0
  %1262 = vmatpush1.msra.mxu0 0.0
  %1263 = vmatprep.subr.mxu0 0.0
  %1264 = vmatpush1.msra.mxu0 0.0
  %1265 = vmatprep.subr.mxu0 0.0
  %1266 = vmatpush1.msra.mxu0 0.0
  %1267 = vmatprep.subr.mxu0 0.0
  %1268 = vmatpush1.msra.mxu0 0.0
  %1269 = vmatprep.subr.mxu0 0.0
  %1270 = vmatpush1.msra.mxu0 0.0
  %1271 = vmatprep.subr.mxu0 0.0
  %1272 = vmatpush1.msra.mxu0 0.0
  %1273 = vmatprep.subr.mxu0 0.0
  %1274 = vmatpush1.msra.mxu0 0.0
  %1275 = vmatprep.subr.mxu0 0.0
  %1276 = vmatpush1.msra.mxu0 0.0
  %1277 = vmatprep.subr.mxu0 0.0
  %1278 = vmatpush1.msra.mxu0 0.0
  %1279 = vmatprep.subr.mxu0 0.0
  %1280 = vmatpush1.msra.mxu0 0.0
  %1281 = vmatprep.subr.mxu0 0.0
  %1282 = vmatpush1.msra.mxu0 0.0
  %1283 = vmatprep.subr.mxu0 0.0
  %1284 = vmatpush1.msra.mxu0 0.0
  %1285 = vmatprep.subr.mxu0 0.0
  %1286 = vmatpush1.msra.mxu0 0.0
  %1287 = vmatprep.subr.mxu0 0.0
  %1288 = vmatpush1.msra.mxu0 0.0
  %1289 = vmatprep.subr.mxu0 0.0
  %1290 = vmatpush1.msra.mxu0 0.0
  %1291 = vmatprep.subr.mxu0 0.0
  %1292 = vmatpush1.msra.mxu0 0.0
  %1293 = vmatprep.subr.mxu0 0.0
  %1294 = vmatpush1.msra.mxu0 0.0
  %1295 = vmatprep.mubr.f32.mxu0 0.0
  %1296 = vmatmul.mubr.f32.gmra.mrb[0].mxu0 %v1229
  %v1297 = vpop.f32.mrb[0].mxu0
  %v1298 = vadd.f32 0.0, %v1297
  %v1299 = vpop.f32.mrb[0].mxu0
  %v1300 = vadd.f32 0.0, %v1299
  %1301 = vdwg.mxu0
  %v1302 = vld [vmem:[%s4] sm:$0x1]
  %v1304 = vlaneseq
  %v1305 = vshrl.u32 %v1304, 7
  %v1306 = vsub.s32 0, %v1305
  %v1307 = vrot.slane %v1302, %v1306
  %v1309 = vadd.f32 %v1300, %v1307
  %v1310 = vadd.f32 %v957, %v1063
  %v1311 = vxor.u32 %v1310, 2147483648
  %v1312 = vmul.f32 %v1311, 1.442695
  %v1313 = vpow.pop %v1312
  %v1314 = vadd.f32 %v1313, 1.0
  %v1315 = vrcp.pop %v1314
  %v1316 = vmul.f32 1.0, %v1315
  %v1317 = vtanh.pop %v1310
  %v1318 = vmul.f32 %v1316, %v976
  %1320 = vrot.lane.b32.xlu0 %v1317, 64
  %v1321 = vpop.permute.xlu0 %1320
  %v1323 = vmul.f32 %v1316, %v1321
  %1325 = vrot.lane.b32.xlu0 %v1323, 32
  %v1326 = vpop.permute.xlu0 %1325
  %v1328 = vadd.f32 %v1318, %v1326
  %v1329 = vtanh.pop %v1328
  %1331 = vrot.lane.b32.xlu0 %v1329, 64
  %v1332 = vpop.permute.xlu0 %1331
  %v1334 = vmul.f32 %v1316, %v1332
  %v1335 = vld [vmem:[%s5] sm:$0xff]
  %v1336 = vld [vmem:[%s5 + $0x8] sm:$0xff]
  %v1337 = vld [vmem:[%s5 + $0x10] sm:$0xff]
  %v1338 = vld [vmem:[%s5 + $0x18] sm:$0xff]
  %v1339 = vld [vmem:[%s5 + $0x20] sm:$0xff]
  %v1340 = vld [vmem:[%s5 + $0x28] sm:$0xff]
  %v1341 = vld [vmem:[%s5 + $0x30] sm:$0xff]
  %v1342 = vld [vmem:[%s5 + $0x38] sm:$0xff]
  %1344 = vrot.lane.b32.xlu0 %v1334, 32
  %v1345 = vpop.permute.xlu0 %1344
  %v1346 = vsel %vm218, %v1345, 0
  %1348 = vmatprep.subr.mxu0 %v1336
  %1349 = vmatpush1.msra.mxu0 %v1335
  %1350 = vmatprep.subr.mxu0 %v1338
  %1351 = vmatpush1.msra.mxu0 %v1337
  %1352 = vmatprep.subr.mxu0 %v1340
  %1353 = vmatpush1.msra.mxu0 %v1339
  %1354 = vmatprep.subr.mxu0 %v1342
  %1355 = vmatpush1.msra.mxu0 %v1341
  %1356 = vmatprep.subr.mxu0 0.0
  %1357 = vmatpush1.msra.mxu0 0.0
  %1358 = vmatprep.subr.mxu0 0.0
  %1359 = vmatpush1.msra.mxu0 0.0
  %1360 = vmatprep.subr.mxu0 0.0
  %1361 = vmatpush1.msra.mxu0 0.0
  %1362 = vmatprep.subr.mxu0 0.0
  %1363 = vmatpush1.msra.mxu0 0.0
  %1364 = vmatprep.subr.mxu0 0.0
  %1365 = vmatpush1.msra.mxu0 0.0
  %1366 = vmatprep.subr.mxu0 0.0
  %1367 = vmatpush1.msra.mxu0 0.0
  %1368 = vmatprep.subr.mxu0 0.0
  %1369 = vmatpush1.msra.mxu0 0.0
  %1370 = vmatprep.subr.mxu0 0.0
  %1371 = vmatpush1.msra.mxu0 0.0
  %1372 = vmatprep.subr.mxu0 0.0
  %1373 = vmatpush1.msra.mxu0 0.0
  %1374 = vmatprep.subr.mxu0 0.0
  %1375 = vmatpush1.msra.mxu0 0.0
  %1376 = vmatprep.subr.mxu0 0.0
  %1377 = vmatpush1.msra.mxu0 0.0
  %1378 = vmatprep.subr.mxu0 0.0
  %1379 = vmatpush1.msra.mxu0 0.0
  %1380 = vmatprep.subr.mxu0 0.0
  %1381 = vmatpush1.msra.mxu0 0.0
  %1382 = vmatprep.subr.mxu0 0.0
  %1383 = vmatpush1.msra.mxu0 0.0
  %1384 = vmatprep.subr.mxu0 0.0
  %1385 = vmatpush1.msra.mxu0 0.0
  %1386 = vmatprep.subr.mxu0 0.0
  %1387 = vmatpush1.msra.mxu0 0.0
  %1388 = vmatprep.subr.mxu0 0.0
  %1389 = vmatpush1.msra.mxu0 0.0
  %1390 = vmatprep.subr.mxu0 0.0
  %1391 = vmatpush1.msra.mxu0 0.0
  %1392 = vmatprep.subr.mxu0 0.0
  %1393 = vmatpush1.msra.mxu0 0.0
  %1394 = vmatprep.subr.mxu0 0.0
  %1395 = vmatpush1.msra.mxu0 0.0
  %1396 = vmatprep.subr.mxu0 0.0
  %1397 = vmatpush1.msra.mxu0 0.0
  %1398 = vmatprep.subr.mxu0 0.0
  %1399 = vmatpush1.msra.mxu0 0.0
  %1400 = vmatprep.subr.mxu0 0.0
  %1401 = vmatpush1.msra.mxu0 0.0
  %1402 = vmatprep.subr.mxu0 0.0
  %1403 = vmatpush1.msra.mxu0 0.0
  %1404 = vmatprep.subr.mxu0 0.0
  %1405 = vmatpush1.msra.mxu0 0.0
  %1406 = vmatprep.subr.mxu0 0.0
  %1407 = vmatpush1.msra.mxu0 0.0
  %1408 = vmatprep.subr.mxu0 0.0
  %1409 = vmatpush1.msra.mxu0 0.0
  %1410 = vmatprep.subr.mxu0 0.0
  %1411 = vmatpush1.msra.mxu0 0.0
  %1412 = vmatprep.mubr.f32.mxu0 0.0
  %1413 = vmatmul.mubr.f32.gmra.mrb[0].mxu0 %v1346
  %v1414 = vpop.f32.mrb[0].mxu0
  %v1415 = vadd.f32 0.0, %v1414
  %v1416 = vpop.f32.mrb[0].mxu0
  %v1417 = vadd.f32 0.0, %v1416
  %1418 = vdwg.mxu0
  %v1419 = vld [vmem:[%s6] sm:$0x1]
  %v1421 = vlaneseq
  %v1422 = vshrl.u32 %v1421, 7
  %v1423 = vsub.s32 0, %v1422
  %v1424 = vrot.slane %v1419, %v1423
  %v1426 = vadd.f32 %v1417, %v1424
  %v1427 = vadd.f32 %v1074, %v1180
  %v1428 = vxor.u32 %v1427, 2147483648
  %v1429 = vmul.f32 %v1428, 1.442695
  %v1430 = vpow.pop %v1429
  %v1431 = vadd.f32 %v1430, 1.0
  %v1432 = vrcp.pop %v1431
  %v1433 = vmul.f32 1.0, %v1432
  %v1434 = vtanh.pop %v1427
  %v1435 = vmul.f32 %v1433, %v1093
  %1437 = vrot.lane.b32.xlu0 %v1434, 64
  %v1438 = vpop.permute.xlu0 %1437
  %v1440 = vmul.f32 %v1433, %v1438
  %1442 = vrot.lane.b32.xlu0 %v1440, 32
  %v1443 = vpop.permute.xlu0 %1442
  %v1445 = vadd.f32 %v1435, %v1443
  %v1446 = vtanh.pop %v1445
  %1448 = vrot.lane.b32.xlu0 %v1446, 64
  %v1449 = vpop.permute.xlu0 %1448
  %v1451 = vmul.f32 %v1433, %v1449
  %v1452 = vld [vmem:[%s7] sm:$0xff]
  %v1453 = vld [vmem:[%s7 + $0x8] sm:$0xff]
  %v1454 = vld [vmem:[%s7 + $0x10] sm:$0xff]
  %v1455 = vld [vmem:[%s7 + $0x18] sm:$0xff]
  %v1456 = vld [vmem:[%s7 + $0x20] sm:$0xff]
  %v1457 = vld [vmem:[%s7 + $0x28] sm:$0xff]
  %v1458 = vld [vmem:[%s7 + $0x30] sm:$0xff]
  %v1459 = vld [vmem:[%s7 + $0x38] sm:$0xff]
  %1461 = vrot.lane.b32.xlu0 %v1451, 32
  %v1462 = vpop.permute.xlu0 %1461
  %v1463 = vsel %vm218, %v1462, 0
  %1465 = vmatprep.subr.mxu0 %v1453
  %1466 = vmatpush1.msra.mxu0 %v1452
  %1467 = vmatprep.subr.mxu0 %v1455
  %1468 = vmatpush1.msra.mxu0 %v1454
  %1469 = vmatprep.subr.mxu0 %v1457
  %1470 = vmatpush1.msra.mxu0 %v1456
  %1471 = vmatprep.subr.mxu0 %v1459
  %1472 = vmatpush1.msra.mxu0 %v1458
  %1473 = vmatprep.subr.mxu0 0.0
  %1474 = vmatpush1.msra.mxu0 0.0
  %1475 = vmatprep.subr.mxu0 0.0
  %1476 = vmatpush1.msra.mxu0 0.0
  %1477 = vmatprep.subr.mxu0 0.0
  %1478 = vmatpush1.msra.mxu0 0.0
  %1479 = vmatprep.subr.mxu0 0.0
  %1480 = vmatpush1.msra.mxu0 0.0
  %1481 = vmatprep.subr.mxu0 0.0
  %1482 = vmatpush1.msra.mxu0 0.0
  %1483 = vmatprep.subr.mxu0 0.0
  %1484 = vmatpush1.msra.mxu0 0.0
  %1485 = vmatprep.subr.mxu0 0.0
  %1486 = vmatpush1.msra.mxu0 0.0
  %1487 = vmatprep.subr.mxu0 0.0
  %1488 = vmatpush1.msra.mxu0 0.0
  %1489 = vmatprep.subr.mxu0 0.0
  %1490 = vmatpush1.msra.mxu0 0.0
  %1491 = vmatprep.subr.mxu0 0.0
  %1492 = vmatpush1.msra.mxu0 0.0
  %1493 = vmatprep.subr.mxu0 0.0
  %1494 = vmatpush1.msra.mxu0 0.0
  %1495 = vmatprep.subr.mxu0 0.0
  %1496 = vmatpush1.msra.mxu0 0.0
  %1497 = vmatprep.subr.mxu0 0.0
  %1498 = vmatpush1.msra.mxu0 0.0
  %1499 = vmatprep.subr.mxu0 0.0
  %1500 = vmatpush1.msra.mxu0 0.0
  %1501 = vmatprep.subr.mxu0 0.0
  %1502 = vmatpush1.msra.mxu0 0.0
  %1503 = vmatprep.subr.mxu0 0.0
  %1504 = vmatpush1.msra.mxu0 0.0
  %1505 = vmatprep.subr.mxu0 0.0
  %1506 = vmatpush1.msra.mxu0 0.0
  %1507 = vmatprep.subr.mxu0 0.0
  %1508 = vmatpush1.msra.mxu0 0.0
  %1509 = vmatprep.subr.mxu0 0.0
  %1510 = vmatpush1.msra.mxu0 0.0
  %1511 = vmatprep.subr.mxu0 0.0
  %1512 = vmatpush1.msra.mxu0 0.0
  %1513 = vmatprep.subr.mxu0 0.0
  %1514 = vmatpush1.msra.mxu0 0.0
  %1515 = vmatprep.subr.mxu0 0.0
  %1516 = vmatpush1.msra.mxu0 0.0
  %1517 = vmatprep.subr.mxu0 0.0
  %1518 = vmatpush1.msra.mxu0 0.0
  %1519 = vmatprep.subr.mxu0 0.0
  %1520 = vmatpush1.msra.mxu0 0.0
  %1521 = vmatprep.subr.mxu0 0.0
  %1522 = vmatpush1.msra.mxu0 0.0
  %1523 = vmatprep.subr.mxu0 0.0
  %1524 = vmatpush1.msra.mxu0 0.0
  %1525 = vmatprep.subr.mxu0 0.0
  %1526 = vmatpush1.msra.mxu0 0.0
  %1527 = vmatprep.subr.mxu0 0.0
  %1528 = vmatpush1.msra.mxu0 0.0
  %1529 = vmatprep.mubr.f32.mxu0 0.0
  %1530 = vmatmul.mubr.f32.gmra.mrb[0].mxu0 %v1463
  %v1531 = vpop.f32.mrb[0].mxu0
  %v1532 = vadd.f32 0.0, %v1531
  %v1533 = vpop.f32.mrb[0].mxu0
  %v1534 = vadd.f32 0.0, %v1533
  %1535 = vdwg.mxu0
  %v1536 = vld [vmem:[%s8] sm:$0x1]
  %v1538 = vlaneseq
  %v1539 = vshrl.u32 %v1538, 7
  %v1540 = vsub.s32 0, %v1539
  %v1541 = vrot.slane %v1536, %v1540
  %v1543 = vadd.f32 %v1534, %v1541
  %1544 = vst [vmem:[%s9 + $0x10] sm:$0xff] %v1543
  %v1545 = vadd.f32 %v169, %v1298
  %v1546 = vxor.u32 %v1545, 2147483648
  %v1547 = vmul.f32 %v1546, 1.442695
  %v1548 = vpow.pop %v1547
  %v1549 = vadd.f32 %v1548, 1.0
  %v1550 = vrcp.pop %v1549
  %v1551 = vmul.f32 1.0, %v1550
  %v1552 = vtanh.pop %v1545
  %v1553 = vmul.f32 %v1551, %v1211
  %1555 = vrot.lane.b32.xlu0 %v1552, 64
  %v1556 = vpop.permute.xlu0 %1555
  %v1558 = vmul.f32 %v1551, %v1556
  %1560 = vrot.lane.b32.xlu0 %v1558, 32
  %v1561 = vpop.permute.xlu0 %1560
  %v1563 = vadd.f32 %v1553, %v1561
  %v1564 = vtanh.pop %v1563
  %1566 = vrot.lane.b32.xlu0 %v1564, 64
  %v1567 = vpop.permute.xlu0 %1566
  %v1569 = vmul.f32 %v1551, %v1567
  %v1570 = vld [vmem:[%s3] sm:$0xff]
  %v1571 = vld [vmem:[%s3 + $0x8] sm:$0xff]
  %v1572 = vld [vmem:[%s3 + $0x10] sm:$0xff]
  %v1573 = vld [vmem:[%s3 + $0x18] sm:$0xff]
  %v1574 = vld [vmem:[%s3 + $0x20] sm:$0xff]
  %v1575 = vld [vmem:[%s3 + $0x28] sm:$0xff]
  %v1576 = vld [vmem:[%s3 + $0x30] sm:$0xff]
  %v1577 = vld [vmem:[%s3 + $0x38] sm:$0xff]
  %1579 = vrot.lane.b32.xlu0 %v1569, 32
  %v1580 = vpop.permute.xlu0 %1579
  %v1581 = vsel %vm218, %v1580, 0
  %1583 = vmatprep.subr.mxu0 %v1571
  %1584 = vmatpush1.msra.mxu0 %v1570
  %1585 = vmatprep.subr.mxu0 %v1573
  %1586 = vmatpush1.msra.mxu0 %v1572
  %1587 = vmatprep.subr.mxu0 %v1575
  %1588 = vmatpush1.msra.mxu0 %v1574
  %1589 = vmatprep.subr.mxu0 %v1577
  %1590 = vmatpush1.msra.mxu0 %v1576
  %1591 = vmatprep.subr.mxu0 0.0
  %1592 = vmatpush1.msra.mxu0 0.0
  %1593 = vmatprep.subr.mxu0 0.0
  %1594 = vmatpush1.msra.mxu0 0.0
  %1595 = vmatprep.subr.mxu0 0.0
  %1596 = vmatpush1.msra.mxu0 0.0
  %1597 = vmatprep.subr.mxu0 0.0
  %1598 = vmatpush1.msra.mxu0 0.0
  %1599 = vmatprep.subr.mxu0 0.0
  %1600 = vmatpush1.msra.mxu0 0.0
  %1601 = vmatprep.subr.mxu0 0.0
  %1602 = vmatpush1.msra.mxu0 0.0
  %1603 = vmatprep.subr.mxu0 0.0
  %1604 = vmatpush1.msra.mxu0 0.0
  %1605 = vmatprep.subr.mxu0 0.0
  %1606 = vmatpush1.msra.mxu0 0.0
  %1607 = vmatprep.subr.mxu0 0.0
  %1608 = vmatpush1.msra.mxu0 0.0
  %1609 = vmatprep.subr.mxu0 0.0
  %1610 = vmatpush1.msra.mxu0 0.0
  %1611 = vmatprep.subr.mxu0 0.0
  %1612 = vmatpush1.msra.mxu0 0.0
  %1613 = vmatprep.subr.mxu0 0.0
  %1614 = vmatpush1.msra.mxu0 0.0
  %1615 = vmatprep.subr.mxu0 0.0
  %1616 = vmatpush1.msra.mxu0 0.0
  %1617 = vmatprep.subr.mxu0 0.0
  %1618 = vmatpush1.msra.mxu0 0.0
  %1619 = vmatprep.subr.mxu0 0.0
  %1620 = vmatpush1.msra.mxu0 0.0
  %1621 = vmatprep.subr.mxu0 0.0
  %1622 = vmatpush1.msra.mxu0 0.0
  %1623 = vmatprep.subr.mxu0 0.0
  %1624 = vmatpush1.msra.mxu0 0.0
  %1625 = vmatprep.subr.mxu0 0.0
  %1626 = vmatpush1.msra.mxu0 0.0
  %1627 = vmatprep.subr.mxu0 0.0
  %1628 = vmatpush1.msra.mxu0 0.0
  %1629 = vmatprep.subr.mxu0 0.0
  %1630 = vmatpush1.msra.mxu0 0.0
  %1631 = vmatprep.subr.mxu0 0.0
  %1632 = vmatpush1.msra.mxu0 0.0
  %1633 = vmatprep.subr.mxu0 0.0
  %1634 = vmatpush1.msra.mxu0 0.0
  %1635 = vmatprep.subr.mxu0 0.0
  %1636 = vmatpush1.msra.mxu0 0.0
  %1637 = vmatprep.subr.mxu0 0.0
  %1638 = vmatpush1.msra.mxu0 0.0
  %1639 = vmatprep.subr.mxu0 0.0
  %1640 = vmatpush1.msra.mxu0 0.0
  %1641 = vmatprep.subr.mxu0 0.0
  %1642 = vmatpush1.msra.mxu0 0.0
  %1643 = vmatprep.subr.mxu0 0.0
  %1644 = vmatpush1.msra.mxu0 0.0
  %1645 = vmatprep.subr.mxu0 0.0
  %1646 = vmatpush1.msra.mxu0 0.0
  %1647 = vmatprep.mubr.f32.mxu0 0.0
  %1648 = vmatmul.mubr.f32.gmra.mrb[0].mxu0 %v1581
  %v1649 = vpop.f32.mrb[0].mxu0
  %v1650 = vadd.f32 0.0, %v1649
  %v1651 = vpop.f32.mrb[0].mxu0
  %v1652 = vadd.f32 0.0, %v1651
  %1653 = vdwg.mxu0
  %v1654 = vld [vmem:[%s4] sm:$0x1]
  %v1656 = vlaneseq
  %v1657 = vshrl.u32 %v1656, 7
  %v1658 = vsub.s32 0, %v1657
  %v1659 = vrot.slane %v1654, %v1658
  %v1661 = vadd.f32 %v1652, %v1659
  %v1662 = vadd.f32 %v1309, %v1415
  %v1663 = vxor.u32 %v1662, 2147483648
  %v1664 = vmul.f32 %v1663, 1.442695
  %v1665 = vpow.pop %v1664
  %v1666 = vadd.f32 %v1665, 1.0
  %v1667 = vrcp.pop %v1666
  %v1668 = vmul.f32 1.0, %v1667
  %v1669 = vtanh.pop %v1662
  %v1670 = vmul.f32 %v1668, %v1328
  %1672 = vrot.lane.b32.xlu0 %v1669, 64
  %v1673 = vpop.permute.xlu0 %1672
  %v1675 = vmul.f32 %v1668, %v1673
  %1677 = vrot.lane.b32.xlu0 %v1675, 32
  %v1678 = vpop.permute.xlu0 %1677
  %v1680 = vadd.f32 %v1670, %v1678
  %v1681 = vtanh.pop %v1680
  %1683 = vrot.lane.b32.xlu0 %v1681, 64
  %v1684 = vpop.permute.xlu0 %1683
  %v1686 = vmul.f32 %v1668, %v1684
  %v1687 = vld [vmem:[%s5] sm:$0xff]
  %v1688 = vld [vmem:[%s5 + $0x8] sm:$0xff]
  %v1689 = vld [vmem:[%s5 + $0x10] sm:$0xff]
  %v1690 = vld [vmem:[%s5 + $0x18] sm:$0xff]
  %v1691 = vld [vmem:[%s5 + $0x20] sm:$0xff]
  %v1692 = vld [vmem:[%s5 + $0x28] sm:$0xff]
  %v1693 = vld [vmem:[%s5 + $0x30] sm:$0xff]
  %v1694 = vld [vmem:[%s5 + $0x38] sm:$0xff]
  %1696 = vrot.lane.b32.xlu0 %v1686, 32
  %v1697 = vpop.permute.xlu0 %1696
  %v1698 = vsel %vm218, %v1697, 0
  %1700 = vmatprep.subr.mxu0 %v1688
  %1701 = vmatpush1.msra.mxu0 %v1687
  %1702 = vmatprep.subr.mxu0 %v1690
  %1703 = vmatpush1.msra.mxu0 %v1689
  %1704 = vmatprep.subr.mxu0 %v1692
  %1705 = vmatpush1.msra.mxu0 %v1691
  %1706 = vmatprep.subr.mxu0 %v1694
  %1707 = vmatpush1.msra.mxu0 %v1693
  %1708 = vmatprep.subr.mxu0 0.0
  %1709 = vmatpush1.msra.mxu0 0.0
  %1710 = vmatprep.subr.mxu0 0.0
  %1711 = vmatpush1.msra.mxu0 0.0
  %1712 = vmatprep.subr.mxu0 0.0
  %1713 = vmatpush1.msra.mxu0 0.0
  %1714 = vmatprep.subr.mxu0 0.0
  %1715 = vmatpush1.msra.mxu0 0.0
  %1716 = vmatprep.subr.mxu0 0.0
  %1717 = vmatpush1.msra.mxu0 0.0
  %1718 = vmatprep.subr.mxu0 0.0
  %1719 = vmatpush1.msra.mxu0 0.0
  %1720 = vmatprep.subr.mxu0 0.0
  %1721 = vmatpush1.msra.mxu0 0.0
  %1722 = vmatprep.subr.mxu0 0.0
  %1723 = vmatpush1.msra.mxu0 0.0
  %1724 = vmatprep.subr.mxu0 0.0
  %1725 = vmatpush1.msra.mxu0 0.0
  %1726 = vmatprep.subr.mxu0 0.0
  %1727 = vmatpush1.msra.mxu0 0.0
  %1728 = vmatprep.subr.mxu0 0.0
  %1729 = vmatpush1.msra.mxu0 0.0
  %1730 = vmatprep.subr.mxu0 0.0
  %1731 = vmatpush1.msra.mxu0 0.0
  %1732 = vmatprep.subr.mxu0 0.0
  %1733 = vmatpush1.msra.mxu0 0.0
  %1734 = vmatprep.subr.mxu0 0.0
  %1735 = vmatpush1.msra.mxu0 0.0
  %1736 = vmatprep.subr.mxu0 0.0
  %1737 = vmatpush1.msra.mxu0 0.0
  %1738 = vmatprep.subr.mxu0 0.0
  %1739 = vmatpush1.msra.mxu0 0.0
  %1740 = vmatprep.subr.mxu0 0.0
  %1741 = vmatpush1.msra.mxu0 0.0
  %1742 = vmatprep.subr.mxu0 0.0
  %1743 = vmatpush1.msra.mxu0 0.0
  %1744 = vmatprep.subr.mxu0 0.0
  %1745 = vmatpush1.msra.mxu0 0.0
  %1746 = vmatprep.subr.mxu0 0.0
  %1747 = vmatpush1.msra.mxu0 0.0
  %1748 = vmatprep.subr.mxu0 0.0
  %1749 = vmatpush1.msra.mxu0 0.0
  %1750 = vmatprep.subr.mxu0 0.0
  %1751 = vmatpush1.msra.mxu0 0.0
  %1752 = vmatprep.subr.mxu0 0.0
  %1753 = vmatpush1.msra.mxu0 0.0
  %1754 = vmatprep.subr.mxu0 0.0
  %1755 = vmatpush1.msra.mxu0 0.0
  %1756 = vmatprep.subr.mxu0 0.0
  %1757 = vmatpush1.msra.mxu0 0.0
  %1758 = vmatprep.subr.mxu0 0.0
  %1759 = vmatpush1.msra.mxu0 0.0
  %1760 = vmatprep.subr.mxu0 0.0
  %1761 = vmatpush1.msra.mxu0 0.0
  %1762 = vmatprep.subr.mxu0 0.0
  %1763 = vmatpush1.msra.mxu0 0.0
  %1764 = vmatprep.mubr.f32.mxu0 0.0
  %1765 = vmatmul.mubr.f32.gmra.mrb[0].mxu0 %v1698
  %v1766 = vpop.f32.mrb[0].mxu0
  %v1767 = vadd.f32 0.0, %v1766
  %v1768 = vpop.f32.mrb[0].mxu0
  %v1769 = vadd.f32 0.0, %v1768
  %1770 = vdwg.mxu0
  %v1771 = vld [vmem:[%s6] sm:$0x1]
  %v1773 = vlaneseq
  %v1774 = vshrl.u32 %v1773, 7
  %v1775 = vsub.s32 0, %v1774
  %v1776 = vrot.slane %v1771, %v1775
  %v1778 = vadd.f32 %v1769, %v1776
  %v1779 = vadd.f32 %v1426, %v1532
  %v1780 = vxor.u32 %v1779, 2147483648
  %v1781 = vmul.f32 %v1780, 1.442695
  %v1782 = vpow.pop %v1781
  %v1783 = vadd.f32 %v1782, 1.0
  %v1784 = vrcp.pop %v1783
  %v1785 = vmul.f32 1.0, %v1784
  %v1786 = vtanh.pop %v1779
  %v1787 = vmul.f32 %v1785, %v1445
  %1789 = vrot.lane.b32.xlu0 %v1786, 64
  %v1790 = vpop.permute.xlu0 %1789
  %v1792 = vmul.f32 %v1785, %v1790
  %1794 = vrot.lane.b32.xlu0 %v1792, 32
  %v1795 = vpop.permute.xlu0 %1794
  %v1797 = vadd.f32 %v1787, %v1795
  %v1798 = vtanh.pop %v1797
  %1800 = vrot.lane.b32.xlu0 %v1798, 64
  %v1801 = vpop.permute.xlu0 %1800
  %v1803 = vmul.f32 %v1785, %v1801
  %v1804 = vld [vmem:[%s7] sm:$0xff]
  %v1805 = vld [vmem:[%s7 + $0x8] sm:$0xff]
  %v1806 = vld [vmem:[%s7 + $0x10] sm:$0xff]
  %v1807 = vld [vmem:[%s7 + $0x18] sm:$0xff]
  %v1808 = vld [vmem:[%s7 + $0x20] sm:$0xff]
  %v1809 = vld [vmem:[%s7 + $0x28] sm:$0xff]
  %v1810 = vld [vmem:[%s7 + $0x30] sm:$0xff]
  %v1811 = vld [vmem:[%s7 + $0x38] sm:$0xff]
  %1813 = vrot.lane.b32.xlu0 %v1803, 32
  %v1814 = vpop.permute.xlu0 %1813
  %v1815 = vsel %vm218, %v1814, 0
  %1817 = vmatprep.subr.mxu0 %v1805
  %1818 = vmatpush1.msra.mxu0 %v1804
  %1819 = vmatprep.subr.mxu0 %v1807
  %1820 = vmatpush1.msra.mxu0 %v1806
  %1821 = vmatprep.subr.mxu0 %v1809
  %1822 = vmatpush1.msra.mxu0 %v1808
  %1823 = vmatprep.subr.mxu0 %v1811
  %1824 = vmatpush1.msra.mxu0 %v1810
  %1825 = vmatprep.subr.mxu0 0.0
  %1826 = vmatpush1.msra.mxu0 0.0
  %1827 = vmatprep.subr.mxu0 0.0
  %1828 = vmatpush1.msra.mxu0 0.0
  %1829 = vmatprep.subr.mxu0 0.0
  %1830 = vmatpush1.msra.mxu0 0.0
  %1831 = vmatprep.subr.mxu0 0.0
  %1832 = vmatpush1.msra.mxu0 0.0
  %1833 = vmatprep.subr.mxu0 0.0
  %1834 = vmatpush1.msra.mxu0 0.0
  %1835 = vmatprep.subr.mxu0 0.0
  %1836 = vmatpush1.msra.mxu0 0.0
  %1837 = vmatprep.subr.mxu0 0.0
  %1838 = vmatpush1.msra.mxu0 0.0
  %1839 = vmatprep.subr.mxu0 0.0
  %1840 = vmatpush1.msra.mxu0 0.0
  %1841 = vmatprep.subr.mxu0 0.0
  %1842 = vmatpush1.msra.mxu0 0.0
  %1843 = vmatprep.subr.mxu0 0.0
  %1844 = vmatpush1.msra.mxu0 0.0
  %1845 = vmatprep.subr.mxu0 0.0
  %1846 = vmatpush1.msra.mxu0 0.0
  %1847 = vmatprep.subr.mxu0 0.0
  %1848 = vmatpush1.msra.mxu0 0.0
  %1849 = vmatprep.subr.mxu0 0.0
  %1850 = vmatpush1.msra.mxu0 0.0
  %1851 = vmatprep.subr.mxu0 0.0
  %1852 = vmatpush1.msra.mxu0 0.0
  %1853 = vmatprep.subr.mxu0 0.0
  %1854 = vmatpush1.msra.mxu0 0.0
  %1855 = vmatprep.subr.mxu0 0.0
  %1856 = vmatpush1.msra.mxu0 0.0
  %1857 = vmatprep.subr.mxu0 0.0
  %1858 = vmatpush1.msra.mxu0 0.0
  %1859 = vmatprep.subr.mxu0 0.0
  %1860 = vmatpush1.msra.mxu0 0.0
  %1861 = vmatprep.subr.mxu0 0.0
  %1862 = vmatpush1.msra.mxu0 0.0
  %1863 = vmatprep.subr.mxu0 0.0
  %1864 = vmatpush1.msra.mxu0 0.0
  %1865 = vmatprep.subr.mxu0 0.0
  %1866 = vmatpush1.msra.mxu0 0.0
  %1867 = vmatprep.subr.mxu0 0.0
  %1868 = vmatpush1.msra.mxu0 0.0
  %1869 = vmatprep.subr.mxu0 0.0
  %1870 = vmatpush1.msra.mxu0 0.0
  %1871 = vmatprep.subr.mxu0 0.0
  %1872 = vmatpush1.msra.mxu0 0.0
  %1873 = vmatprep.subr.mxu0 0.0
  %1874 = vmatpush1.msra.mxu0 0.0
  %1875 = vmatprep.subr.mxu0 0.0
  %1876 = vmatpush1.msra.mxu0 0.0
  %1877 = vmatprep.subr.mxu0 0.0
  %1878 = vmatpush1.msra.mxu0 0.0
  %1879 = vmatprep.subr.mxu0 0.0
  %1880 = vmatpush1.msra.mxu0 0.0
  %1881 = vmatprep.mubr.f32.mxu0 0.0
  %1882 = vmatmul.mubr.f32.gmra.mrb[0].mxu0 %v1815
  %v1883 = vpop.f32.mrb[0].mxu0
  %v1884 = vadd.f32 0.0, %v1883
  %v1885 = vpop.f32.mrb[0].mxu0
  %v1886 = vadd.f32 0.0, %v1885
  %1887 = vdwg.mxu0
  %v1888 = vld [vmem:[%s8] sm:$0x1]
  %v1890 = vlaneseq
  %v1891 = vshrl.u32 %v1890, 7
  %v1892 = vsub.s32 0, %v1891
  %v1893 = vrot.slane %v1888, %v1892
  %v1895 = vadd.f32 %v1886, %v1893
  %1896 = vst [vmem:[%s9 + $0x18] sm:$0xff] %v1895
  %v1897 = vadd.f32 %v174, %v1650
  %v1898 = vxor.u32 %v1897, 2147483648
  %v1899 = vmul.f32 %v1898, 1.442695
  %v1900 = vpow.pop %v1899
  %v1901 = vadd.f32 %v1900, 1.0
  %v1902 = vrcp.pop %v1901
  %v1903 = vmul.f32 1.0, %v1902
  %v1904 = vtanh.pop %v1897
  %v1905 = vmul.f32 %v1903, %v1563
  %1907 = vrot.lane.b32.xlu0 %v1904, 64
  %v1908 = vpop.permute.xlu0 %1907
  %v1910 = vmul.f32 %v1903, %v1908
  %1912 = vrot.lane.b32.xlu0 %v1910, 32
  %v1913 = vpop.permute.xlu0 %1912
  %v1915 = vadd.f32 %v1905, %v1913
  %v1916 = vtanh.pop %v1915
  %1918 = vrot.lane.b32.xlu0 %v1916, 64
  %v1919 = vpop.permute.xlu0 %1918
  %v1921 = vmul.f32 %v1903, %v1919
  %v1922 = vld [vmem:[%s3] sm:$0xff]
  %v1923 = vld [vmem:[%s3 + $0x8] sm:$0xff]
  %v1924 = vld [vmem:[%s3 + $0x10] sm:$0xff]
  %v1925 = vld [vmem:[%s3 + $0x18] sm:$0xff]
  %v1926 = vld [vmem:[%s3 + $0x20] sm:$0xff]
  %v1927 = vld [vmem:[%s3 + $0x28] sm:$0xff]
  %v1928 = vld [vmem:[%s3 + $0x30] sm:$0xff]
  %v1929 = vld [vmem:[%s3 + $0x38] sm:$0xff]
  %1931 = vrot.lane.b32.xlu0 %v1921, 32
  %v1932 = vpop.permute.xlu0 %1931
  %v1933 = vsel %vm218, %v1932, 0
  %1935 = vmatprep.subr.mxu0 %v1923
  %1936 = vmatpush1.msra.mxu0 %v1922
  %1937 = vmatprep.subr.mxu0 %v1925
  %1938 = vmatpush1.msra.mxu0 %v1924
  %1939 = vmatprep.subr.mxu0 %v1927
  %1940 = vmatpush1.msra.mxu0 %v1926
  %1941 = vmatprep.subr.mxu0 %v1929
  %1942 = vmatpush1.msra.mxu0 %v1928
  %1943 = vmatprep.subr.mxu0 0.0
  %1944 = vmatpush1.msra.mxu0 0.0
  %1945 = vmatprep.subr.mxu0 0.0
  %1946 = vmatpush1.msra.mxu0 0.0
  %1947 = vmatprep.subr.mxu0 0.0
  %1948 = vmatpush1.msra.mxu0 0.0
  %1949 = vmatprep.subr.mxu0 0.0
  %1950 = vmatpush1.msra.mxu0 0.0
  %1951 = vmatprep.subr.mxu0 0.0
  %1952 = vmatpush1.msra.mxu0 0.0
  %1953 = vmatprep.subr.mxu0 0.0
  %1954 = vmatpush1.msra.mxu0 0.0
  %1955 = vmatprep.subr.mxu0 0.0
  %1956 = vmatpush1.msra.mxu0 0.0
  %1957 = vmatprep.subr.mxu0 0.0
  %1958 = vmatpush1.msra.mxu0 0.0
  %1959 = vmatprep.subr.mxu0 0.0
  %1960 = vmatpush1.msra.mxu0 0.0
  %1961 = vmatprep.subr.mxu0 0.0
  %1962 = vmatpush1.msra.mxu0 0.0
  %1963 = vmatprep.subr.mxu0 0.0
  %1964 = vmatpush1.msra.mxu0 0.0
  %1965 = vmatprep.subr.mxu0 0.0
  %1966 = vmatpush1.msra.mxu0 0.0
  %1967 = vmatprep.subr.mxu0 0.0
  %1968 = vmatpush1.msra.mxu0 0.0
  %1969 = vmatprep.subr.mxu0 0.0
  %1970 = vmatpush1.msra.mxu0 0.0
  %1971 = vmatprep.subr.mxu0 0.0
  %1972 = vmatpush1.msra.mxu0 0.0
  %1973 = vmatprep.subr.mxu0 0.0
  %1974 = vmatpush1.msra.mxu0 0.0
  %1975 = vmatprep.subr.mxu0 0.0
  %1976 = vmatpush1.msra.mxu0 0.0
  %1977 = vmatprep.subr.mxu0 0.0
  %1978 = vmatpush1.msra.mxu0 0.0
  %1979 = vmatprep.subr.mxu0 0.0
  %1980 = vmatpush1.msra.mxu0 0.0
  %1981 = vmatprep.subr.mxu0 0.0
  %1982 = vmatpush1.msra.mxu0 0.0
  %1983 = vmatprep.subr.mxu0 0.0
  %1984 = vmatpush1.msra.mxu0 0.0
  %1985 = vmatprep.subr.mxu0 0.0
  %1986 = vmatpush1.msra.mxu0 0.0
  %1987 = vmatprep.subr.mxu0 0.0
  %1988 = vmatpush1.msra.mxu0 0.0
  %1989 = vmatprep.subr.mxu0 0.0
  %1990 = vmatpush1.msra.mxu0 0.0
  %1991 = vmatprep.subr.mxu0 0.0
  %1992 = vmatpush1.msra.mxu0 0.0
  %1993 = vmatprep.subr.mxu0 0.0
  %1994 = vmatpush1.msra.mxu0 0.0
  %1995 = vmatprep.subr.mxu0 0.0
  %1996 = vmatpush1.msra.mxu0 0.0
  %1997 = vmatprep.subr.mxu0 0.0
  %1998 = vmatpush1.msra.mxu0 0.0
  %1999 = vmatprep.mubr.f32.mxu0 0.0
  %2000 = vmatmul.mubr.f32.gmra.mrb[0].mxu0 %v1933
  %v2001 = vpop.f32.mrb[0].mxu0
  %v2002 = vadd.f32 0.0, %v2001
  %v2003 = vpop.f32.mrb[0].mxu0
  %v2004 = vadd.f32 0.0, %v2003
  %2005 = vdwg.mxu0
  %v2006 = vld [vmem:[%s4] sm:$0x1]
  %v2008 = vlaneseq
  %v2009 = vshrl.u32 %v2008, 7
  %v2010 = vsub.s32 0, %v2009
  %v2011 = vrot.slane %v2006, %v2010
  %v2013 = vadd.f32 %v2004, %v2011
  %v2014 = vadd.f32 %v1661, %v1767
  %v2015 = vxor.u32 %v2014, 2147483648
  %v2016 = vmul.f32 %v2015, 1.442695
  %v2017 = vpow.pop %v2016
  %v2018 = vadd.f32 %v2017, 1.0
  %v2019 = vrcp.pop %v2018
  %v2020 = vmul.f32 1.0, %v2019
  %v2021 = vtanh.pop %v2014
  %v2022 = vmul.f32 %v2020, %v1680
  %2024 = vrot.lane.b32.xlu0 %v2021, 64
  %v2025 = vpop.permute.xlu0 %2024
  %v2027 = vmul.f32 %v2020, %v2025
  %2029 = vrot.lane.b32.xlu0 %v2027, 32
  %v2030 = vpop.permute.xlu0 %2029
  %v2032 = vadd.f32 %v2022, %v2030
  %v2033 = vtanh.pop %v2032
  %2035 = vrot.lane.b32.xlu0 %v2033, 64
  %v2036 = vpop.permute.xlu0 %2035
  %v2038 = vmul.f32 %v2020, %v2036
  %v2039 = vld [vmem:[%s5] sm:$0xff]
  %v2040 = vld [vmem:[%s5 + $0x8] sm:$0xff]
  %v2041 = vld [vmem:[%s5 + $0x10] sm:$0xff]
  %v2042 = vld [vmem:[%s5 + $0x18] sm:$0xff]
  %v2043 = vld [vmem:[%s5 + $0x20] sm:$0xff]
  %v2044 = vld [vmem:[%s5 + $0x28] sm:$0xff]
  %v2045 = vld [vmem:[%s5 + $0x30] sm:$0xff]
  %v2046 = vld [vmem:[%s5 + $0x38] sm:$0xff]
  %2048 = vrot.lane.b32.xlu0 %v2038, 32
  %v2049 = vpop.permute.xlu0 %2048
  %v2050 = vsel %vm218, %v2049, 0
  %2052 = vmatprep.subr.mxu0 %v2040
  %2053 = vmatpush1.msra.mxu0 %v2039
  %2054 = vmatprep.subr.mxu0 %v2042
  %2055 = vmatpush1.msra.mxu0 %v2041
  %2056 = vmatprep.subr.mxu0 %v2044
  %2057 = vmatpush1.msra.mxu0 %v2043
  %2058 = vmatprep.subr.mxu0 %v2046
  %2059 = vmatpush1.msra.mxu0 %v2045
  %2060 = vmatprep.subr.mxu0 0.0
  %2061 = vmatpush1.msra.mxu0 0.0
  %2062 = vmatprep.subr.mxu0 0.0
  %2063 = vmatpush1.msra.mxu0 0.0
  %2064 = vmatprep.subr.mxu0 0.0
  %2065 = vmatpush1.msra.mxu0 0.0
  %2066 = vmatprep.subr.mxu0 0.0
  %2067 = vmatpush1.msra.mxu0 0.0
  %2068 = vmatprep.subr.mxu0 0.0
  %2069 = vmatpush1.msra.mxu0 0.0
  %2070 = vmatprep.subr.mxu0 0.0
  %2071 = vmatpush1.msra.mxu0 0.0
  %2072 = vmatprep.subr.mxu0 0.0
  %2073 = vmatpush1.msra.mxu0 0.0
  %2074 = vmatprep.subr.mxu0 0.0
  %2075 = vmatpush1.msra.mxu0 0.0
  %2076 = vmatprep.subr.mxu0 0.0
  %2077 = vmatpush1.msra.mxu0 0.0
  %2078 = vmatprep.subr.mxu0 0.0
  %2079 = vmatpush1.msra.mxu0 0.0
  %2080 = vmatprep.subr.mxu0 0.0
  %2081 = vmatpush1.msra.mxu0 0.0
  %2082 = vmatprep.subr.mxu0 0.0
  %2083 = vmatpush1.msra.mxu0 0.0
  %2084 = vmatprep.subr.mxu0 0.0
  %2085 = vmatpush1.msra.mxu0 0.0
  %2086 = vmatprep.subr.mxu0 0.0
  %2087 = vmatpush1.msra.mxu0 0.0
  %2088 = vmatprep.subr.mxu0 0.0
  %2089 = vmatpush1.msra.mxu0 0.0
  %2090 = vmatprep.subr.mxu0 0.0
  %2091 = vmatpush1.msra.mxu0 0.0
  %2092 = vmatprep.subr.mxu0 0.0
  %2093 = vmatpush1.msra.mxu0 0.0
  %2094 = vmatprep.subr.mxu0 0.0
  %2095 = vmatpush1.msra.mxu0 0.0
  %2096 = vmatprep.subr.mxu0 0.0
  %2097 = vmatpush1.msra.mxu0 0.0
  %2098 = vmatprep.subr.mxu0 0.0
  %2099 = vmatpush1.msra.mxu0 0.0
  %2100 = vmatprep.subr.mxu0 0.0
  %2101 = vmatpush1.msra.mxu0 0.0
  %2102 = vmatprep.subr.mxu0 0.0
  %2103 = vmatpush1.msra.mxu0 0.0
  %2104 = vmatprep.subr.mxu0 0.0
  %2105 = vmatpush1.msra.mxu0 0.0
  %2106 = vmatprep.subr.mxu0 0.0
  %2107 = vmatpush1.msra.mxu0 0.0
  %2108 = vmatprep.subr.mxu0 0.0
  %2109 = vmatpush1.msra.mxu0 0.0
  %2110 = vmatprep.subr.mxu0 0.0
  %2111 = vmatpush1.msra.mxu0 0.0
  %2112 = vmatprep.subr.mxu0 0.0
  %2113 = vmatpush1.msra.mxu0 0.0
  %2114 = vmatprep.subr.mxu0 0.0
  %2115 = vmatpush1.msra.mxu0 0.0
  %2116 = vmatprep.mubr.f32.mxu0 0.0
  %2117 = vmatmul.mubr.f32.gmra.mrb[0].mxu0 %v2050
  %v2118 = vpop.f32.mrb[0].mxu0
  %v2119 = vadd.f32 0.0, %v2118
  %v2120 = vpop.f32.mrb[0].mxu0
  %v2121 = vadd.f32 0.0, %v2120
  %2122 = vdwg.mxu0
  %v2123 = vld [vmem:[%s6] sm:$0x1]
  %v2125 = vlaneseq
  %v2126 = vshrl.u32 %v2125, 7
  %v2127 = vsub.s32 0, %v2126
  %v2128 = vrot.slane %v2123, %v2127
  %v2130 = vadd.f32 %v2121, %v2128
  %v2131 = vadd.f32 %v1778, %v1884
  %v2132 = vxor.u32 %v2131, 2147483648
  %v2133 = vmul.f32 %v2132, 1.442695
  %v2134 = vpow.pop %v2133
  %v2135 = vadd.f32 %v2134, 1.0
  %v2136 = vrcp.pop %v2135
  %v2137 = vmul.f32 1.0, %v2136
  %v2138 = vtanh.pop %v2131
  %v2139 = vmul.f32 %v2137, %v1797
  %2141 = vrot.lane.b32.xlu0 %v2138, 64
  %v2142 = vpop.permute.xlu0 %2141
  %v2144 = vmul.f32 %v2137, %v2142
  %2146 = vrot.lane.b32.xlu0 %v2144, 32
  %v2147 = vpop.permute.xlu0 %2146
  %v2149 = vadd.f32 %v2139, %v2147
  %v2150 = vtanh.pop %v2149
  %2152 = vrot.lane.b32.xlu0 %v2150, 64
  %v2153 = vpop.permute.xlu0 %2152
  %v2155 = vmul.f32 %v2137, %v2153
  %v2156 = vld [vmem:[%s7] sm:$0xff]
  %v2157 = vld [vmem:[%s7 + $0x8] sm:$0xff]
  %v2158 = vld [vmem:[%s7 + $0x10] sm:$0xff]
  %v2159 = vld [vmem:[%s7 + $0x18] sm:$0xff]
  %v2160 = vld [vmem:[%s7 + $0x20] sm:$0xff]
  %v2161 = vld [vmem:[%s7 + $0x28] sm:$0xff]
  %v2162 = vld [vmem:[%s7 + $0x30] sm:$0xff]
  %v2163 = vld [vmem:[%s7 + $0x38] sm:$0xff]
  %2165 = vrot.lane.b32.xlu0 %v2155, 32
  %v2166 = vpop.permute.xlu0 %2165
  %v2167 = vsel %vm218, %v2166, 0
  %2169 = vmatprep.subr.mxu0 %v2157
  %2170 = vmatpush1.msra.mxu0 %v2156
  %2171 = vmatprep.subr.mxu0 %v2159
  %2172 = vmatpush1.msra.mxu0 %v2158
  %2173 = vmatprep.subr.mxu0 %v2161
  %2174 = vmatpush1.msra.mxu0 %v2160
  %2175 = vmatprep.subr.mxu0 %v2163
  %2176 = vmatpush1.msra.mxu0 %v2162
  %2177 = vmatprep.subr.mxu0 0.0
  %2178 = vmatpush1.msra.mxu0 0.0
  %2179 = vmatprep.subr.mxu0 0.0
  %2180 = vmatpush1.msra.mxu0 0.0
  %2181 = vmatprep.subr.mxu0 0.0
  %2182 = vmatpush1.msra.mxu0 0.0
  %2183 = vmatprep.subr.mxu0 0.0
  %2184 = vmatpush1.msra.mxu0 0.0
  %2185 = vmatprep.subr.mxu0 0.0
  %2186 = vmatpush1.msra.mxu0 0.0
  %2187 = vmatprep.subr.mxu0 0.0
  %2188 = vmatpush1.msra.mxu0 0.0
  %2189 = vmatprep.subr.mxu0 0.0
  %2190 = vmatpush1.msra.mxu0 0.0
  %2191 = vmatprep.subr.mxu0 0.0
  %2192 = vmatpush1.msra.mxu0 0.0
  %2193 = vmatprep.subr.mxu0 0.0
  %2194 = vmatpush1.msra.mxu0 0.0
  %2195 = vmatprep.subr.mxu0 0.0
  %2196 = vmatpush1.msra.mxu0 0.0
  %2197 = vmatprep.subr.mxu0 0.0
  %2198 = vmatpush1.msra.mxu0 0.0
  %2199 = vmatprep.subr.mxu0 0.0
  %2200 = vmatpush1.msra.mxu0 0.0
  %2201 = vmatprep.subr.mxu0 0.0
  %2202 = vmatpush1.msra.mxu0 0.0
  %2203 = vmatprep.subr.mxu0 0.0
  %2204 = vmatpush1.msra.mxu0 0.0
  %2205 = vmatprep.subr.mxu0 0.0
  %2206 = vmatpush1.msra.mxu0 0.0
  %2207 = vmatprep.subr.mxu0 0.0
  %2208 = vmatpush1.msra.mxu0 0.0
  %2209 = vmatprep.subr.mxu0 0.0
  %2210 = vmatpush1.msra.mxu0 0.0
  %2211 = vmatprep.subr.mxu0 0.0
  %2212 = vmatpush1.msra.mxu0 0.0
  %2213 = vmatprep.subr.mxu0 0.0
  %2214 = vmatpush1.msra.mxu0 0.0
  %2215 = vmatprep.subr.mxu0 0.0
  %2216 = vmatpush1.msra.mxu0 0.0
  %2217 = vmatprep.subr.mxu0 0.0
  %2218 = vmatpush1.msra.mxu0 0.0
  %2219 = vmatprep.subr.mxu0 0.0
  %2220 = vmatpush1.msra.mxu0 0.0
  %2221 = vmatprep.subr.mxu0 0.0
  %2222 = vmatpush1.msra.mxu0 0.0
  %2223 = vmatprep.subr.mxu0 0.0
  %2224 = vmatpush1.msra.mxu0 0.0
  %2225 = vmatprep.subr.mxu0 0.0
  %2226 = vmatpush1.msra.mxu0 0.0
  %2227 = vmatprep.subr.mxu0 0.0
  %2228 = vmatpush1.msra.mxu0 0.0
  %2229 = vmatprep.subr.mxu0 0.0
  %2230 = vmatpush1.msra.mxu0 0.0
  %2231 = vmatprep.subr.mxu0 0.0
  %2232 = vmatpush1.msra.mxu0 0.0
  %2233 = vmatprep.mubr.f32.mxu0 0.0
  %2234 = vmatmul.mubr.f32.gmra.mrb[0].mxu0 %v2167
  %v2235 = vpop.f32.mrb[0].mxu0
  %v2236 = vadd.f32 0.0, %v2235
  %v2237 = vpop.f32.mrb[0].mxu0
  %v2238 = vadd.f32 0.0, %v2237
  %2239 = vdwg.mxu0
  %v2240 = vld [vmem:[%s8] sm:$0x1]
  %v2242 = vlaneseq
  %v2243 = vshrl.u32 %v2242, 7
  %v2244 = vsub.s32 0, %v2243
  %v2245 = vrot.slane %v2240, %v2244
  %v2247 = vadd.f32 %v2238, %v2245
  %2248 = vst [vmem:[%s9 + $0x20] sm:$0xff] %v2247
  %v2249 = vadd.f32 %v179, %v2002
  %v2250 = vxor.u32 %v2249, 2147483648
  %v2251 = vmul.f32 %v2250, 1.442695
  %v2252 = vpow.pop %v2251
  %v2253 = vadd.f32 %v2252, 1.0
  %v2254 = vrcp.pop %v2253
  %v2255 = vmul.f32 1.0, %v2254
  %v2256 = vtanh.pop %v2249
  %v2257 = vmul.f32 %v2255, %v1915
  %2259 = vrot.lane.b32.xlu0 %v2256, 64
  %v2260 = vpop.permute.xlu0 %2259
  %v2262 = vmul.f32 %v2255, %v2260
  %2264 = vrot.lane.b32.xlu0 %v2262, 32
  %v2265 = vpop.permute.xlu0 %2264
  %v2267 = vadd.f32 %v2257, %v2265
  %v2268 = vtanh.pop %v2267
  %2270 = vrot.lane.b32.xlu0 %v2268, 64
  %v2271 = vpop.permute.xlu0 %2270
  %v2273 = vmul.f32 %v2255, %v2271
  %v2274 = vld [vmem:[%s3] sm:$0xff]
  %v2275 = vld [vmem:[%s3 + $0x8] sm:$0xff]
  %v2276 = vld [vmem:[%s3 + $0x10] sm:$0xff]
  %v2277 = vld [vmem:[%s3 + $0x18] sm:$0xff]
  %v2278 = vld [vmem:[%s3 + $0x20] sm:$0xff]
  %v2279 = vld [vmem:[%s3 + $0x28] sm:$0xff]
  %v2280 = vld [vmem:[%s3 + $0x30] sm:$0xff]
  %v2281 = vld [vmem:[%s3 + $0x38] sm:$0xff]
  %2283 = vrot.lane.b32.xlu0 %v2273, 32
  %v2284 = vpop.permute.xlu0 %2283
  %v2285 = vsel %vm218, %v2284, 0
  %2287 = vmatprep.subr.mxu0 %v2275
  %2288 = vmatpush1.msra.mxu0 %v2274
  %2289 = vmatprep.subr.mxu0 %v2277
  %2290 = vmatpush1.msra.mxu0 %v2276
  %2291 = vmatprep.subr.mxu0 %v2279
  %2292 = vmatpush1.msra.mxu0 %v2278
  %2293 = vmatprep.subr.mxu0 %v2281
  %2294 = vmatpush1.msra.mxu0 %v2280
  %2295 = vmatprep.subr.mxu0 0.0
  %2296 = vmatpush1.msra.mxu0 0.0
  %2297 = vmatprep.subr.mxu0 0.0
  %2298 = vmatpush1.msra.mxu0 0.0
  %2299 = vmatprep.subr.mxu0 0.0
  %2300 = vmatpush1.msra.mxu0 0.0
  %2301 = vmatprep.subr.mxu0 0.0
  %2302 = vmatpush1.msra.mxu0 0.0
  %2303 = vmatprep.subr.mxu0 0.0
  %2304 = vmatpush1.msra.mxu0 0.0
  %2305 = vmatprep.subr.mxu0 0.0
  %2306 = vmatpush1.msra.mxu0 0.0
  %2307 = vmatprep.subr.mxu0 0.0
  %2308 = vmatpush1.msra.mxu0 0.0
  %2309 = vmatprep.subr.mxu0 0.0
  %2310 = vmatpush1.msra.mxu0 0.0
  %2311 = vmatprep.subr.mxu0 0.0
  %2312 = vmatpush1.msra.mxu0 0.0
  %2313 = vmatprep.subr.mxu0 0.0
  %2314 = vmatpush1.msra.mxu0 0.0
  %2315 = vmatprep.subr.mxu0 0.0
  %2316 = vmatpush1.msra.mxu0 0.0
  %2317 = vmatprep.subr.mxu0 0.0
  %2318 = vmatpush1.msra.mxu0 0.0
  %2319 = vmatprep.subr.mxu0 0.0
  %2320 = vmatpush1.msra.mxu0 0.0
  %2321 = vmatprep.subr.mxu0 0.0
  %2322 = vmatpush1.msra.mxu0 0.0
  %2323 = vmatprep.subr.mxu0 0.0
  %2324 = vmatpush1.msra.mxu0 0.0
  %2325 = vmatprep.subr.mxu0 0.0
  %2326 = vmatpush1.msra.mxu0 0.0
  %2327 = vmatprep.subr.mxu0 0.0
  %2328 = vmatpush1.msra.mxu0 0.0
  %2329 = vmatprep.subr.mxu0 0.0
  %2330 = vmatpush1.msra.mxu0 0.0
  %2331 = vmatprep.subr.mxu0 0.0
  %2332 = vmatpush1.msra.mxu0 0.0
  %2333 = vmatprep.subr.mxu0 0.0
  %2334 = vmatpush1.msra.mxu0 0.0
  %2335 = vmatprep.subr.mxu0 0.0
  %2336 = vmatpush1.msra.mxu0 0.0
  %2337 = vmatprep.subr.mxu0 0.0
  %2338 = vmatpush1.msra.mxu0 0.0
  %2339 = vmatprep.subr.mxu0 0.0
  %2340 = vmatpush1.msra.mxu0 0.0
  %2341 = vmatprep.subr.mxu0 0.0
  %2342 = vmatpush1.msra.mxu0 0.0
  %2343 = vmatprep.subr.mxu0 0.0
  %2344 = vmatpush1.msra.mxu0 0.0
  %2345 = vmatprep.subr.mxu0 0.0
  %2346 = vmatpush1.msra.mxu0 0.0
  %2347 = vmatprep.subr.mxu0 0.0
  %2348 = vmatpush1.msra.mxu0 0.0
  %2349 = vmatprep.subr.mxu0 0.0
  %2350 = vmatpush1.msra.mxu0 0.0
  %2351 = vmatprep.mubr.f32.mxu0 0.0
  %2352 = vmatmul.mubr.f32.gmra.mrb[0].mxu0 %v2285
  %v2353 = vpop.f32.mrb[0].mxu0
  %v2354 = vpop.f32.mrb[0].mxu0
  %v2355 = vadd.f32 0.0, %v2354
  %2356 = vdwg.mxu0
  %v2357 = vld [vmem:[%s4] sm:$0x1]
  %v2359 = vlaneseq
  %v2360 = vshrl.u32 %v2359, 7
  %v2361 = vsub.s32 0, %v2360
  %v2362 = vrot.slane %v2357, %v2361
  %v2364 = vadd.f32 %v2355, %v2362
  %v2365 = vadd.f32 %v2013, %v2119
  %v2366 = vxor.u32 %v2365, 2147483648
  %v2367 = vmul.f32 %v2366, 1.442695
  %v2368 = vpow.pop %v2367
  %v2369 = vadd.f32 %v2368, 1.0
  %v2370 = vrcp.pop %v2369
  %v2371 = vmul.f32 1.0, %v2370
  %v2372 = vtanh.pop %v2365
  %v2373 = vmul.f32 %v2371, %v2032
  %2375 = vrot.lane.b32.xlu0 %v2372, 64
  %v2376 = vpop.permute.xlu0 %2375
  %v2378 = vmul.f32 %v2371, %v2376
  %2380 = vrot.lane.b32.xlu0 %v2378, 32
  %v2381 = vpop.permute.xlu0 %2380
  %v2383 = vadd.f32 %v2373, %v2381
  %v2384 = vtanh.pop %v2383
  %2386 = vrot.lane.b32.xlu0 %v2384, 64
  %v2387 = vpop.permute.xlu0 %2386
  %v2389 = vmul.f32 %v2371, %v2387
  %v2390 = vld [vmem:[%s5] sm:$0xff]
  %v2391 = vld [vmem:[%s5 + $0x8] sm:$0xff]
  %v2392 = vld [vmem:[%s5 + $0x10] sm:$0xff]
  %v2393 = vld [vmem:[%s5 + $0x18] sm:$0xff]
  %v2394 = vld [vmem:[%s5 + $0x20] sm:$0xff]
  %v2395 = vld [vmem:[%s5 + $0x28] sm:$0xff]
  %v2396 = vld [vmem:[%s5 + $0x30] sm:$0xff]
  %v2397 = vld [vmem:[%s5 + $0x38] sm:$0xff]
  %2399 = vrot.lane.b32.xlu0 %v2389, 32
  %v2400 = vpop.permute.xlu0 %2399
  %v2401 = vsel %vm218, %v2400, 0
  %2403 = vmatprep.subr.mxu0 %v2391
  %2404 = vmatpush1.msra.mxu0 %v2390
  %2405 = vmatprep.subr.mxu0 %v2393
  %2406 = vmatpush1.msra.mxu0 %v2392
  %2407 = vmatprep.subr.mxu0 %v2395
  %2408 = vmatpush1.msra.mxu0 %v2394
  %2409 = vmatprep.subr.mxu0 %v2397
  %2410 = vmatpush1.msra.mxu0 %v2396
  %2411 = vmatprep.subr.mxu0 0.0
  %2412 = vmatpush1.msra.mxu0 0.0
  %2413 = vmatprep.subr.mxu0 0.0
  %2414 = vmatpush1.msra.mxu0 0.0
  %2415 = vmatprep.subr.mxu0 0.0
  %2416 = vmatpush1.msra.mxu0 0.0
  %2417 = vmatprep.subr.mxu0 0.0
  %2418 = vmatpush1.msra.mxu0 0.0
  %2419 = vmatprep.subr.mxu0 0.0
  %2420 = vmatpush1.msra.mxu0 0.0
  %2421 = vmatprep.subr.mxu0 0.0
  %2422 = vmatpush1.msra.mxu0 0.0
  %2423 = vmatprep.subr.mxu0 0.0
  %2424 = vmatpush1.msra.mxu0 0.0
  %2425 = vmatprep.subr.mxu0 0.0
  %2426 = vmatpush1.msra.mxu0 0.0
  %2427 = vmatprep.subr.mxu0 0.0
  %2428 = vmatpush1.msra.mxu0 0.0
  %2429 = vmatprep.subr.mxu0 0.0
  %2430 = vmatpush1.msra.mxu0 0.0
  %2431 = vmatprep.subr.mxu0 0.0
  %2432 = vmatpush1.msra.mxu0 0.0
  %2433 = vmatprep.subr.mxu0 0.0
  %2434 = vmatpush1.msra.mxu0 0.0
  %2435 = vmatprep.subr.mxu0 0.0
  %2436 = vmatpush1.msra.mxu0 0.0
  %2437 = vmatprep.subr.mxu0 0.0
  %2438 = vmatpush1.msra.mxu0 0.0
  %2439 = vmatprep.subr.mxu0 0.0
  %2440 = vmatpush1.msra.mxu0 0.0
  %2441 = vmatprep.subr.mxu0 0.0
  %2442 = vmatpush1.msra.mxu0 0.0
  %2443 = vmatprep.subr.mxu0 0.0
  %2444 = vmatpush1.msra.mxu0 0.0
  %2445 = vmatprep.subr.mxu0 0.0
  %2446 = vmatpush1.msra.mxu0 0.0
  %2447 = vmatprep.subr.mxu0 0.0
  %2448 = vmatpush1.msra.mxu0 0.0
  %2449 = vmatprep.subr.mxu0 0.0
  %2450 = vmatpush1.msra.mxu0 0.0
  %2451 = vmatprep.subr.mxu0 0.0
  %2452 = vmatpush1.msra.mxu0 0.0
  %2453 = vmatprep.subr.mxu0 0.0
  %2454 = vmatpush1.msra.mxu0 0.0
  %2455 = vmatprep.subr.mxu0 0.0
  %2456 = vmatpush1.msra.mxu0 0.0
  %2457 = vmatprep.subr.mxu0 0.0
  %2458 = vmatpush1.msra.mxu0 0.0
  %2459 = vmatprep.subr.mxu0 0.0
  %2460 = vmatpush1.msra.mxu0 0.0
  %2461 = vmatprep.subr.mxu0 0.0
  %2462 = vmatpush1.msra.mxu0 0.0
  %2463 = vmatprep.subr.mxu0 0.0
  %2464 = vmatpush1.msra.mxu0 0.0
  %2465 = vmatprep.subr.mxu0 0.0
  %2466 = vmatpush1.msra.mxu0 0.0
  %2467 = vmatprep.mubr.f32.mxu0 0.0
  %2468 = vmatmul.mubr.f32.gmra.mrb[0].mxu0 %v2401
  %v2469 = vpop.f32.mrb[0].mxu0
  %v2470 = vadd.f32 0.0, %v2469
  %v2471 = vpop.f32.mrb[0].mxu0
  %v2472 = vadd.f32 0.0, %v2471
  %2473 = vdwg.mxu0
  %v2474 = vld [vmem:[%s6] sm:$0x1]
  %v2476 = vlaneseq
  %v2477 = vshrl.u32 %v2476, 7
  %v2478 = vsub.s32 0, %v2477
  %v2479 = vrot.slane %v2474, %v2478
  %v2481 = vadd.f32 %v2472, %v2479
  %v2482 = vadd.f32 %v2130, %v2236
  %v2483 = vxor.u32 %v2482, 2147483648
  %v2484 = vmul.f32 %v2483, 1.442695
  %v2485 = vpow.pop %v2484
  %v2486 = vadd.f32 %v2485, 1.0
  %v2487 = vrcp.pop %v2486
  %v2488 = vmul.f32 1.0, %v2487
  %v2489 = vtanh.pop %v2482
  %v2490 = vmul.f32 %v2488, %v2149
  %2492 = vrot.lane.b32.xlu0 %v2489, 64
  %v2493 = vpop.permute.xlu0 %2492
  %v2495 = vmul.f32 %v2488, %v2493
  %2497 = vrot.lane.b32.xlu0 %v2495, 32
  %v2498 = vpop.permute.xlu0 %2497
  %v2500 = vadd.f32 %v2490, %v2498
  %v2501 = vtanh.pop %v2500
  %2503 = vrot.lane.b32.xlu0 %v2501, 64
  %v2504 = vpop.permute.xlu0 %2503
  %v2506 = vmul.f32 %v2488, %v2504
  %v2507 = vld [vmem:[%s7] sm:$0xff]
  %v2508 = vld [vmem:[%s7 + $0x8] sm:$0xff]
  %v2509 = vld [vmem:[%s7 + $0x10] sm:$0xff]
  %v2510 = vld [vmem:[%s7 + $0x18] sm:$0xff]
  %v2511 = vld [vmem:[%s7 + $0x20] sm:$0xff]
  %v2512 = vld [vmem:[%s7 + $0x28] sm:$0xff]
  %v2513 = vld [vmem:[%s7 + $0x30] sm:$0xff]
  %v2514 = vld [vmem:[%s7 + $0x38] sm:$0xff]
  %2516 = vrot.lane.b32.xlu0 %v2506, 32
  %v2517 = vpop.permute.xlu0 %2516
  %v2518 = vsel %vm218, %v2517, 0
  %2520 = vmatprep.subr.mxu0 %v2508
  %2521 = vmatpush1.msra.mxu0 %v2507
  %2522 = vmatprep.subr.mxu0 %v2510
  %2523 = vmatpush1.msra.mxu0 %v2509
  %2524 = vmatprep.subr.mxu0 %v2512
  %2525 = vmatpush1.msra.mxu0 %v2511
  %2526 = vmatprep.subr.mxu0 %v2514
  %2527 = vmatpush1.msra.mxu0 %v2513
  %2528 = vmatprep.subr.mxu0 0.0
  %2529 = vmatpush1.msra.mxu0 0.0
  %2530 = vmatprep.subr.mxu0 0.0
  %2531 = vmatpush1.msra.mxu0 0.0
  %2532 = vmatprep.subr.mxu0 0.0
  %2533 = vmatpush1.msra.mxu0 0.0
  %2534 = vmatprep.subr.mxu0 0.0
  %2535 = vmatpush1.msra.mxu0 0.0
  %2536 = vmatprep.subr.mxu0 0.0
  %2537 = vmatpush1.msra.mxu0 0.0
  %2538 = vmatprep.subr.mxu0 0.0
  %2539 = vmatpush1.msra.mxu0 0.0
  %2540 = vmatprep.subr.mxu0 0.0
  %2541 = vmatpush1.msra.mxu0 0.0
  %2542 = vmatprep.subr.mxu0 0.0
  %2543 = vmatpush1.msra.mxu0 0.0
  %2544 = vmatprep.subr.mxu0 0.0
  %2545 = vmatpush1.msra.mxu0 0.0
  %2546 = vmatprep.subr.mxu0 0.0
  %2547 = vmatpush1.msra.mxu0 0.0
  %2548 = vmatprep.subr.mxu0 0.0
  %2549 = vmatpush1.msra.mxu0 0.0
  %2550 = vmatprep.subr.mxu0 0.0
  %2551 = vmatpush1.msra.mxu0 0.0
  %2552 = vmatprep.subr.mxu0 0.0
  %2553 = vmatpush1.msra.mxu0 0.0
  %2554 = vmatprep.subr.mxu0 0.0
  %2555 = vmatpush1.msra.mxu0 0.0
  %2556 = vmatprep.subr.mxu0 0.0
  %2557 = vmatpush1.msra.mxu0 0.0
  %2558 = vmatprep.subr.mxu0 0.0
  %2559 = vmatpush1.msra.mxu0 0.0
  %2560 = vmatprep.subr.mxu0 0.0
  %2561 = vmatpush1.msra.mxu0 0.0
  %2562 = vmatprep.subr.mxu0 0.0
  %2563 = vmatpush1.msra.mxu0 0.0
  %2564 = vmatprep.subr.mxu0 0.0
  %2565 = vmatpush1.msra.mxu0 0.0
  %2566 = vmatprep.subr.mxu0 0.0
  %2567 = vmatpush1.msra.mxu0 0.0
  %2568 = vmatprep.subr.mxu0 0.0
  %2569 = vmatpush1.msra.mxu0 0.0
  %2570 = vmatprep.subr.mxu0 0.0
  %2571 = vmatpush1.msra.mxu0 0.0
  %2572 = vmatprep.subr.mxu0 0.0
  %2573 = vmatpush1.msra.mxu0 0.0
  %2574 = vmatprep.subr.mxu0 0.0
  %2575 = vmatpush1.msra.mxu0 0.0
  %2576 = vmatprep.subr.mxu0 0.0
  %2577 = vmatpush1.msra.mxu0 0.0
  %2578 = vmatprep.subr.mxu0 0.0
  %2579 = vmatpush1.msra.mxu0 0.0
  %2580 = vmatprep.subr.mxu0 0.0
  %2581 = vmatpush1.msra.mxu0 0.0
  %2582 = vmatprep.subr.mxu0 0.0
  %2583 = vmatpush1.msra.mxu0 0.0
  %2584 = vmatprep.mubr.f32.mxu0 0.0
  %2585 = vmatmul.mubr.f32.gmra.mrb[0].mxu0 %v2518
  %v2586 = vpop.f32.mrb[0].mxu0
  %v2587 = vadd.f32 0.0, %v2586
  %v2588 = vpop.f32.mrb[0].mxu0
  %v2589 = vadd.f32 0.0, %v2588
  %2590 = vdwg.mxu0
  %v2591 = vld [vmem:[%s8] sm:$0x1]
  %v2593 = vlaneseq
  %v2594 = vshrl.u32 %v2593, 7
  %v2595 = vsub.s32 0, %v2594
  %v2596 = vrot.slane %v2591, %v2595
  %v2598 = vadd.f32 %v2589, %v2596
  %2599 = vst [vmem:[%s9 + $0x28] sm:$0xff] %v2598
  %v2600 = vadd.f32 %v2364, %v2470
  %v2601 = vxor.u32 %v2600, 2147483648
  %v2602 = vmul.f32 %v2601, 1.442695
  %v2603 = vpow.pop %v2602
  %v2604 = vadd.f32 %v2603, 1.0
  %v2605 = vrcp.pop %v2604
  %v2606 = vmul.f32 1.0, %v2605
  %v2607 = vtanh.pop %v2600
  %v2608 = vmul.f32 %v2606, %v2383
  %2610 = vrot.lane.b32.xlu0 %v2607, 64
  %v2611 = vpop.permute.xlu0 %2610
  %v2613 = vmul.f32 %v2606, %v2611
  %2615 = vrot.lane.b32.xlu0 %v2613, 32
  %v2616 = vpop.permute.xlu0 %2615
  %v2618 = vadd.f32 %v2608, %v2616
  %v2619 = vtanh.pop %v2618
  %2621 = vrot.lane.b32.xlu0 %v2619, 64
  %v2622 = vpop.permute.xlu0 %2621
  %v2624 = vmul.f32 %v2606, %v2622
  %v2625 = vld [vmem:[%s5] sm:$0xff]
  %v2626 = vld [vmem:[%s5 + $0x8] sm:$0xff]
  %v2627 = vld [vmem:[%s5 + $0x10] sm:$0xff]
  %v2628 = vld [vmem:[%s5 + $0x18] sm:$0xff]
  %v2629 = vld [vmem:[%s5 + $0x20] sm:$0xff]
  %v2630 = vld [vmem:[%s5 + $0x28] sm:$0xff]
  %v2631 = vld [vmem:[%s5 + $0x30] sm:$0xff]
  %v2632 = vld [vmem:[%s5 + $0x38] sm:$0xff]
  %2634 = vrot.lane.b32.xlu0 %v2624, 32
  %v2635 = vpop.permute.xlu0 %2634
  %v2636 = vsel %vm218, %v2635, 0
  %2638 = vmatprep.subr.mxu0 %v2626
  %2639 = vmatpush1.msra.mxu0 %v2625
  %2640 = vmatprep.subr.mxu0 %v2628
  %2641 = vmatpush1.msra.mxu0 %v2627
  %2642 = vmatprep.subr.mxu0 %v2630
  %2643 = vmatpush1.msra.mxu0 %v2629
  %2644 = vmatprep.subr.mxu0 %v2632
  %2645 = vmatpush1.msra.mxu0 %v2631
  %2646 = vmatprep.subr.mxu0 0.0
  %2647 = vmatpush1.msra.mxu0 0.0
  %2648 = vmatprep.subr.mxu0 0.0
  %2649 = vmatpush1.msra.mxu0 0.0
  %2650 = vmatprep.subr.mxu0 0.0
  %2651 = vmatpush1.msra.mxu0 0.0
  %2652 = vmatprep.subr.mxu0 0.0
  %2653 = vmatpush1.msra.mxu0 0.0
  %2654 = vmatprep.subr.mxu0 0.0
  %2655 = vmatpush1.msra.mxu0 0.0
  %2656 = vmatprep.subr.mxu0 0.0
  %2657 = vmatpush1.msra.mxu0 0.0
  %2658 = vmatprep.subr.mxu0 0.0
  %2659 = vmatpush1.msra.mxu0 0.0
  %2660 = vmatprep.subr.mxu0 0.0
  %2661 = vmatpush1.msra.mxu0 0.0
  %2662 = vmatprep.subr.mxu0 0.0
  %2663 = vmatpush1.msra.mxu0 0.0
  %2664 = vmatprep.subr.mxu0 0.0
  %2665 = vmatpush1.msra.mxu0 0.0
  %2666 = vmatprep.subr.mxu0 0.0
  %2667 = vmatpush1.msra.mxu0 0.0
  %2668 = vmatprep.subr.mxu0 0.0
  %2669 = vmatpush1.msra.mxu0 0.0
  %2670 = vmatprep.subr.mxu0 0.0
  %2671 = vmatpush1.msra.mxu0 0.0
  %2672 = vmatprep.subr.mxu0 0.0
  %2673 = vmatpush1.msra.mxu0 0.0
  %2674 = vmatprep.subr.mxu0 0.0
  %2675 = vmatpush1.msra.mxu0 0.0
  %2676 = vmatprep.subr.mxu0 0.0
  %2677 = vmatpush1.msra.mxu0 0.0
  %2678 = vmatprep.subr.mxu0 0.0
  %2679 = vmatpush1.msra.mxu0 0.0
  %2680 = vmatprep.subr.mxu0 0.0
  %2681 = vmatpush1.msra.mxu0 0.0
  %2682 = vmatprep.subr.mxu0 0.0
  %2683 = vmatpush1.msra.mxu0 0.0
  %2684 = vmatprep.subr.mxu0 0.0
  %2685 = vmatpush1.msra.mxu0 0.0
  %2686 = vmatprep.subr.mxu0 0.0
  %2687 = vmatpush1.msra.mxu0 0.0
  %2688 = vmatprep.subr.mxu0 0.0
  %2689 = vmatpush1.msra.mxu0 0.0
  %2690 = vmatprep.subr.mxu0 0.0
  %2691 = vmatpush1.msra.mxu0 0.0
  %2692 = vmatprep.subr.mxu0 0.0
  %2693 = vmatpush1.msra.mxu0 0.0
  %2694 = vmatprep.subr.mxu0 0.0
  %2695 = vmatpush1.msra.mxu0 0.0
  %2696 = vmatprep.subr.mxu0 0.0
  %2697 = vmatpush1.msra.mxu0 0.0
  %2698 = vmatprep.subr.mxu0 0.0
  %2699 = vmatpush1.msra.mxu0 0.0
  %2700 = vmatprep.subr.mxu0 0.0
  %2701 = vmatpush1.msra.mxu0 0.0
  %2702 = vmatprep.mubr.f32.mxu0 0.0
  %2703 = vmatmul.mubr.f32.gmra.mrb[0].mxu0 %v2636
  %v2704 = vpop.f32.mrb[0].mxu0
  %v2705 = vpop.f32.mrb[0].mxu0
  %v2706 = vadd.f32 0.0, %v2705
  %2707 = vdwg.mxu0
  %v2708 = vld [vmem:[%s6] sm:$0x1]
  %v2710 = vlaneseq
  %v2711 = vshrl.u32 %v2710, 7
  %v2712 = vsub.s32 0, %v2711
  %v2713 = vrot.slane %v2708, %v2712
  %v2715 = vadd.f32 %v2706, %v2713
  %v2716 = vadd.f32 %v2481, %v2587
  %v2717 = vxor.u32 %v2716, 2147483648
  %v2718 = vmul.f32 %v2717, 1.442695
  %v2719 = vpow.pop %v2718
  %v2720 = vadd.f32 %v2719, 1.0
  %v2721 = vrcp.pop %v2720
  %v2722 = vmul.f32 1.0, %v2721
  %v2723 = vtanh.pop %v2716
  %v2724 = vmul.f32 %v2722, %v2500
  %2726 = vrot.lane.b32.xlu0 %v2723, 64
  %v2727 = vpop.permute.xlu0 %2726
  %v2729 = vmul.f32 %v2722, %v2727
  %2731 = vrot.lane.b32.xlu0 %v2729, 32
  %v2732 = vpop.permute.xlu0 %2731
  %v2734 = vadd.f32 %v2724, %v2732
  %v2735 = vtanh.pop %v2734
  %2737 = vrot.lane.b32.xlu0 %v2735, 64
  %v2738 = vpop.permute.xlu0 %2737
  %v2740 = vmul.f32 %v2722, %v2738
  %v2741 = vld [vmem:[%s7] sm:$0xff]
  %v2742 = vld [vmem:[%s7 + $0x8] sm:$0xff]
  %v2743 = vld [vmem:[%s7 + $0x10] sm:$0xff]
  %v2744 = vld [vmem:[%s7 + $0x18] sm:$0xff]
  %v2745 = vld [vmem:[%s7 + $0x20] sm:$0xff]
  %v2746 = vld [vmem:[%s7 + $0x28] sm:$0xff]
  %v2747 = vld [vmem:[%s7 + $0x30] sm:$0xff]
  %v2748 = vld [vmem:[%s7 + $0x38] sm:$0xff]
  %2750 = vrot.lane.b32.xlu0 %v2740, 32
  %v2751 = vpop.permute.xlu0 %2750
  %v2752 = vsel %vm218, %v2751, 0
  %2754 = vmatprep.subr.mxu0 %v2742
  %2755 = vmatpush1.msra.mxu0 %v2741
  %2756 = vmatprep.subr.mxu0 %v2744
  %2757 = vmatpush1.msra.mxu0 %v2743
  %2758 = vmatprep.subr.mxu0 %v2746
  %2759 = vmatpush1.msra.mxu0 %v2745
  %2760 = vmatprep.subr.mxu0 %v2748
  %2761 = vmatpush1.msra.mxu0 %v2747
  %2762 = vmatprep.subr.mxu0 0.0
  %2763 = vmatpush1.msra.mxu0 0.0
  %2764 = vmatprep.subr.mxu0 0.0
  %2765 = vmatpush1.msra.mxu0 0.0
  %2766 = vmatprep.subr.mxu0 0.0
  %2767 = vmatpush1.msra.mxu0 0.0
  %2768 = vmatprep.subr.mxu0 0.0
  %2769 = vmatpush1.msra.mxu0 0.0
  %2770 = vmatprep.subr.mxu0 0.0
  %2771 = vmatpush1.msra.mxu0 0.0
  %2772 = vmatprep.subr.mxu0 0.0
  %2773 = vmatpush1.msra.mxu0 0.0
  %2774 = vmatprep.subr.mxu0 0.0
  %2775 = vmatpush1.msra.mxu0 0.0
  %2776 = vmatprep.subr.mxu0 0.0
  %2777 = vmatpush1.msra.mxu0 0.0
  %2778 = vmatprep.subr.mxu0 0.0
  %2779 = vmatpush1.msra.mxu0 0.0
  %2780 = vmatprep.subr.mxu0 0.0
  %2781 = vmatpush1.msra.mxu0 0.0
  %2782 = vmatprep.subr.mxu0 0.0
  %2783 = vmatpush1.msra.mxu0 0.0
  %2784 = vmatprep.subr.mxu0 0.0
  %2785 = vmatpush1.msra.mxu0 0.0
  %2786 = vmatprep.subr.mxu0 0.0
  %2787 = vmatpush1.msra.mxu0 0.0
  %2788 = vmatprep.subr.mxu0 0.0
  %2789 = vmatpush1.msra.mxu0 0.0
  %2790 = vmatprep.subr.mxu0 0.0
  %2791 = vmatpush1.msra.mxu0 0.0
  %2792 = vmatprep.subr.mxu0 0.0
  %2793 = vmatpush1.msra.mxu0 0.0
  %2794 = vmatprep.subr.mxu0 0.0
  %2795 = vmatpush1.msra.mxu0 0.0
  %2796 = vmatprep.subr.mxu0 0.0
  %2797 = vmatpush1.msra.mxu0 0.0
  %2798 = vmatprep.subr.mxu0 0.0
  %2799 = vmatpush1.msra.mxu0 0.0
  %2800 = vmatprep.subr.mxu0 0.0
  %2801 = vmatpush1.msra.mxu0 0.0
  %2802 = vmatprep.subr.mxu0 0.0
  %2803 = vmatpush1.msra.mxu0 0.0
  %2804 = vmatprep.subr.mxu0 0.0
  %2805 = vmatpush1.msra.mxu0 0.0
  %2806 = vmatprep.subr.mxu0 0.0
  %2807 = vmatpush1.msra.mxu0 0.0
  %2808 = vmatprep.subr.mxu0 0.0
  %2809 = vmatpush1.msra.mxu0 0.0
  %2810 = vmatprep.subr.mxu0 0.0
  %2811 = vmatpush1.msra.mxu0 0.0
  %2812 = vmatprep.subr.mxu0 0.0
  %2813 = vmatpush1.msra.mxu0 0.0
  %2814 = vmatprep.subr.mxu0 0.0
  %2815 = vmatpush1.msra.mxu0 0.0
  %2816 = vmatprep.subr.mxu0 0.0
  %2817 = vmatpush1.msra.mxu0 0.0
  %2818 = vmatprep.mubr.f32.mxu0 0.0
  %2819 = vmatmul.mubr.f32.gmra.mrb[0].mxu0 %v2752
  %v2820 = vpop.f32.mrb[0].mxu0
  %v2821 = vadd.f32 0.0, %v2820
  %v2822 = vpop.f32.mrb[0].mxu0
  %v2823 = vadd.f32 0.0, %v2822
  %2824 = vdwg.mxu0
  %v2825 = vld [vmem:[%s8] sm:$0x1]
  %v2827 = vlaneseq
  %v2828 = vshrl.u32 %v2827, 7
  %v2829 = vsub.s32 0, %v2828
  %v2830 = vrot.slane %v2825, %v2829
  %v2832 = vadd.f32 %v2823, %v2830
  %2833 = vst [vmem:[%s9 + $0x30] sm:$0xff] %v2832
  %v2834 = vadd.f32 %v2715, %v2821
  %v2835 = vxor.u32 %v2834, 2147483648
  %v2836 = vmul.f32 %v2835, 1.442695
  %v2837 = vpow.pop %v2836
  %v2838 = vadd.f32 %v2837, 1.0
  %v2839 = vrcp.pop %v2838
  %v2840 = vmul.f32 1.0, %v2839
  %v2841 = vtanh.pop %v2834
  %v2842 = vmul.f32 %v2840, %v2734
  %2844 = vrot.lane.b32.xlu0 %v2841, 64
  %v2845 = vpop.permute.xlu0 %2844
  %v2847 = vmul.f32 %v2840, %v2845
  %2849 = vrot.lane.b32.xlu0 %v2847, 32
  %v2850 = vpop.permute.xlu0 %2849
  %v2852 = vadd.f32 %v2842, %v2850
  %v2853 = vtanh.pop %v2852
  %2855 = vrot.lane.b32.xlu0 %v2853, 64
  %v2856 = vpop.permute.xlu0 %2855
  %v2858 = vmul.f32 %v2840, %v2856
  %v2859 = vld [vmem:[%s7] sm:$0xff]
  %v2860 = vld [vmem:[%s7 + $0x8] sm:$0xff]
  %v2861 = vld [vmem:[%s7 + $0x10] sm:$0xff]
  %v2862 = vld [vmem:[%s7 + $0x18] sm:$0xff]
  %v2863 = vld [vmem:[%s7 + $0x20] sm:$0xff]
  %v2864 = vld [vmem:[%s7 + $0x28] sm:$0xff]
  %v2865 = vld [vmem:[%s7 + $0x30] sm:$0xff]
  %v2866 = vld [vmem:[%s7 + $0x38] sm:$0xff]
  %2868 = vrot.lane.b32.xlu0 %v2858, 32
  %v2869 = vpop.permute.xlu0 %2868
  %v2870 = vsel %vm218, %v2869, 0
  %2872 = vmatprep.subr.mxu0 %v2860
  %2873 = vmatpush1.msra.mxu0 %v2859
  %2874 = vmatprep.subr.mxu0 %v2862
  %2875 = vmatpush1.msra.mxu0 %v2861
  %2876 = vmatprep.subr.mxu0 %v2864
  %2877 = vmatpush1.msra.mxu0 %v2863
  %2878 = vmatprep.subr.mxu0 %v2866
  %2879 = vmatpush1.msra.mxu0 %v2865
  %2880 = vmatprep.subr.mxu0 0.0
  %2881 = vmatpush1.msra.mxu0 0.0
  %2882 = vmatprep.subr.mxu0 0.0
  %2883 = vmatpush1.msra.mxu0 0.0
  %2884 = vmatprep.subr.mxu0 0.0
  %2885 = vmatpush1.msra.mxu0 0.0
  %2886 = vmatprep.subr.mxu0 0.0
  %2887 = vmatpush1.msra.mxu0 0.0
  %2888 = vmatprep.subr.mxu0 0.0
  %2889 = vmatpush1.msra.mxu0 0.0
  %2890 = vmatprep.subr.mxu0 0.0
  %2891 = vmatpush1.msra.mxu0 0.0
  %2892 = vmatprep.subr.mxu0 0.0
  %2893 = vmatpush1.msra.mxu0 0.0
  %2894 = vmatprep.subr.mxu0 0.0
  %2895 = vmatpush1.msra.mxu0 0.0
  %2896 = vmatprep.subr.mxu0 0.0
  %2897 = vmatpush1.msra.mxu0 0.0
  %2898 = vmatprep.subr.mxu0 0.0
  %2899 = vmatpush1.msra.mxu0 0.0
  %2900 = vmatprep.subr.mxu0 0.0
  %2901 = vmatpush1.msra.mxu0 0.0
  %2902 = vmatprep.subr.mxu0 0.0
  %2903 = vmatpush1.msra.mxu0 0.0
  %2904 = vmatprep.subr.mxu0 0.0
  %2905 = vmatpush1.msra.mxu0 0.0
  %2906 = vmatprep.subr.mxu0 0.0
  %2907 = vmatpush1.msra.mxu0 0.0
  %2908 = vmatprep.subr.mxu0 0.0
  %2909 = vmatpush1.msra.mxu0 0.0
  %2910 = vmatprep.subr.mxu0 0.0
  %2911 = vmatpush1.msra.mxu0 0.0
  %2912 = vmatprep.subr.mxu0 0.0
  %2913 = vmatpush1.msra.mxu0 0.0
  %2914 = vmatprep.subr.mxu0 0.0
  %2915 = vmatpush1.msra.mxu0 0.0
  %2916 = vmatprep.subr.mxu0 0.0
  %2917 = vmatpush1.msra.mxu0 0.0
  %2918 = vmatprep.subr.mxu0 0.0
  %2919 = vmatpush1.msra.mxu0 0.0
  %2920 = vmatprep.subr.mxu0 0.0
  %2921 = vmatpush1.msra.mxu0 0.0
  %2922 = vmatprep.subr.mxu0 0.0
  %2923 = vmatpush1.msra.mxu0 0.0
  %2924 = vmatprep.subr.mxu0 0.0
  %2925 = vmatpush1.msra.mxu0 0.0
  %2926 = vmatprep.subr.mxu0 0.0
  %2927 = vmatpush1.msra.mxu0 0.0
  %2928 = vmatprep.subr.mxu0 0.0
  %2929 = vmatpush1.msra.mxu0 0.0
  %2930 = vmatprep.subr.mxu0 0.0
  %2931 = vmatpush1.msra.mxu0 0.0
  %2932 = vmatprep.subr.mxu0 0.0
  %2933 = vmatpush1.msra.mxu0 0.0
  %2934 = vmatprep.subr.mxu0 0.0
  %2935 = vmatpush1.msra.mxu0 0.0
  %2936 = vmatprep.mubr.f32.mxu0 0.0
  %2937 = vmatmul.mubr.f32.gmra.mrb[0].mxu0 %v2870
  %v2938 = vpop.f32.mrb[0].mxu0
  %v2939 = vpop.f32.mrb[0].mxu0
  %v2940 = vadd.f32 0.0, %v2939
  %2941 = vdwg.mxu0
  %v2942 = vld [vmem:[%s8] sm:$0x1]
  %v2944 = vlaneseq
  %v2945 = vshrl.u32 %v2944, 7
  %v2946 = vsub.s32 0, %v2945
  %v2947 = vrot.slane %v2942, %v2946
  %v2949 = vadd.f32 %v2940, %v2947
  %2950 = vst [vmem:[%s9 + $0x38] sm:$0xff] %v2949
  // Predicated region
  $region38: #{lstm_forward.1} parent=0 // pred_check
    _
  $region39: #{lstm_forward.1} parent=0 // pred_check_branch
    %2952 = sbr.rel (0) target = $region41
  $region40: #{lstm_forward.1} parent=0 // pred_region
    _
  $region41: #{lstm_forward.1} parent=0 // pred_fallthru
    _
  // Predicated region
  $region42: #{lstm_forward.1} parent=0 // pred_check
    _
  $region43: #{lstm_forward.1} parent=0 // pred_check_branch
    %2954 = sbr.rel (0) target = $region45
  $region44: #{lstm_forward.1} parent=0 // pred_region
    _
  $region45: #{lstm_forward.1} parent=0 // pred_fallthru
    _

</llo_original>
